<compile_context>
chip_gen: v7x
topology: tpu7x:2x2x1
jax: 0.10.0
libtpu: 0.0.40
codegen_flags: <defaults>
</compile_context>

<pallas_src>
import jax
import jax.numpy as jnp
from jax.experimental import pallas as pl
from jax.experimental.pallas import tpu as pltpu

NUM_BOND_TYPE = 6
NUM_BOND_DIRECTION = 3
NUM_ATOM_TYPE = 120
NUM_CHIRALITY_TAG = 3
BN_EPS = 1e-5


def _round_up(x, m):
    return (x + m - 1) // m * m


# -----------------------------------------------------------------------------
# One fused Pallas kernel for ALL GIN layers.  Per layer (add aggregation,
# training-mode BatchNorm with biased variance, dropout p=0 == identity):
#   aggr = Adj @ h + edge_aggr[l]
#   z    = W2 @ relu(W1 @ aggr + b1) + b2
#   z    = BatchNorm1d(z)
#   h    = relu(z)  for l < L-1 ;  z  for the last layer
# -----------------------------------------------------------------------------
def fused_gin_kernel(n_ref, adj_ref, h0_ref, eaggr_ref, w1_ref, b1_ref,
                     w2_ref, b2_ref, gamma_ref, beta_ref, out_ref):
    l = pl.program_id(0)
    is_last = l == pl.num_programs(0) - 1

    @pl.when(l == 0)
    def _():
        out_ref[...] = h0_ref[...]          # seed the carry with the node embeddings

    h = out_ref[...]                        # [Np, Dp] layer carry, resident in VMEM

    # Aggregation on the MXU's native bf16 path: adj is exact in bf16; h is
    # split hi/lo (2 bf16 passes) so the result keeps ~f32 accuracy.
    h_hi = h.astype(jnp.bfloat16)
    h_lo = (h - h_hi.astype(jnp.float32)).astype(jnp.bfloat16)
    adj = adj_ref[...]                      # bf16 [Np, Np]
    aggr = (jnp.dot(adj, h_hi, preferred_element_type=jnp.float32)
            + jnp.dot(adj, h_lo, preferred_element_type=jnp.float32)
            + eaggr_ref[0])                 # precomputed edge-embedding segment sums

    # GIN update MLP: Linear(D, 2D) -> ReLU -> Linear(2D, D)   (f32)
    z = jnp.dot(aggr, w1_ref[0], preferred_element_type=jnp.float32) + b1_ref[0]
    z = jnp.maximum(z, 0.0)
    z = jnp.dot(z, w2_ref[0], preferred_element_type=jnp.float32) + b2_ref[0]

    # BatchNorm1d over the real node rows only (biased variance, training stats).
    # n comes from SMEM at runtime -> no recompile per graph size.
    n = n_ref[0]
    np_rows = z.shape[0]
    row_mask = (jax.lax.broadcasted_iota(jnp.int32, (np_rows, 1), 0)
                < n).astype(jnp.float32)                       # (Np, 1) column mask
    inv_n = 1.0 / n.astype(jnp.float32)
    mean = jnp.sum(z * row_mask, axis=0, keepdims=True) * inv_n
    d = (z - mean) * row_mask               # centered; padded rows zeroed; reused below
    var = jnp.sum(d * d, axis=0, keepdims=True) * inv_n
    z = d * jax.lax.rsqrt(var + BN_EPS) * gamma_ref[0] + beta_ref[0]

    # Non-final layers get ReLU.  No trailing row mask: padded rows can never
    # feed real rows (their adjacency columns are zero) and the caller slices
    # the output to [:n].
    out_ref[...] = jnp.where(is_last, z, jnp.maximum(z, 0.0))


def gin_fused_forward(n_arr, adj, h0, eaggr, w1, b1, w2, b2, gamma, beta):
    num_layer, np_, dp = eaggr.shape
    hp = w1.shape[2]

    # VMEM footprint: resident adj(bf16)+h0+carry (single-buffered) plus the
    # double-buffered per-layer stream.  Leave 2x headroom.
    est = (np_ * np_ * 2                                    # adj, bf16
           + 2 * np_ * dp * 4                               # h0 + carry
           + 2 * (np_ * dp + dp * hp + hp * dp + hp + 3 * dp) * 4)
    vmem_limit = int(min(96 * 2 ** 20, max(2 * est, 16 * 2 ** 20)))

    def build(single_buffer):
        resident = ({"pipeline_mode": pl.Buffered(buffer_count=1)}
                    if single_buffer else {})
        in_specs = [
            # adj / h0: constant block index -> DMA'd once, stays resident
            pl.BlockSpec((np_, np_), lambda l, n: (0, 0), **resident),
            pl.BlockSpec((np_, dp), lambda l, n: (0, 0), **resident),
            # per-layer streamed operands (double-buffered by default)
            pl.BlockSpec((1, np_, dp), lambda l, n: (l, 0, 0)),  # edge aggregation
            pl.BlockSpec((1, dp, hp), lambda l, n: (l, 0, 0)),   # w1
            pl.BlockSpec((1, 1, hp), lambda l, n: (l, 0, 0)),    # b1
            pl.BlockSpec((1, hp, dp), lambda l, n: (l, 0, 0)),   # w2
            pl.BlockSpec((1, 1, dp), lambda l, n: (l, 0, 0)),    # b2
            pl.BlockSpec((1, 1, dp), lambda l, n: (l, 0, 0)),    # gamma
            pl.BlockSpec((1, 1, dp), lambda l, n: (l, 0, 0)),    # beta
        ]
        out_specs = pl.BlockSpec((np_, dp), lambda l, n: (0, 0), **resident)
        return pl.pallas_call(
            fused_gin_kernel,
            out_shape=jax.ShapeDtypeStruct((np_, dp), jnp.float32),
            grid_spec=pltpu.PrefetchScalarGridSpec(
                num_scalar_prefetch=1,
                grid=(num_layer,),
                in_specs=in_specs,
                out_specs=out_specs),
            compiler_params=pltpu.CompilerParams(
                dimension_semantics=("arbitrary",),     # layer axis is a sequential carry
                vmem_limit_bytes=vmem_limit),
        )

    args = (n_arr, adj, h0, eaggr, w1, b1, w2, b2, gamma, beta)
    try:
        return build(True)(*args)
    except Exception:
        # Fallback for JAX versions where pipeline_mode=pl.Buffered(1) is not
        # supported for grid pipelining: identical semantics, default buffering.
        return build(False)(*args)


# -----------------------------------------------------------------------------
# Parameter construction (deterministic, in-script)
# -----------------------------------------------------------------------------
def _xavier_uniform(key, shape):
    fan_out, fan_in = shape[0], shape[1]
    bound = (6.0 / (fan_in + fan_out)) ** 0.5
    return jax.random.uniform(key, shape, jnp.float32, -bound, bound)


def _linear_init(key, in_dim, out_dim):
    kw, kb = jax.random.split(key)
    bound = 1.0 / (in_dim ** 0.5)
    w = jax.random.uniform(kw, (in_dim, out_dim), jnp.float32, -bound, bound)
    b = jax.random.uniform(kb, (out_dim,), jnp.float32, -bound, bound)
    return w, b


def make_params(key, num_layer, emb_dim):
    keys = jax.random.split(key, 2 + num_layer)
    params = {
        "x_emb1": _xavier_uniform(keys[0], (NUM_ATOM_TYPE, emb_dim)),
        "x_emb2": _xavier_uniform(keys[1], (NUM_CHIRALITY_TAG, emb_dim)),
        "layers": [],
    }
    for layer in range(num_layer):
        lk = jax.random.split(keys[2 + layer], 4)
        w1, b1 = _linear_init(lk[0], emb_dim, 2 * emb_dim)
        w2, b2 = _linear_init(lk[1], 2 * emb_dim, emb_dim)
        params["layers"].append({
            "edge_emb1": _xavier_uniform(lk[2], (NUM_BOND_TYPE, emb_dim)),
            "edge_emb2": _xavier_uniform(lk[3], (NUM_BOND_DIRECTION, emb_dim)),
            "w1": w1, "b1": b1, "w2": w2, "b2": b2,
            "gamma": jnp.ones((emb_dim,), jnp.float32),
            "beta": jnp.zeros((emb_dim,), jnp.float32),
        })
    return params


# -----------------------------------------------------------------------------
# GNN forward (JK='last', drop_ratio=0 -> dropout is identity)
# -----------------------------------------------------------------------------
def gnn_forward(params, x_nodes, edge_index, edge_attr, num_layer):
    n = x_nodes.shape[0]
    d = params["x_emb1"].shape[1]
    hdim = 2 * d
    np_ = _round_up(max(n, 1), 128)   # MXU-native node tile; lane-dense adj loads
    dp = _round_up(d, 128)            # lane-dense feature axis (unmasked stores)
    hp = _round_up(hdim, 128)

    # node embeddings (gather = glue outside the kernel)
    h0 = (jnp.take(params["x_emb1"], x_nodes[:, 0], axis=0)
          + jnp.take(params["x_emb2"], x_nodes[:, 1], axis=0))
    h0 = jnp.pad(h0, ((0, np_ - n), (0, dp - d)))

    # add self loops (shared by every layer)
    loop = jnp.arange(n, dtype=edge_index.dtype)
    src = jnp.concatenate([edge_index[0], loop])
    dst = jnp.concatenate([edge_index[1], loop])
    self_loop_attr = jnp.concatenate(
        [jnp.full((n, 1), 4, dtype=edge_attr.dtype),
         jnp.zeros((n, 1), dtype=edge_attr.dtype)], axis=1)
    full_attr = jnp.concatenate([edge_attr, self_loop_attr], axis=0)

    # dense (dst, src) edge-count operator, built directly in bf16 (exact for
    # small integer multiplicities) -> half the HBM write and half the DMA.
    # TODO(synk): for large graphs replace with a row-tiled CSR gather (scalar prefetch)
    adj = jnp.zeros((np_, np_), jnp.bfloat16).at[dst, src].add(1.0)

    # Precompute every layer's edge-embedding aggregation (segment-sum onto dst)
    # and stack/pad all per-layer parameters: one fused kernel, no inter-layer gaps.
    eaggr, w1s, b1s, w2s, b2s, gammas, betas = [], [], [], [], [], [], []
    for layer in range(num_layer):
        p = params["layers"][layer]
        eemb = (jnp.take(p["edge_emb1"], full_attr[:, 0], axis=0)
                + jnp.take(p["edge_emb2"], full_attr[:, 1], axis=0))
        ea = jax.ops.segment_sum(eemb, dst, num_segments=np_)
        eaggr.append(jnp.pad(ea, ((0, 0), (0, dp - d))))
        w1s.append(jnp.pad(p["w1"], ((0, dp - d), (0, hp - hdim))))
        b1s.append(jnp.pad(p["b1"], (0, hp - hdim)).reshape(1, hp))
        w2s.append(jnp.pad(p["w2"], ((0, hp - hdim), (0, dp - d))))
        b2s.append(jnp.pad(p["b2"], (0, dp - d)).reshape(1, dp))
        gammas.append(jnp.pad(p["gamma"], (0, dp - d), constant_values=1.0).reshape(1, dp))
        betas.append(jnp.pad(p["beta"], (0, dp - d)).reshape(1, dp))

    n_arr = jnp.array([n], dtype=jnp.int32)   # runtime scalar -> no recompile per size
    out = gin_fused_forward(n_arr, adj, h0,
                            jnp.stack(eaggr), jnp.stack(w1s), jnp.stack(b1s),
                            jnp.stack(w2s), jnp.stack(b2s),
                            jnp.stack(gammas), jnp.stack(betas))
    return out[:n, :d]   # JK == 'last'


# -----------------------------------------------------------------------------
# Pure-JAX reference (mirrors the PyTorch module) for a correctness check
# -----------------------------------------------------------------------------
def gnn_reference(params, x_nodes, edge_index, edge_attr, num_layer):
    n = x_nodes.shape[0]
    h = (jnp.take(params["x_emb1"], x_nodes[:, 0], axis=0)
         + jnp.take(params["x_emb2"], x_nodes[:, 1], axis=0))
    loop = jnp.arange(n, dtype=edge_index.dtype)
    src = jnp.concatenate([edge_index[0], loop])
    dst = jnp.concatenate([edge_index[1], loop])
    self_loop_attr = jnp.concatenate(
        [jnp.full((n, 1), 4, dtype=edge_attr.dtype),
         jnp.zeros((n, 1), dtype=edge_attr.dtype)], axis=1)
    full_attr = jnp.concatenate([edge_attr, self_loop_attr], axis=0)
    for layer in range(num_layer):
        p = params["layers"][layer]
        eemb = (jnp.take(p["edge_emb1"], full_attr[:, 0], axis=0)
                + jnp.take(p["edge_emb2"], full_attr[:, 1], axis=0))
        aggr = jax.ops.segment_sum(h[src] + eemb, dst, num_segments=n)
        z = jnp.maximum(aggr @ p["w1"] + p["b1"], 0.0) @ p["w2"] + p["b2"]
        mean = jnp.mean(z, axis=0, keepdims=True)
        var = jnp.mean((z - mean) ** 2, axis=0, keepdims=True)
        z = (z - mean) * jax.lax.rsqrt(var + BN_EPS) * p["gamma"] + p["beta"]
        h = z if layer == num_layer - 1 else jnp.maximum(z, 0.0)
    return h


if __name__ == "__main__":
    key = jax.random.PRNGKey(0)
    num_layer, emb_dim = 2, 32
    n_nodes, n_edges = 8, 12

    k1, k2, k3, k4, k5 = jax.random.split(key, 5)
    x_nodes = jnp.stack([
        jax.random.randint(k1, (n_nodes,), 0, NUM_ATOM_TYPE),
        jax.random.randint(k2, (n_nodes,), 0, NUM_CHIRALITY_TAG),
    ], axis=1).astype(jnp.int32)                                   # [N, 2]
    edge_index = jax.random.randint(k3, (2, n_edges), 0, n_nodes).astype(jnp.int32)
    edge_attr = jnp.stack([
        jax.random.randint(k4, (n_edges,), 0, NUM_BOND_TYPE),
        jax.random.randint(k5, (n_edges,), 0, NUM_BOND_DIRECTION),
    ], axis=1).astype(jnp.int32)                                   # [E, 2]

    params = make_params(jax.random.PRNGKey(42), num_layer, emb_dim)

    out = gnn_forward(params, x_nodes, edge_index, edge_attr, num_layer)
    out = jax.block_until_ready(out)
    assert out.shape == (n_nodes, emb_dim)
    assert bool(jnp.all(jnp.isfinite(out)))

    ref = gnn_reference(params, x_nodes, edge_index, edge_attr, num_layer)
    ref = jax.block_until_ready(ref)
    assert bool(jnp.allclose(out, ref, atol=1e-3, rtol=1e-3)), "mismatch vs reference"

    print("KERNEL_OK")
</pallas_src>

<mosaic_0001>
module attributes {stable_mosaic.version = 11 : i64} {
  func.func @fused_gin_kernel(%arg0: i32, %arg1: memref<1xi32, #tpu.memory_space<smem>>, %arg2: memref<128x128xbf16, #tpu.memory_space<vmem>>, %arg3: memref<128x128xf32, #tpu.memory_space<vmem>>, %arg4: memref<1x128x128xf32, #tpu.memory_space<vmem>>, %arg5: memref<1x128x128xf32, #tpu.memory_space<vmem>>, %arg6: memref<1x1x128xf32, #tpu.memory_space<vmem>>, %arg7: memref<1x128x128xf32, #tpu.memory_space<vmem>>, %arg8: memref<1x1x128xf32, #tpu.memory_space<vmem>>, %arg9: memref<1x1x128xf32, #tpu.memory_space<vmem>>, %arg10: memref<1x1x128xf32, #tpu.memory_space<vmem>>, %arg11: memref<128x128xf32, #tpu.memory_space<vmem>>) attributes {dimension_semantics = [#tpu.dimension_semantics<arbitrary>], iteration_bounds = array<i64: 2>, scalar_prefetch = 1 : i64, scratch_operands = 0 : i64, tpu.core_type = #tpu.core_type<tc>, window_params = [{pipeline_mode = #tpu.pipeline_mode<synchronous>, transform_indices = @transform_0, window_bounds = array<i64: 128, 128>}, {pipeline_mode = #tpu.pipeline_mode<synchronous>, transform_indices = @transform_1, window_bounds = array<i64: 128, 128>}, {transform_indices = @transform_2, window_bounds = array<i64: 1, 128, 128>}, {transform_indices = @transform_3, window_bounds = array<i64: 1, 128, 128>}, {transform_indices = @transform_4, window_bounds = array<i64: 1, 1, 128>}, {transform_indices = @transform_5, window_bounds = array<i64: 1, 128, 128>}, {transform_indices = @transform_6, window_bounds = array<i64: 1, 1, 128>}, {transform_indices = @transform_7, window_bounds = array<i64: 1, 1, 128>}, {transform_indices = @transform_8, window_bounds = array<i64: 1, 1, 128>}, {pipeline_mode = #tpu.pipeline_mode<synchronous>, transform_indices = @transform_9, window_bounds = array<i64: 128, 128>}]} {
    %c1_i32 = arith.constant 1 : i32
    %0 = arith.cmpi eq, %arg0, %c1_i32 : i32
    %c0_i32 = arith.constant 0 : i32
    %1 = arith.cmpi eq, %arg0, %c0_i32 : i32
    %2 = arith.extui %1 : i1 to i32
    %c0_i32_0 = arith.constant 0 : i32
    %3 = arith.cmpi ne, %2, %c0_i32_0 : i32
    scf.if %3 {
      %c0_37 = arith.constant 0 : index
      %c0_38 = arith.constant 0 : index
      %72 = vector.load %arg3[%c0_37, %c0_38] : memref<128x128xf32, #tpu.memory_space<vmem>>, vector<128x128xf32>
      %c0_39 = arith.constant 0 : index
      %c0_40 = arith.constant 0 : index
      %73 = vector.load %arg11[%c0_39, %c0_40] : memref<128x128xf32, #tpu.memory_space<vmem>>, vector<128x128xf32>
      tpu.vector_store %arg11[%c0_39, %c0_40], %72 {strides = array<i32>} : memref<128x128xf32, #tpu.memory_space<vmem>>, vector<128x128xf32>,
    } else {
    }
    %c0 = arith.constant 0 : index
    %c0_1 = arith.constant 0 : index
    %4 = vector.load %arg11[%c0, %c0_1] : memref<128x128xf32, #tpu.memory_space<vmem>>, vector<128x128xf32>
    %5 = arith.truncf %4 : vector<128x128xf32> to vector<128x128xbf16>
    %6 = arith.extf %5 : vector<128x128xbf16> to vector<128x128xf32>
    %7 = arith.subf %4, %6 : vector<128x128xf32>
    %8 = arith.truncf %7 : vector<128x128xf32> to vector<128x128xbf16>
    %c0_2 = arith.constant 0 : index
    %c0_3 = arith.constant 0 : index
    %9 = vector.load %arg2[%c0_2, %c0_3] : memref<128x128xbf16, #tpu.memory_space<vmem>>, vector<128x128xbf16>
    %cst = arith.constant dense<0.000000e+00> : vector<128x128xf32>
    %10 = tpu.matmul %9, %5, %cst {dimension_numbers = #tpu.dot_dimension_numbers<[1], [0], [0], [1], [0, 0, 1, 1], [], []>} : vector<128x128xbf16>, vector<128x128xbf16>, vector<128x128xf32> -> vector<128x128xf32>
    %cst_4 = arith.constant dense<0.000000e+00> : vector<128x128xf32>
    %11 = tpu.matmul %9, %8, %cst_4 {dimension_numbers = #tpu.dot_dimension_numbers<[1], [0], [0], [1], [0, 0, 1, 1], [], []>} : vector<128x128xbf16>, vector<128x128xbf16>, vector<128x128xf32> -> vector<128x128xf32>
    %12 = arith.addf %10, %11 : vector<128x128xf32>
    %c0_5 = arith.constant 0 : index
    %c0_6 = arith.constant 0 : index
    %c0_7 = arith.constant 0 : index
    %13 = vector.load %arg4[%c0_5, %c0_6, %c0_7] : memref<1x128x128xf32, #tpu.memory_space<vmem>>, vector<1x128x128xf32>
    %14 = vector.shape_cast %13 : vector<1x128x128xf32> to vector<128x128xf32>
    %15 = arith.addf %12, %14 : vector<128x128xf32>
    %c0_8 = arith.constant 0 : index
    %c0_9 = arith.constant 0 : index
    %c0_10 = arith.constant 0 : index
    %16 = vector.load %arg5[%c0_8, %c0_9, %c0_10] : memref<1x128x128xf32, #tpu.memory_space<vmem>>, vector<1x128x128xf32>
    %17 = vector.shape_cast %16 : vector<1x128x128xf32> to vector<128x128xf32>
    %cst_11 = arith.constant dense<0.000000e+00> : vector<128x128xf32>
    %18 = tpu.matmul %15, %17, %cst_11 {dimension_numbers = #tpu.dot_dimension_numbers<[1], [0], [0], [1], [0, 0, 1, 1], [], []>} : vector<128x128xf32>, vector<128x128xf32>, vector<128x128xf32> -> vector<128x128xf32>
    %c0_12 = arith.constant 0 : index
    %c0_13 = arith.constant 0 : index
    %c0_14 = arith.constant 0 : index
    %19 = vector.load %arg6[%c0_12, %c0_13, %c0_14] : memref<1x1x128xf32, #tpu.memory_space<vmem>>, vector<1x1x128xf32>
    %20 = vector.shape_cast %19 : vector<1x1x128xf32> to vector<1x128xf32>
    %21 = vector.broadcast %20 : vector<1x128xf32> to vector<128x128xf32>
    %22 = arith.addf %18, %21 : vector<128x128xf32>
    %cst_15 = arith.constant 0.000000e+00 : f32
    %23 = vector.broadcast %cst_15 : f32 to vector<128x128xf32>
    %24 = arith.maximumf %22, %23 : vector<128x128xf32>
    %c0_16 = arith.constant 0 : index
    %c0_17 = arith.constant 0 : index
    %c0_18 = arith.constant 0 : index
    %25 = vector.load %arg7[%c0_16, %c0_17, %c0_18] : memref<1x128x128xf32, #tpu.memory_space<vmem>>, vector<1x128x128xf32>
    %26 = vector.shape_cast %25 : vector<1x128x128xf32> to vector<128x128xf32>
    %cst_19 = arith.constant dense<0.000000e+00> : vector<128x128xf32>
    %27 = tpu.matmul %24, %26, %cst_19 {dimension_numbers = #tpu.dot_dimension_numbers<[1], [0], [0], [1], [0, 0, 1, 1], [], []>} : vector<128x128xf32>, vector<128x128xf32>, vector<128x128xf32> -> vector<128x128xf32>
    %c0_20 = arith.constant 0 : index
    %c0_21 = arith.constant 0 : index
    %c0_22 = arith.constant 0 : index
    %28 = vector.load %arg8[%c0_20, %c0_21, %c0_22] : memref<1x1x128xf32, #tpu.memory_space<vmem>>, vector<1x1x128xf32>
    %29 = vector.shape_cast %28 : vector<1x1x128xf32> to vector<1x128xf32>
    %30 = vector.broadcast %29 : vector<1x128xf32> to vector<128x128xf32>
    %31 = arith.addf %27, %30 : vector<128x128xf32>
    %c0_23 = arith.constant 0 : index
    %32 = memref.load %arg1[%c0_23] : memref<1xi32, #tpu.memory_space<smem>>
    %33 = tpu.iota {dimensions = array<i32: 0>} : vector<128x1xi32>
    %34 = vector.broadcast %32 : i32 to vector<128x1xi32>
    %35 = arith.cmpi slt, %33, %34 : vector<128x1xi32>
    %36 = arith.extui %35 : vector<128x1xi1> to vector<128x1xi32>
    %37 = arith.sitofp %36 : vector<128x1xi32> to vector<128x1xf32>
    %38 = arith.sitofp %32 : i32 to f32
    %cst_24 = arith.constant 1.000000e+00 : f32
    %39 = arith.divf %cst_24, %38 : f32
    %40 = vector.broadcast %37 : vector<128x1xf32> to vector<128x128xf32>
    %41 = arith.mulf %31, %40 : vector<128x128xf32>
    %cst_25 = arith.constant dense<0.000000e+00> : vector<128xf32>
    %42 = vector.multi_reduction <add>, %41, %cst_25 [0] : vector<128x128xf32> to vector<128xf32>
    %43 = vector.shape_cast %42 : vector<128xf32> to vector<1x128xf32>
    %44 = vector.broadcast %39 : f32 to vector<1x128xf32>
    %45 = arith.mulf %43, %44 : vector<1x128xf32>
    %46 = vector.broadcast %45 : vector<1x128xf32> to vector<128x128xf32>
    %47 = arith.subf %31, %46 : vector<128x128xf32>
    %48 = vector.broadcast %37 : vector<128x1xf32> to vector<128x128xf32>
    %49 = arith.mulf %47, %48 : vector<128x128xf32>
    %50 = arith.mulf %49, %49 : vector<128x128xf32>
    %cst_26 = arith.constant dense<0.000000e+00> : vector<128xf32>
    %51 = vector.multi_reduction <add>, %50, %cst_26 [0] : vector<128x128xf32> to vector<128xf32>
    %52 = vector.shape_cast %51 : vector<128xf32> to vector<1x128xf32>
    %53 = vector.broadcast %39 : f32 to vector<1x128xf32>
    %54 = arith.mulf %52, %53 : vector<1x128xf32>
    %cst_27 = arith.constant 9.99999974E-6 : f32
    %55 = vector.broadcast %cst_27 : f32 to vector<1x128xf32>
    %56 = arith.addf %54, %55 : vector<1x128xf32>
    %57 = math.rsqrt %56 : vector<1x128xf32>
    %58 = vector.broadcast %57 : vector<1x128xf32> to vector<128x128xf32>
    %59 = arith.mulf %49, %58 : vector<128x128xf32>
    %c0_28 = arith.constant 0 : index
    %c0_29 = arith.constant 0 : index
    %c0_30 = arith.constant 0 : index
    %60 = vector.load %arg9[%c0_28, %c0_29, %c0_30] : memref<1x1x128xf32, #tpu.memory_space<vmem>>, vector<1x1x128xf32>
    %61 = vector.shape_cast %60 : vector<1x1x128xf32> to vector<1x128xf32>
    %62 = vector.broadcast %61 : vector<1x128xf32> to vector<128x128xf32>
    %63 = arith.mulf %59, %62 : vector<128x128xf32>
    %c0_31 = arith.constant 0 : index
    %c0_32 = arith.constant 0 : index
    %c0_33 = arith.constant 0 : index
    %64 = vector.load %arg10[%c0_31, %c0_32, %c0_33] : memref<1x1x128xf32, #tpu.memory_space<vmem>>, vector<1x1x128xf32>
    %65 = vector.shape_cast %64 : vector<1x1x128xf32> to vector<1x128xf32>
    %66 = vector.broadcast %65 : vector<1x128xf32> to vector<128x128xf32>
    %67 = arith.addf %63, %66 : vector<128x128xf32>
    %cst_34 = arith.constant 0.000000e+00 : f32
    %68 = vector.broadcast %cst_34 : f32 to vector<128x128xf32>
    %69 = arith.maximumf %67, %68 : vector<128x128xf32>
    %70 = arith.select %0, %67, %69 : vector<128x128xf32>
    %c0_35 = arith.constant 0 : index
    %c0_36 = arith.constant 0 : index
    %71 = vector.load %arg11[%c0_35, %c0_36] : memref<128x128xf32, #tpu.memory_space<vmem>>, vector<128x128xf32>
    tpu.vector_store %arg11[%c0_35, %c0_36], %70 {strides = array<i32>} : memref<128x128xf32, #tpu.memory_space<vmem>>, vector<128x128xf32>,
    return
  }
  func.func @transform_0(%arg0: i32, %arg1: memref<1xi32, #tpu.memory_space<smem>>) -> (i32, i32) {
    %c0_i32 = arith.constant 0 : i32
    %c0_i32_0 = arith.constant 0 : i32
    %c0_i32_1 = arith.constant 0 : i32
    return %c0_i32, %c0_i32_0 : i32, i32
  }
  func.func @transform_1(%arg0: i32, %arg1: memref<1xi32, #tpu.memory_space<smem>>) -> (i32, i32) {
    %c0_i32 = arith.constant 0 : i32
    %c0_i32_0 = arith.constant 0 : i32
    %c0_i32_1 = arith.constant 0 : i32
    return %c0_i32, %c0_i32_0 : i32, i32
  }
  func.func @transform_2(%arg0: i32, %arg1: memref<1xi32, #tpu.memory_space<smem>>) -> (i32, i32, i32) {
    %c0_i32 = arith.constant 0 : i32
    %c0_i32_0 = arith.constant 0 : i32
    %c0_i32_1 = arith.constant 0 : i32
    return %arg0, %c0_i32, %c0_i32_0 : i32, i32, i32
  }
  func.func @transform_3(%arg0: i32, %arg1: memref<1xi32, #tpu.memory_space<smem>>) -> (i32, i32, i32) {
    %c0_i32 = arith.constant 0 : i32
    %c0_i32_0 = arith.constant 0 : i32
    %c0_i32_1 = arith.constant 0 : i32
    return %arg0, %c0_i32, %c0_i32_0 : i32, i32, i32
  }
  func.func @transform_4(%arg0: i32, %arg1: memref<1xi32, #tpu.memory_space<smem>>) -> (i32, i32, i32) {
    %c0_i32 = arith.constant 0 : i32
    %c0_i32_0 = arith.constant 0 : i32
    %c0_i32_1 = arith.constant 0 : i32
    return %arg0, %c0_i32, %c0_i32_0 : i32, i32, i32
  }
  func.func @transform_5(%arg0: i32, %arg1: memref<1xi32, #tpu.memory_space<smem>>) -> (i32, i32, i32) {
    %c0_i32 = arith.constant 0 : i32
    %c0_i32_0 = arith.constant 0 : i32
    %c0_i32_1 = arith.constant 0 : i32
    return %arg0, %c0_i32, %c0_i32_0 : i32, i32, i32
  }
  func.func @transform_6(%arg0: i32, %arg1: memref<1xi32, #tpu.memory_space<smem>>) -> (i32, i32, i32) {
    %c0_i32 = arith.constant 0 : i32
    %c0_i32_0 = arith.constant 0 : i32
    %c0_i32_1 = arith.constant 0 : i32
    return %arg0, %c0_i32, %c0_i32_0 : i32, i32, i32
  }
  func.func @transform_7(%arg0: i32, %arg1: memref<1xi32, #tpu.memory_space<smem>>) -> (i32, i32, i32) {
    %c0_i32 = arith.constant 0 : i32
    %c0_i32_0 = arith.constant 0 : i32
    %c0_i32_1 = arith.constant 0 : i32
    return %arg0, %c0_i32, %c0_i32_0 : i32, i32, i32
  }
  func.func @transform_8(%arg0: i32, %arg1: memref<1xi32, #tpu.memory_space<smem>>) -> (i32, i32, i32) {
    %c0_i32 = arith.constant 0 : i32
    %c0_i32_0 = arith.constant 0 : i32
    %c0_i32_1 = arith.constant 0 : i32
    return %arg0, %c0_i32, %c0_i32_0 : i32, i32, i32
  }
  func.func @transform_9(%arg0: i32, %arg1: memref<1xi32, #tpu.memory_space<smem>>) -> (i32, i32) {
    %c0_i32 = arith.constant 0 : i32
    %c0_i32_0 = arith.constant 0 : i32
    %c0_i32_1 = arith.constant 0 : i32
    return %c0_i32, %c0_i32_0 : i32, i32
  }
}

module attributes {stable_mosaic.version = 11 : i64} {
  func.func @fused_gin_kernel(%arg0: i32, %arg1: memref<1xi32, #tpu.memory_space<smem>>, %arg2: memref<128x128xbf16, #tpu.memory_space<vmem>>, %arg3: memref<128x128xf32, #tpu.memory_space<vmem>>, %arg4: memref<1x128x128xf32, #tpu.memory_space<vmem>>, %arg5: memref<1x128x128xf32, #tpu.memory_space<vmem>>, %arg6: memref<1x1x128xf32, #tpu.memory_space<vmem>>, %arg7: memref<1x128x128xf32, #tpu.memory_space<vmem>>, %arg8: memref<1x1x128xf32, #tpu.memory_space<vmem>>, %arg9: memref<1x1x128xf32, #tpu.memory_space<vmem>>, %arg10: memref<1x1x128xf32, #tpu.memory_space<vmem>>, %arg11: memref<128x128xf32, #tpu.memory_space<vmem>>) attributes {dimension_semantics = [#tpu.dimension_semantics<arbitrary>], iteration_bounds = array<i64: 2>, scalar_prefetch = 1 : i64, scratch_operands = 0 : i64, tpu.core_type = #tpu.core_type<tc>, window_params = [{pipeline_mode = #tpu.pipeline_mode<synchronous>, transform_indices = @transform_0, window_bounds = array<i64: 128, 128>}, {pipeline_mode = #tpu.pipeline_mode<synchronous>, transform_indices = @transform_1, window_bounds = array<i64: 128, 128>}, {transform_indices = @transform_2, window_bounds = array<i64: 1, 128, 128>}, {transform_indices = @transform_3, window_bounds = array<i64: 1, 128, 128>}, {transform_indices = @transform_4, window_bounds = array<i64: 1, 1, 128>}, {transform_indices = @transform_5, window_bounds = array<i64: 1, 128, 128>}, {transform_indices = @transform_6, window_bounds = array<i64: 1, 1, 128>}, {transform_indices = @transform_7, window_bounds = array<i64: 1, 1, 128>}, {transform_indices = @transform_8, window_bounds = array<i64: 1, 1, 128>}, {pipeline_mode = #tpu.pipeline_mode<synchronous>, transform_indices = @transform_9, window_bounds = array<i64: 128, 128>}]} {
    %c1_i32 = arith.constant 1 : i32
    %0 = arith.cmpi eq, %arg0, %c1_i32 : i32
    %c0_i32 = arith.constant 0 : i32
    %1 = arith.cmpi eq, %arg0, %c0_i32 : i32
    %2 = arith.extui %1 : i1 to i32
    %c0_i32_0 = arith.constant 0 : i32
    %3 = arith.cmpi ne, %2, %c0_i32_0 : i32
    scf.if %3 {
      %c0_37 = arith.constant 0 : index
      %c0_38 = arith.constant 0 : index
      %72 = vector.load %arg3[%c0_37, %c0_38] : memref<128x128xf32, #tpu.memory_space<vmem>>, vector<128x128xf32>
      %c0_39 = arith.constant 0 : index
      %c0_40 = arith.constant 0 : index
      %73 = vector.load %arg11[%c0_39, %c0_40] : memref<128x128xf32, #tpu.memory_space<vmem>>, vector<128x128xf32>
      tpu.vector_store %arg11[%c0_39, %c0_40], %72 {strides = array<i32>} : memref<128x128xf32, #tpu.memory_space<vmem>>, vector<128x128xf32>,
    } else {
    }
    %c0 = arith.constant 0 : index
    %c0_1 = arith.constant 0 : index
    %4 = vector.load %arg11[%c0, %c0_1] : memref<128x128xf32, #tpu.memory_space<vmem>>, vector<128x128xf32>
    %5 = arith.truncf %4 : vector<128x128xf32> to vector<128x128xbf16>
    %6 = arith.extf %5 : vector<128x128xbf16> to vector<128x128xf32>
    %7 = arith.subf %4, %6 : vector<128x128xf32>
    %8 = arith.truncf %7 : vector<128x128xf32> to vector<128x128xbf16>
    %c0_2 = arith.constant 0 : index
    %c0_3 = arith.constant 0 : index
    %9 = vector.load %arg2[%c0_2, %c0_3] : memref<128x128xbf16, #tpu.memory_space<vmem>>, vector<128x128xbf16>
    %cst = arith.constant dense<0.000000e+00> : vector<128x128xf32>
    %10 = tpu.matmul %9, %5, %cst {dimension_numbers = #tpu.dot_dimension_numbers<[1], [0], [0], [1], [0, 0, 1, 1], [], []>} : vector<128x128xbf16>, vector<128x128xbf16>, vector<128x128xf32> -> vector<128x128xf32>
    %cst_4 = arith.constant dense<0.000000e+00> : vector<128x128xf32>
    %11 = tpu.matmul %9, %8, %cst_4 {dimension_numbers = #tpu.dot_dimension_numbers<[1], [0], [0], [1], [0, 0, 1, 1], [], []>} : vector<128x128xbf16>, vector<128x128xbf16>, vector<128x128xf32> -> vector<128x128xf32>
    %12 = arith.addf %10, %11 : vector<128x128xf32>
    %c0_5 = arith.constant 0 : index
    %c0_6 = arith.constant 0 : index
    %c0_7 = arith.constant 0 : index
    %13 = vector.load %arg4[%c0_5, %c0_6, %c0_7] : memref<1x128x128xf32, #tpu.memory_space<vmem>>, vector<1x128x128xf32>
    %14 = vector.shape_cast %13 : vector<1x128x128xf32> to vector<128x128xf32>
    %15 = arith.addf %12, %14 : vector<128x128xf32>
    %c0_8 = arith.constant 0 : index
    %c0_9 = arith.constant 0 : index
    %c0_10 = arith.constant 0 : index
    %16 = vector.load %arg5[%c0_8, %c0_9, %c0_10] : memref<1x128x128xf32, #tpu.memory_space<vmem>>, vector<1x128x128xf32>
    %17 = vector.shape_cast %16 : vector<1x128x128xf32> to vector<128x128xf32>
    %cst_11 = arith.constant dense<0.000000e+00> : vector<128x128xf32>
    %18 = tpu.matmul %15, %17, %cst_11 {dimension_numbers = #tpu.dot_dimension_numbers<[1], [0], [0], [1], [0, 0, 1, 1], [], []>} : vector<128x128xf32>, vector<128x128xf32>, vector<128x128xf32> -> vector<128x128xf32>
    %c0_12 = arith.constant 0 : index
    %c0_13 = arith.constant 0 : index
    %c0_14 = arith.constant 0 : index
    %19 = vector.load %arg6[%c0_12, %c0_13, %c0_14] : memref<1x1x128xf32, #tpu.memory_space<vmem>>, vector<1x1x128xf32>
    %20 = vector.shape_cast %19 : vector<1x1x128xf32> to vector<1x128xf32>
    %21 = vector.broadcast %20 : vector<1x128xf32> to vector<128x128xf32>
    %22 = arith.addf %18, %21 : vector<128x128xf32>
    %cst_15 = arith.constant 0.000000e+00 : f32
    %23 = vector.broadcast %cst_15 : f32 to vector<128x128xf32>
    %24 = arith.maximumf %22, %23 : vector<128x128xf32>
    %c0_16 = arith.constant 0 : index
    %c0_17 = arith.constant 0 : index
    %c0_18 = arith.constant 0 : index
    %25 = vector.load %arg7[%c0_16, %c0_17, %c0_18] : memref<1x128x128xf32, #tpu.memory_space<vmem>>, vector<1x128x128xf32>
    %26 = vector.shape_cast %25 : vector<1x128x128xf32> to vector<128x128xf32>
    %cst_19 = arith.constant dense<0.000000e+00> : vector<128x128xf32>
    %27 = tpu.matmul %24, %26, %cst_19 {dimension_numbers = #tpu.dot_dimension_numbers<[1], [0], [0], [1], [0, 0, 1, 1], [], []>} : vector<128x128xf32>, vector<128x128xf32>, vector<128x128xf32> -> vector<128x128xf32>
    %c0_20 = arith.constant 0 : index
    %c0_21 = arith.constant 0 : index
    %c0_22 = arith.constant 0 : index
    %28 = vector.load %arg8[%c0_20, %c0_21, %c0_22] : memref<1x1x128xf32, #tpu.memory_space<vmem>>, vector<1x1x128xf32>
    %29 = vector.shape_cast %28 : vector<1x1x128xf32> to vector<1x128xf32>
    %30 = vector.broadcast %29 : vector<1x128xf32> to vector<128x128xf32>
    %31 = arith.addf %27, %30 : vector<128x128xf32>
    %c0_23 = arith.constant 0 : index
    %32 = memref.load %arg1[%c0_23] : memref<1xi32, #tpu.memory_space<smem>>
    %33 = tpu.iota {dimensions = array<i32: 0>} : vector<128x1xi32>
    %34 = vector.broadcast %32 : i32 to vector<128x1xi32>
    %35 = arith.cmpi slt, %33, %34 : vector<128x1xi32>
    %36 = arith.extui %35 : vector<128x1xi1> to vector<128x1xi32>
    %37 = arith.sitofp %36 : vector<128x1xi32> to vector<128x1xf32>
    %38 = arith.sitofp %32 : i32 to f32
    %cst_24 = arith.constant 1.000000e+00 : f32
    %39 = arith.divf %cst_24, %38 : f32
    %40 = vector.broadcast %37 : vector<128x1xf32> to vector<128x128xf32>
    %41 = arith.mulf %31, %40 : vector<128x128xf32>
    %cst_25 = arith.constant dense<0.000000e+00> : vector<128xf32>
    %42 = vector.multi_reduction <add>, %41, %cst_25 [0] : vector<128x128xf32> to vector<128xf32>
    %43 = vector.shape_cast %42 : vector<128xf32> to vector<1x128xf32>
    %44 = vector.broadcast %39 : f32 to vector<1x128xf32>
    %45 = arith.mulf %43, %44 : vector<1x128xf32>
    %46 = vector.broadcast %45 : vector<1x128xf32> to vector<128x128xf32>
    %47 = arith.subf %31, %46 : vector<128x128xf32>
    %48 = vector.broadcast %37 : vector<128x1xf32> to vector<128x128xf32>
    %49 = arith.mulf %47, %48 : vector<128x128xf32>
    %50 = arith.mulf %49, %49 : vector<128x128xf32>
    %cst_26 = arith.constant dense<0.000000e+00> : vector<128xf32>
    %51 = vector.multi_reduction <add>, %50, %cst_26 [0] : vector<128x128xf32> to vector<128xf32>
    %52 = vector.shape_cast %51 : vector<128xf32> to vector<1x128xf32>
    %53 = vector.broadcast %39 : f32 to vector<1x128xf32>
    %54 = arith.mulf %52, %53 : vector<1x128xf32>
    %cst_27 = arith.constant 9.99999974E-6 : f32
    %55 = vector.broadcast %cst_27 : f32 to vector<1x128xf32>
    %56 = arith.addf %54, %55 : vector<1x128xf32>
    %57 = math.rsqrt %56 : vector<1x128xf32>
    %58 = vector.broadcast %57 : vector<1x128xf32> to vector<128x128xf32>
    %59 = arith.mulf %49, %58 : vector<128x128xf32>
    %c0_28 = arith.constant 0 : index
    %c0_29 = arith.constant 0 : index
    %c0_30 = arith.constant 0 : index
    %60 = vector.load %arg9[%c0_28, %c0_29, %c0_30] : memref<1x1x128xf32, #tpu.memory_space<vmem>>, vector<1x1x128xf32>
    %61 = vector.shape_cast %60 : vector<1x1x128xf32> to vector<1x128xf32>
    %62 = vector.broadcast %61 : vector<1x128xf32> to vector<128x128xf32>
    %63 = arith.mulf %59, %62 : vector<128x128xf32>
    %c0_31 = arith.constant 0 : index
    %c0_32 = arith.constant 0 : index
    %c0_33 = arith.constant 0 : index
    %64 = vector.load %arg10[%c0_31, %c0_32, %c0_33] : memref<1x1x128xf32, #tpu.memory_space<vmem>>, vector<1x1x128xf32>
    %65 = vector.shape_cast %64 : vector<1x1x128xf32> to vector<1x128xf32>
    %66 = vector.broadcast %65 : vector<1x128xf32> to vector<128x128xf32>
    %67 = arith.addf %63, %66 : vector<128x128xf32>
    %cst_34 = arith.constant 0.000000e+00 : f32
    %68 = vector.broadcast %cst_34 : f32 to vector<128x128xf32>
    %69 = arith.maximumf %67, %68 : vector<128x128xf32>
    %70 = arith.select %0, %67, %69 : vector<128x128xf32>
    %c0_35 = arith.constant 0 : index
    %c0_36 = arith.constant 0 : index
    %71 = vector.load %arg11[%c0_35, %c0_36] : memref<128x128xf32, #tpu.memory_space<vmem>>, vector<128x128xf32>
    tpu.vector_store %arg11[%c0_35, %c0_36], %70 {strides = array<i32>} : memref<128x128xf32, #tpu.memory_space<vmem>>, vector<128x128xf32>,
    return
  }
  func.func @transform_0(%arg0: i32, %arg1: memref<1xi32, #tpu.memory_space<smem>>) -> (i32, i32) {
    %c0_i32 = arith.constant 0 : i32
    %c0_i32_0 = arith.constant 0 : i32
    %c0_i32_1 = arith.constant 0 : i32
    return %c0_i32, %c0_i32_0 : i32, i32
  }
  func.func @transform_1(%arg0: i32, %arg1: memref<1xi32, #tpu.memory_space<smem>>) -> (i32, i32) {
    %c0_i32 = arith.constant 0 : i32
    %c0_i32_0 = arith.constant 0 : i32
    %c0_i32_1 = arith.constant 0 : i32
    return %c0_i32, %c0_i32_0 : i32, i32
  }
  func.func @transform_2(%arg0: i32, %arg1: memref<1xi32, #tpu.memory_space<smem>>) -> (i32, i32, i32) {
    %c0_i32 = arith.constant 0 : i32
    %c0_i32_0 = arith.constant 0 : i32
    %c0_i32_1 = arith.constant 0 : i32
    return %arg0, %c0_i32, %c0_i32_0 : i32, i32, i32
  }
  func.func @transform_3(%arg0: i32, %arg1: memref<1xi32, #tpu.memory_space<smem>>) -> (i32, i32, i32) {
    %c0_i32 = arith.constant 0 : i32
    %c0_i32_0 = arith.constant 0 : i32
    %c0_i32_1 = arith.constant 0 : i32
    return %arg0, %c0_i32, %c0_i32_0 : i32, i32, i32
  }
  func.func @transform_4(%arg0: i32, %arg1: memref<1xi32, #tpu.memory_space<smem>>) -> (i32, i32, i32) {
    %c0_i32 = arith.constant 0 : i32
    %c0_i32_0 = arith.constant 0 : i32
    %c0_i32_1 = arith.constant 0 : i32
    return %arg0, %c0_i32, %c0_i32_0 : i32, i32, i32
  }
  func.func @transform_5(%arg0: i32, %arg1: memref<1xi32, #tpu.memory_space<smem>>) -> (i32, i32, i32) {
    %c0_i32 = arith.constant 0 : i32
    %c0_i32_0 = arith.constant 0 : i32
    %c0_i32_1 = arith.constant 0 : i32
    return %arg0, %c0_i32, %c0_i32_0 : i32, i32, i32
  }
  func.func @transform_6(%arg0: i32, %arg1: memref<1xi32, #tpu.memory_space<smem>>) -> (i32, i32, i32) {
    %c0_i32 = arith.constant 0 : i32
    %c0_i32_0 = arith.constant 0 : i32
    %c0_i32_1 = arith.constant 0 : i32
    return %arg0, %c0_i32, %c0_i32_0 : i32, i32, i32
  }
  func.func @transform_7(%arg0: i32, %arg1: memref<1xi32, #tpu.memory_space<smem>>) -> (i32, i32, i32) {
    %c0_i32 = arith.constant 0 : i32
    %c0_i32_0 = arith.constant 0 : i32
    %c0_i32_1 = arith.constant 0 : i32
    return %arg0, %c0_i32, %c0_i32_0 : i32, i32, i32
  }
  func.func @transform_8(%arg0: i32, %arg1: memref<1xi32, #tpu.memory_space<smem>>) -> (i32, i32, i32) {
    %c0_i32 = arith.constant 0 : i32
    %c0_i32_0 = arith.constant 0 : i32
    %c0_i32_1 = arith.constant 0 : i32
    return %arg0, %c0_i32, %c0_i32_0 : i32, i32, i32
  }
  func.func @transform_9(%arg0: i32, %arg1: memref<1xi32, #tpu.memory_space<smem>>) -> (i32, i32) {
    %c0_i32 = arith.constant 0 : i32
    %c0_i32_0 = arith.constant 0 : i32
    %c0_i32_1 = arith.constant 0 : i32
    return %c0_i32, %c0_i32_0 : i32, i32
  }
}

</mosaic_0001>

<llo_original>
// kernel: tpu_custom_call.1
$region0: #{tpu_custom_call.1}
  #allocation0 [shape = 'u32[]', space=smem, size = 0x4, offset = 0x4, fixed_abs, tag = 'smem constant byte address 0x4 - core index']
  #allocation1 [shape = 'u32[144,128]{1,0:T(1,128)}', space=vmem, size = 0x12000, scoped, tag = 'internal scratch']
  #allocation2 [shape = 's32[1]{0}', space=sflag, size = 0x4, scoped, tag = 'scoped memory for tpu_custom_call.1']
  #allocation3 [shape = 's32[1]{0:T(128)S(6)}', space=smem, size = 0x200, scoped, tag = 'prefetched SMEM operand 0']
  %s0 = inlined_call_operand.<no memory space> [shape: s32[1], index: 0, kind: input, shape index: {}]
  %s1 = inlined_call_operand.hbm [shape: bf16[128,128], index: 1, kind: input, shape index: {}]
  %s2 = inlined_call_operand.hbm [shape: f32[128,128], index: 2, kind: input, shape index: {}]
  %s3 = inlined_call_operand.hbm [shape: f32[2,128,128], index: 3, kind: input, shape index: {}]
  %s4 = inlined_call_operand.hbm [shape: f32[2,128,128], index: 4, kind: input, shape index: {}]
  %s5 = inlined_call_operand.vmem [shape: f32[2,1,128], index: 5, kind: input, shape index: {}]
  %s6 = inlined_call_operand.hbm [shape: f32[2,128,128], index: 6, kind: input, shape index: {}]
  %s7 = inlined_call_operand.vmem [shape: f32[2,1,128], index: 7, kind: input, shape index: {}]
  %s8 = inlined_call_operand.vmem [shape: f32[2,1,128], index: 8, kind: input, shape index: {}]
  %s9 = inlined_call_operand.vmem [shape: f32[2,1,128], index: 9, kind: input, shape index: {}]
  %s10 = inlined_call_operand.hbm [shape: f32[128,128], index: 10, kind: output, shape index: {}]
  %s11 = sld [smem:[#allocation0]]
  $region93: #{tpu_custom_call.1} parent=0
    _
  %s13 = ssub.s32 1, %s11
  %s14 = scalar_select 0, %s13, %s11
  %15 = sst [smem:[#allocation3]] %s0
  $region1: #{tpu_custom_call.1} parent=0
    #allocation4 [shape = 'u8[32768]{0}', space=vmem, size = 0x8000, scoped, tag = 'input window, operand 1, single buffered']
    #allocation5 [shape = 's32[2]{0}', space=sflag, size = 0x8, scoped, tag = 'scoped memory for tpu_custom_call.1']
    #allocation6 [shape = 's32[2]{0}', space=sflag, size = 0x8, scoped, tag = 'scoped memory for tpu_custom_call.1']
    #allocation7 [shape = 'u8[65536]{0}', space=vmem, size = 0x10000, scoped, tag = 'input window, operand 2, single buffered']
    #allocation8 [shape = 's32[1]{0}', space=sflag, size = 0x4, scoped, tag = 'scoped memory for tpu_custom_call.1']
    #allocation9 [shape = 'u8[131072]{0}', space=vmem, size = 0x20000, scoped, tag = 'input window, operand 3']
    #allocation10 [shape = 'u8[131072]{0}', space=vmem, size = 0x20000, scoped, tag = 'input window, operand 4']
    #allocation11 [shape = 'u8[131072]{0}', space=vmem, size = 0x20000, scoped, tag = 'input window, operand 6']
    #allocation12 [shape = 'u8[65536]{0}', space=vmem, size = 0x10000, scoped, tag = 'output window, operand 0, single buffered']
    %16 = vsyncpa [#allocation5], 0
    %17 = vsyncpa [#allocation8], 0
    %18 = vsyncpa [#allocation6], 0
    loop: start=0, step=1, limit=4
    $region2: #{tpu_custom_call.1} parent=1 // loop_pre_header
      _
    $region3: #{tpu_custom_call.1} parent=1 // loop_header
      %s20 = sphi 0, %s24
      %p21 = scmp.ge.s32.totalorder %s20, 4
      %s28 = sphi 0, %s28
      %s30 = sphi 0, %s28
      %s31 = sphi 0, %s30
      %s45 = sphi 0, %s31
      %s49 = sphi 0, %s49
      %s51 = sphi 0, %s49
      %s52 = sphi 0, %s51
      %s66 = sphi 0, %s52
      %s72 = sphi 0, %s74
      %s75 = sphi 0, %s72
      %s76 = sphi 0, %s75
      %s92 = sphi 0, %s76
      %s98 = sphi 0, %s100
      %s101 = sphi 0, %s98
      %s102 = sphi 0, %s101
      %s118 = sphi 0, %s102
      %s124 = sphi 0, %s126
      %s127 = sphi 0, %s124
      %s128 = sphi 0, %s127
      %s144 = sphi 0, %s128
      %s150 = sphi 0, %s152
      %s153 = sphi 0, %s150
      %s154 = sphi 0, %s153
      %s170 = sphi 0, %s154
      %s176 = sphi 0, %s178
      %s179 = sphi 0, %s176
      %s180 = sphi 0, %s179
      %s196 = sphi 0, %s180
      %s202 = sphi 0, %s204
      %s205 = sphi 0, %s202
      %s206 = sphi 0, %s205
      %s222 = sphi 0, %s206
      %s228 = sphi 0, %s230
      %s231 = sphi 0, %s228
      %s232 = sphi 0, %s231
      %s248 = sphi 0, %s232
      %s252 = sphi 0, %s252
      %s254 = sphi 0, %s252
      %s255 = sphi 0, %s254
      %s269 = sphi 0, %s255
    $region4: #{tpu_custom_call.1} parent=1 // loop_header_branch
      %23 = sbr.rel (%p21) target = $region8
    $region5: #{tpu_custom_call.1} parent=1 // loop_body
      %s25 = ssub.s32 %s20, 1
      %s26 = ssub.s32 %s20, 2
      %s27 = sadd.s32 %s20, 1
      %s29 = sadd.s32 %s28, 1
      %p32 = scmp.eq.s32.totalorder %s20, 1
      %p33 = scmp.ne.s32.totalorder %s28, %s30
      %p34 = scmp.eq.s32.totalorder %s20, 0
      %p35 = por %p33, %p34
      %p36 = scmp.ne.s32.totalorder %s28, %s30
      %p37 = scmp.eq.s32.totalorder %s25, 1
      %p38 = por %p36, %p37
      %p39 = scmp.ne.s32.totalorder %s30, %s31
      %p40 = scmp.eq.s32.totalorder %s25, 0
      %p41 = por %p39, %p40
      %p42 = scmp.ne.s32.totalorder %s30, %s31
      %p43 = scmp.eq.s32.totalorder %s26, 1
      %p44 = por %p42, %p43
      %p46 = scmp.ne.s32.totalorder %s31, %s45
      %p47 = scmp.eq.s32.totalorder %s26, 0
      %p48 = por %p46, %p47
      %s50 = sadd.s32 %s49, 1
      %p53 = scmp.eq.s32.totalorder %s20, 1
      %p54 = scmp.ne.s32.totalorder %s49, %s51
      %p55 = scmp.eq.s32.totalorder %s20, 0
      %p56 = por %p54, %p55
      %p57 = scmp.ne.s32.totalorder %s49, %s51
      %p58 = scmp.eq.s32.totalorder %s25, 1
      %p59 = por %p57, %p58
      %p60 = scmp.ne.s32.totalorder %s51, %s52
      %p61 = scmp.eq.s32.totalorder %s25, 0
      %p62 = por %p60, %p61
      %p63 = scmp.ne.s32.totalorder %s51, %s52
      %p64 = scmp.eq.s32.totalorder %s26, 1
      %p65 = por %p63, %p64
      %p67 = scmp.ne.s32.totalorder %s52, %s66
      %p68 = scmp.eq.s32.totalorder %s26, 0
      %p69 = por %p67, %p68
      %s70 = ssub.s32 %s20, %s27
      %p71 = scmp.eq.s32.totalorder %s70, 0
      %s73 = sadd.s32 %s72, 1
      %s74 = scalar_select %p71, %s72, %s73
      %p77 = pneg %p71
      %p78 = scmp.eq.s32.totalorder %s20, 1
      %p79 = por %p77, %p78
      %p80 = scmp.ne.s32.totalorder %s72, %s75
      %p81 = scmp.eq.s32.totalorder %s20, 0
      %p82 = por %p80, %p81
      %p83 = scmp.ne.s32.totalorder %s72, %s75
      %p84 = scmp.eq.s32.totalorder %s25, 1
      %p85 = por %p83, %p84
      %p86 = scmp.ne.s32.totalorder %s75, %s76
      %p87 = scmp.eq.s32.totalorder %s25, 0
      %p88 = por %p86, %p87
      %p89 = scmp.ne.s32.totalorder %s75, %s76
      %p90 = scmp.eq.s32.totalorder %s26, 1
      %p91 = por %p89, %p90
      %p93 = scmp.ne.s32.totalorder %s76, %s92
      %p94 = scmp.eq.s32.totalorder %s26, 0
      %p95 = por %p93, %p94
      %s96 = ssub.s32 %s20, %s27
      %p97 = scmp.eq.s32.totalorder %s96, 0
      %s99 = sadd.s32 %s98, 1
      %s100 = scalar_select %p97, %s98, %s99
      %p103 = pneg %p97
      %p104 = scmp.eq.s32.totalorder %s20, 1
      %p105 = por %p103, %p104
      %p106 = scmp.ne.s32.totalorder %s98, %s101
      %p107 = scmp.eq.s32.totalorder %s20, 0
      %p108 = por %p106, %p107
      %p109 = scmp.ne.s32.totalorder %s98, %s101
      %p110 = scmp.eq.s32.totalorder %s25, 1
      %p111 = por %p109, %p110
      %p112 = scmp.ne.s32.totalorder %s101, %s102
      %p113 = scmp.eq.s32.totalorder %s25, 0
      %p114 = por %p112, %p113
      %p115 = scmp.ne.s32.totalorder %s101, %s102
      %p116 = scmp.eq.s32.totalorder %s26, 1
      %p117 = por %p115, %p116
      %p119 = scmp.ne.s32.totalorder %s102, %s118
      %p120 = scmp.eq.s32.totalorder %s26, 0
      %p121 = por %p119, %p120
      %s122 = ssub.s32 %s20, %s27
      %p123 = scmp.eq.s32.totalorder %s122, 0
      %s125 = sadd.s32 %s124, 1
      %s126 = scalar_select %p123, %s124, %s125
      %p129 = pneg %p123
      %p130 = scmp.eq.s32.totalorder %s20, 1
      %p131 = por %p129, %p130
      %p132 = scmp.ne.s32.totalorder %s124, %s127
      %p133 = scmp.eq.s32.totalorder %s20, 0
      %p134 = por %p132, %p133
      %p135 = scmp.ne.s32.totalorder %s124, %s127
      %p136 = scmp.eq.s32.totalorder %s25, 1
      %p137 = por %p135, %p136
      %p138 = scmp.ne.s32.totalorder %s127, %s128
      %p139 = scmp.eq.s32.totalorder %s25, 0
      %p140 = por %p138, %p139
      %p141 = scmp.ne.s32.totalorder %s127, %s128
      %p142 = scmp.eq.s32.totalorder %s26, 1
      %p143 = por %p141, %p142
      %p145 = scmp.ne.s32.totalorder %s128, %s144
      %p146 = scmp.eq.s32.totalorder %s26, 0
      %p147 = por %p145, %p146
      %s148 = ssub.s32 %s20, %s27
      %p149 = scmp.eq.s32.totalorder %s148, 0
      %s151 = sadd.s32 %s150, 1
      %s152 = scalar_select %p149, %s150, %s151
      %p155 = pneg %p149
      %p156 = scmp.eq.s32.totalorder %s20, 1
      %p157 = por %p155, %p156
      %p158 = scmp.ne.s32.totalorder %s150, %s153
      %p159 = scmp.eq.s32.totalorder %s20, 0
      %p160 = por %p158, %p159
      %p161 = scmp.ne.s32.totalorder %s150, %s153
      %p162 = scmp.eq.s32.totalorder %s25, 1
      %p163 = por %p161, %p162
      %p164 = scmp.ne.s32.totalorder %s153, %s154
      %p165 = scmp.eq.s32.totalorder %s25, 0
      %p166 = por %p164, %p165
      %p167 = scmp.ne.s32.totalorder %s153, %s154
      %p168 = scmp.eq.s32.totalorder %s26, 1
      %p169 = por %p167, %p168
      %p171 = scmp.ne.s32.totalorder %s154, %s170
      %p172 = scmp.eq.s32.totalorder %s26, 0
      %p173 = por %p171, %p172
      %s174 = ssub.s32 %s20, %s27
      %p175 = scmp.eq.s32.totalorder %s174, 0
      %s177 = sadd.s32 %s176, 1
      %s178 = scalar_select %p175, %s176, %s177
      %p181 = pneg %p175
      %p182 = scmp.eq.s32.totalorder %s20, 1
      %p183 = por %p181, %p182
      %p184 = scmp.ne.s32.totalorder %s176, %s179
      %p185 = scmp.eq.s32.totalorder %s20, 0
      %p186 = por %p184, %p185
      %p187 = scmp.ne.s32.totalorder %s176, %s179
      %p188 = scmp.eq.s32.totalorder %s25, 1
      %p189 = por %p187, %p188
      %p190 = scmp.ne.s32.totalorder %s179, %s180
      %p191 = scmp.eq.s32.totalorder %s25, 0
      %p192 = por %p190, %p191
      %p193 = scmp.ne.s32.totalorder %s179, %s180
      %p194 = scmp.eq.s32.totalorder %s26, 1
      %p195 = por %p193, %p194
      %p197 = scmp.ne.s32.totalorder %s180, %s196
      %p198 = scmp.eq.s32.totalorder %s26, 0
      %p199 = por %p197, %p198
      %s200 = ssub.s32 %s20, %s27
      %p201 = scmp.eq.s32.totalorder %s200, 0
      %s203 = sadd.s32 %s202, 1
      %s204 = scalar_select %p201, %s202, %s203
      %p207 = pneg %p201
      %p208 = scmp.eq.s32.totalorder %s20, 1
      %p209 = por %p207, %p208
      %p210 = scmp.ne.s32.totalorder %s202, %s205
      %p211 = scmp.eq.s32.totalorder %s20, 0
      %p212 = por %p210, %p211
      %p213 = scmp.ne.s32.totalorder %s202, %s205
      %p214 = scmp.eq.s32.totalorder %s25, 1
      %p215 = por %p213, %p214
      %p216 = scmp.ne.s32.totalorder %s205, %s206
      %p217 = scmp.eq.s32.totalorder %s25, 0
      %p218 = por %p216, %p217
      %p219 = scmp.ne.s32.totalorder %s205, %s206
      %p220 = scmp.eq.s32.totalorder %s26, 1
      %p221 = por %p219, %p220
      %p223 = scmp.ne.s32.totalorder %s206, %s222
      %p224 = scmp.eq.s32.totalorder %s26, 0
      %p225 = por %p223, %p224
      %s226 = ssub.s32 %s20, %s27
      %p227 = scmp.eq.s32.totalorder %s226, 0
      %s229 = sadd.s32 %s228, 1
      %s230 = scalar_select %p227, %s228, %s229
      %p233 = pneg %p227
      %p234 = scmp.eq.s32.totalorder %s20, 1
      %p235 = por %p233, %p234
      %p236 = scmp.ne.s32.totalorder %s228, %s231
      %p237 = scmp.eq.s32.totalorder %s20, 0
      %p238 = por %p236, %p237
      %p239 = scmp.ne.s32.totalorder %s228, %s231
      %p240 = scmp.eq.s32.totalorder %s25, 1
      %p241 = por %p239, %p240
      %p242 = scmp.ne.s32.totalorder %s231, %s232
      %p243 = scmp.eq.s32.totalorder %s25, 0
      %p244 = por %p242, %p243
      %p245 = scmp.ne.s32.totalorder %s231, %s232
      %p246 = scmp.eq.s32.totalorder %s26, 1
      %p247 = por %p245, %p246
      %p249 = scmp.ne.s32.totalorder %s232, %s248
      %p250 = scmp.eq.s32.totalorder %s26, 0
      %p251 = por %p249, %p250
      %s253 = sadd.s32 %s252, 1
      %p256 = scmp.eq.s32.totalorder %s20, 1
      %p257 = scmp.ne.s32.totalorder %s252, %s254
      %p258 = scmp.eq.s32.totalorder %s20, 0
      %p259 = por %p257, %p258
      %p260 = scmp.ne.s32.totalorder %s252, %s254
      %p261 = scmp.eq.s32.totalorder %s25, 1
      %p262 = por %p260, %p261
      %p263 = scmp.ne.s32.totalorder %s254, %s255
      %p264 = scmp.eq.s32.totalorder %s25, 0
      %p265 = por %p263, %p264
      %p266 = scmp.ne.s32.totalorder %s254, %s255
      %p267 = scmp.eq.s32.totalorder %s26, 1
      %p268 = por %p266, %p267
      %p270 = scmp.ne.s32.totalorder %s255, %s269
      %p271 = scmp.eq.s32.totalorder %s26, 0
      %p272 = por %p270, %p271
      %p273 = scmp.le.s32.totalorder 1, %s20
      %p274 = scmp.lt.s32.totalorder %s20, 3
      %p275 = pnand %p273, %p274
      %p276 = pneg %p275
      // Predicated region
      $region9: #{tpu_custom_call.1} parent=5 // pred_check
        _
      $region10: #{tpu_custom_call.1} parent=5 // pred_check_branch
        %278 = sbr.rel (%p275) target = $region12
      $region11: #{tpu_custom_call.1} parent=5 // pred_region
        %s279 = ssub.s32 %s20, 1
        // Predicated region
        $region13: #{tpu_custom_call.1} parent=11 // pred_check
          %p280 = pneg %p41
        $region14: #{tpu_custom_call.1} parent=11 // pred_check_branch
          %282 = sbr.rel (%p280) target = $region16
        $region15: #{tpu_custom_call.1} parent=11 // pred_region
          %s284 = ssub.s32 1024, 1024
          %285 = vsyncadd [#allocation5], %s284
          %s286 = sshll.u32 [#allocation4], 4
          %s287 = int_to_ptr.vmem [resolvable:$true] %s286
          %292 = dma.hbm_to_vmem [thread:$0]  %s1, 1024, %s287, [#allocation5], 64, 64, 4
        $region16: #{tpu_custom_call.1} parent=11 // pred_fallthru
          _
        // Predicated region
        $region17: #{tpu_custom_call.1} parent=11 // pred_check
          %p293 = pneg %p62
        $region18: #{tpu_custom_call.1} parent=11 // pred_check_branch
          %295 = sbr.rel (%p293) target = $region20
        $region19: #{tpu_custom_call.1} parent=11 // pred_region
          %s297 = ssub.s32 2048, 2048
          %298 = vsyncadd [#allocation8], %s297
          %s299 = sshll.u32 [#allocation7], 4
          %s300 = int_to_ptr.vmem [resolvable:$true] %s299
          %305 = dma.hbm_to_vmem [thread:$0]  %s2, 2048, %s300, [#allocation8], 128, 128, 8
        $region20: #{tpu_custom_call.1} parent=11 // pred_fallthru
          _
      $region12: #{tpu_custom_call.1} parent=5 // pred_fallthru
        _
      %p306 = scmp.lt.s32.totalorder %s20, 2
      // Predicated region
      $region21: #{tpu_custom_call.1} parent=5 // pred_check
        %p307 = pneg %p306
      $region22: #{tpu_custom_call.1} parent=5 // pred_check_branch
        %309 = sbr.rel (%p307) target = $region24
      $region23: #{tpu_custom_call.1} parent=5 // pred_region
        // Predicated region
        $region25: #{tpu_custom_call.1} parent=23 // pred_check
          %p310 = pneg %p82
        $region26: #{tpu_custom_call.1} parent=23 // pred_check_branch
          %312 = sbr.rel (%p310) target = $region28
        $region27: #{tpu_custom_call.1} parent=23 // pred_region
          %s313 = sand.u32 %s20, 1
          %s314 = scalar_lea.sflag [#allocation5], %s313
          %s315 = sand.u32 %s72, 1
          %s316 = smul.addr %s315, 128
          %s317 = scalar_lea.vmem [#allocation9], %s316
          %s319 = ssub.s32 2048, 2048
          %320 = vsyncadd %s314, %s319
          %s321 = smul.addr %s20, 16
          %s322 = smul.addr %s321, 128
          %s323 = scalar_lea.hbm %s3, %s322
          %s324 = sshll.u32 %s317, 4
          %s325 = int_to_ptr.vmem [resolvable:$true] %s324
          %330 = dma.hbm_to_vmem [thread:$0]  %s323, 2048, %s325, %s314, 128, 128, 8
        $region28: #{tpu_custom_call.1} parent=23 // pred_fallthru
          _
        // Predicated region
        $region29: #{tpu_custom_call.1} parent=23 // pred_check
          %p331 = pneg %p108
        $region30: #{tpu_custom_call.1} parent=23 // pred_check_branch
          %333 = sbr.rel (%p331) target = $region32
        $region31: #{tpu_custom_call.1} parent=23 // pred_region
          %s334 = sand.u32 %s20, 1
          %s335 = scalar_lea.sflag [#allocation5], %s334
          %s336 = sand.u32 %s98, 1
          %s337 = smul.addr %s336, 128
          %s338 = scalar_lea.vmem [#allocation10], %s337
          %s340 = ssub.s32 2048, 2048
          %341 = vsyncadd %s335, %s340
          %s342 = smul.addr %s20, 16
          %s343 = smul.addr %s342, 128
          %s344 = scalar_lea.hbm %s4, %s343
          %s345 = sshll.u32 %s338, 4
          %s346 = int_to_ptr.vmem [resolvable:$true] %s345
          %351 = dma.hbm_to_vmem [thread:$0]  %s344, 2048, %s346, %s335, 128, 128, 8
        $region32: #{tpu_custom_call.1} parent=23 // pred_fallthru
          _
        // Predicated region
        $region33: #{tpu_custom_call.1} parent=23 // pred_check
          %p352 = pneg %p134
        $region34: #{tpu_custom_call.1} parent=23 // pred_check_branch
          %354 = sbr.rel (%p352) target = $region36
        $region35: #{tpu_custom_call.1} parent=23 // pred_region
          %p355 = scmp.lt.s32.totalorder %s20, 1
          %s356 = scalar_select %p355, %s20, 1
          %s357 = scalar_lea.vmem %s5, %s356
        $region36: #{tpu_custom_call.1} parent=23 // pred_fallthru
          _
        // Predicated region
        $region37: #{tpu_custom_call.1} parent=23 // pred_check
          %p358 = pneg %p160
        $region38: #{tpu_custom_call.1} parent=23 // pred_check_branch
          %360 = sbr.rel (%p358) target = $region40
        $region39: #{tpu_custom_call.1} parent=23 // pred_region
          %s361 = sand.u32 %s20, 1
          %s362 = scalar_lea.sflag [#allocation5], %s361
          %s363 = sand.u32 %s150, 1
          %s364 = smul.addr %s363, 128
          %s365 = scalar_lea.vmem [#allocation11], %s364
          %s367 = ssub.s32 2048, 2048
          %368 = vsyncadd %s362, %s367
          %s369 = smul.addr %s20, 16
          %s370 = smul.addr %s369, 128
          %s371 = scalar_lea.hbm %s6, %s370
          %s372 = sshll.u32 %s365, 4
          %s373 = int_to_ptr.vmem [resolvable:$true] %s372
          %378 = dma.hbm_to_vmem [thread:$0]  %s371, 2048, %s373, %s362, 128, 128, 8
        $region40: #{tpu_custom_call.1} parent=23 // pred_fallthru
          _
        // Predicated region
        $region41: #{tpu_custom_call.1} parent=23 // pred_check
          %p379 = pneg %p186
        $region42: #{tpu_custom_call.1} parent=23 // pred_check_branch
          %381 = sbr.rel (%p379) target = $region44
        $region43: #{tpu_custom_call.1} parent=23 // pred_region
          %p382 = scmp.lt.s32.totalorder %s20, 1
          %s383 = scalar_select %p382, %s20, 1
          %s384 = scalar_lea.vmem %s7, %s383
        $region44: #{tpu_custom_call.1} parent=23 // pred_fallthru
          _
        // Predicated region
        $region45: #{tpu_custom_call.1} parent=23 // pred_check
          %p385 = pneg %p212
        $region46: #{tpu_custom_call.1} parent=23 // pred_check_branch
          %387 = sbr.rel (%p385) target = $region48
        $region47: #{tpu_custom_call.1} parent=23 // pred_region
          %p388 = scmp.lt.s32.totalorder %s20, 1
          %s389 = scalar_select %p388, %s20, 1
          %s390 = scalar_lea.vmem %s8, %s389
        $region48: #{tpu_custom_call.1} parent=23 // pred_fallthru
          _
        // Predicated region
        $region49: #{tpu_custom_call.1} parent=23 // pred_check
          %p391 = pneg %p238
        $region50: #{tpu_custom_call.1} parent=23 // pred_check_branch
          %393 = sbr.rel (%p391) target = $region52
        $region51: #{tpu_custom_call.1} parent=23 // pred_region
          %p394 = scmp.lt.s32.totalorder %s20, 1
          %s395 = scalar_select %p394, %s20, 1
          %s396 = scalar_lea.vmem %s9, %s395
        $region52: #{tpu_custom_call.1} parent=23 // pred_fallthru
          _
      $region24: #{tpu_custom_call.1} parent=5 // pred_fallthru
        _
      %p397 = scmp.le.s32.totalorder 1, %s20
      %p398 = scmp.lt.s32.totalorder %s20, 3
      %p399 = pnand %p397, %p398
      %p400 = pneg %p399
      // Predicated region
      $region53: #{tpu_custom_call.1} parent=5 // pred_check
        _
      $region54: #{tpu_custom_call.1} parent=5 // pred_check_branch
        %402 = sbr.rel (%p399) target = $region56
      $region55: #{tpu_custom_call.1} parent=5 // pred_region
        %s403 = ssub.s32 %s20, 1
        // Predicated region
        $region57: #{tpu_custom_call.1} parent=55 // pred_check
          %p404 = pneg %p41
        $region58: #{tpu_custom_call.1} parent=55 // pred_check_branch
          %406 = sbr.rel (%p404) target = $region60
        $region59: #{tpu_custom_call.1} parent=55 // pred_region
          %407 = dma.done [#allocation5], 1024
        $region60: #{tpu_custom_call.1} parent=55 // pred_fallthru
          _
        // Predicated region
        $region61: #{tpu_custom_call.1} parent=55 // pred_check
          %p408 = pneg %p62
        $region62: #{tpu_custom_call.1} parent=55 // pred_check_branch
          %410 = sbr.rel (%p408) target = $region64
        $region63: #{tpu_custom_call.1} parent=55 // pred_region
          %411 = dma.done [#allocation8], 2048
        $region64: #{tpu_custom_call.1} parent=55 // pred_fallthru
          _
        %s412 = sand.u32 %s25, 1
        %s413 = scalar_lea.sflag [#allocation5], %s412
        %s414 = sand.u32 %s75, 1
        %s415 = smul.addr %s414, 128
        %s416 = scalar_lea.vmem [#allocation9], %s415
        // Predicated region
        $region65: #{tpu_custom_call.1} parent=55 // pred_check
          %p417 = pneg %p88
        $region66: #{tpu_custom_call.1} parent=55 // pred_check_branch
          %419 = sbr.rel (%p417) target = $region68
        $region67: #{tpu_custom_call.1} parent=55 // pred_region
          %420 = dma.done %s413, 2048
        $region68: #{tpu_custom_call.1} parent=55 // pred_fallthru
          _
        %s421 = sand.u32 %s25, 1
        %s422 = scalar_lea.sflag [#allocation5], %s421
        %s423 = sand.u32 %s101, 1
        %s424 = smul.addr %s423, 128
        %s425 = scalar_lea.vmem [#allocation10], %s424
        // Predicated region
        $region69: #{tpu_custom_call.1} parent=55 // pred_check
          %p426 = pneg %p114
        $region70: #{tpu_custom_call.1} parent=55 // pred_check_branch
          %428 = sbr.rel (%p426) target = $region72
        $region71: #{tpu_custom_call.1} parent=55 // pred_region
          %429 = dma.done %s422, 2048
        $region72: #{tpu_custom_call.1} parent=55 // pred_fallthru
          _
        %s430 = sand.u32 %s25, 1
        %s431 = scalar_lea.sflag [#allocation5], %s430
        %s432 = sand.u32 %s153, 1
        %s433 = smul.addr %s432, 128
        %s434 = scalar_lea.vmem [#allocation11], %s433
        // Predicated region
        $region73: #{tpu_custom_call.1} parent=55 // pred_check
          %p435 = pneg %p166
        $region74: #{tpu_custom_call.1} parent=55 // pred_check_branch
          %437 = sbr.rel (%p435) target = $region76
        $region75: #{tpu_custom_call.1} parent=55 // pred_region
          %438 = dma.done %s431, 2048
        $region76: #{tpu_custom_call.1} parent=55 // pred_fallthru
          _
        %p439 = pneg %p41
        %p440 = pneg %p38
        %p441 = pneg %p62
        %p442 = pneg %p59
        %s443 = sand.u32 %s25, 1
        %s444 = scalar_lea.sflag [#allocation5], %s443
        %s445 = sand.u32 %s75, 1
        %s446 = smul.addr %s445, 128
        %s447 = scalar_lea.vmem [#allocation9], %s446
        %p448 = pneg %p88
        %p449 = pneg %p85
        %s450 = sand.u32 %s25, 1
        %s451 = scalar_lea.sflag [#allocation5], %s450
        %s452 = sand.u32 %s101, 1
        %s453 = smul.addr %s452, 128
        %s454 = scalar_lea.vmem [#allocation10], %s453
        %p455 = pneg %p114
        %p456 = pneg %p111
        %p457 = scmp.lt.s32.totalorder %s25, 1
        %s458 = scalar_select %p457, %s25, 1
        %s459 = scalar_lea.vmem %s5, %s458
        %p460 = pneg %p140
        %p461 = pneg %p137
        %s462 = sand.u32 %s25, 1
        %s463 = scalar_lea.sflag [#allocation5], %s462
        %s464 = sand.u32 %s153, 1
        %s465 = smul.addr %s464, 128
        %s466 = scalar_lea.vmem [#allocation11], %s465
        %p467 = pneg %p166
        %p468 = pneg %p163
        %p469 = scmp.lt.s32.totalorder %s25, 1
        %s470 = scalar_select %p469, %s25, 1
        %s471 = scalar_lea.vmem %s7, %s470
        %p472 = pneg %p192
        %p473 = pneg %p189
        %p474 = scmp.lt.s32.totalorder %s25, 1
        %s475 = scalar_select %p474, %s25, 1
        %s476 = scalar_lea.vmem %s8, %s475
        %p477 = pneg %p218
        %p478 = pneg %p215
        %p479 = scmp.lt.s32.totalorder %s25, 1
        %s480 = scalar_select %p479, %s25, 1
        %s481 = scalar_lea.vmem %s9, %s480
        %p482 = pneg %p244
        %p483 = pneg %p241
        %p484 = pneg %p265
        %p485 = pneg %p262
        %p486 = scmp.lt.s32.totalorder %s25, 1
        %s487 = scalar_select %p486, %s25, 1
        %s488 = scalar_lea.vmem %s5, %s487
        %p489 = scmp.lt.s32.totalorder %s25, 1
        %s490 = scalar_select %p489, %s25, 1
        %s491 = scalar_lea.vmem %s7, %s490
        %p492 = scmp.lt.s32.totalorder %s25, 1
        %s493 = scalar_select %p492, %s25, 1
        %s494 = scalar_lea.vmem %s8, %s493
        %p495 = scmp.lt.s32.totalorder %s25, 1
        %s496 = scalar_select %p495, %s25, 1
        %s497 = scalar_lea.vmem %s9, %s496
        %p499 = scmp.eq.s32.totalorder %s25, 1
        %p500 = scmp.eq.s32.totalorder %s25, 0
        // Predicated region
        $region77: #{tpu_custom_call.1} parent=55 // pred_check
          %p501 = pneg %p500
        $region78: #{tpu_custom_call.1} parent=55 // pred_check_branch
          %503 = sbr.rel (%p501) target = $region80
        $region79: #{tpu_custom_call.1} parent=55 // pred_region
          %v504 = vld [vmem:[#allocation7] sm:$0xff]
          %v505 = vld [vmem:[#allocation7 + $0x8] sm:$0xff]
          %v506 = vld [vmem:[#allocation7 + $0x10] sm:$0xff]
          %v507 = vld [vmem:[#allocation7 + $0x18] sm:$0xff]
          %v508 = vld [vmem:[#allocation7 + $0x20] sm:$0xff]
          %v509 = vld [vmem:[#allocation7 + $0x28] sm:$0xff]
          %v510 = vld [vmem:[#allocation7 + $0x30] sm:$0xff]
          %v511 = vld [vmem:[#allocation7 + $0x38] sm:$0xff]
          %v512 = vld [vmem:[#allocation7 + $0x40] sm:$0xff]
          %v513 = vld [vmem:[#allocation7 + $0x48] sm:$0xff]
          %v514 = vld [vmem:[#allocation7 + $0x50] sm:$0xff]
          %v515 = vld [vmem:[#allocation7 + $0x58] sm:$0xff]
          %v516 = vld [vmem:[#allocation7 + $0x60] sm:$0xff]
          %v517 = vld [vmem:[#allocation7 + $0x68] sm:$0xff]
          %v518 = vld [vmem:[#allocation7 + $0x70] sm:$0xff]
          %v519 = vld [vmem:[#allocation7 + $0x78] sm:$0xff]
          %520 = vst [vmem:[#allocation12] sm:$0xff] %v504
          %521 = vst [vmem:[#allocation12 + $0x8] sm:$0xff] %v505
          %522 = vst [vmem:[#allocation12 + $0x10] sm:$0xff] %v506
          %523 = vst [vmem:[#allocation12 + $0x18] sm:$0xff] %v507
          %524 = vst [vmem:[#allocation12 + $0x20] sm:$0xff] %v508
          %525 = vst [vmem:[#allocation12 + $0x28] sm:$0xff] %v509
          %526 = vst [vmem:[#allocation12 + $0x30] sm:$0xff] %v510
          %527 = vst [vmem:[#allocation12 + $0x38] sm:$0xff] %v511
          %528 = vst [vmem:[#allocation12 + $0x40] sm:$0xff] %v512
          %529 = vst [vmem:[#allocation12 + $0x48] sm:$0xff] %v513
          %530 = vst [vmem:[#allocation12 + $0x50] sm:$0xff] %v514
          %531 = vst [vmem:[#allocation12 + $0x58] sm:$0xff] %v515
          %532 = vst [vmem:[#allocation12 + $0x60] sm:$0xff] %v516
          %533 = vst [vmem:[#allocation12 + $0x68] sm:$0xff] %v517
          %534 = vst [vmem:[#allocation12 + $0x70] sm:$0xff] %v518
          %535 = vst [vmem:[#allocation12 + $0x78] sm:$0xff] %v519
        $region80: #{tpu_custom_call.1} parent=55 // pred_fallthru
          _
        %v536 = vld [vmem:[#allocation12] sm:$0xff]
        %v537 = vld [vmem:[#allocation12 + $0x8] sm:$0xff]
        %v538 = vld [vmem:[#allocation12 + $0x10] sm:$0xff]
        %v539 = vld [vmem:[#allocation12 + $0x18] sm:$0xff]
        %v540 = vld [vmem:[#allocation12 + $0x20] sm:$0xff]
        %v541 = vld [vmem:[#allocation12 + $0x28] sm:$0xff]
        %v542 = vld [vmem:[#allocation12 + $0x30] sm:$0xff]
        %v543 = vld [vmem:[#allocation12 + $0x38] sm:$0xff]
        %v544 = vld [vmem:[#allocation12 + $0x40] sm:$0xff]
        %v545 = vld [vmem:[#allocation12 + $0x48] sm:$0xff]
        %v546 = vld [vmem:[#allocation12 + $0x50] sm:$0xff]
        %v547 = vld [vmem:[#allocation12 + $0x58] sm:$0xff]
        %v548 = vld [vmem:[#allocation12 + $0x60] sm:$0xff]
        %v549 = vld [vmem:[#allocation12 + $0x68] sm:$0xff]
        %v550 = vld [vmem:[#allocation12 + $0x70] sm:$0xff]
        %v551 = vld [vmem:[#allocation12 + $0x78] sm:$0xff]
        %v552 = vpack.c.bf16 %v537, %v536
        %v553 = vpack.c.bf16 %v539, %v538
        %v554 = vpack.c.bf16 %v541, %v540
        %v555 = vpack.c.bf16 %v543, %v542
        %v556 = vpack.c.bf16 %v545, %v544
        %v557 = vpack.c.bf16 %v547, %v546
        %v558 = vpack.c.bf16 %v549, %v548
        %v559 = vpack.c.bf16 %v551, %v550
        %v560 = vunpack.c.l.bf16 %v552
        %v561 = vunpack.c.h.bf16 %v552
        %v562 = vunpack.c.l.bf16 %v553
        %v563 = vunpack.c.h.bf16 %v553
        %v564 = vunpack.c.l.bf16 %v554
        %v565 = vunpack.c.h.bf16 %v554
        %v566 = vunpack.c.l.bf16 %v555
        %v567 = vunpack.c.h.bf16 %v555
        %v568 = vunpack.c.l.bf16 %v556
        %v569 = vunpack.c.h.bf16 %v556
        %v570 = vunpack.c.l.bf16 %v557
        %v571 = vunpack.c.h.bf16 %v557
        %v572 = vunpack.c.l.bf16 %v558
        %v573 = vunpack.c.h.bf16 %v558
        %v574 = vunpack.c.l.bf16 %v559
        %v575 = vunpack.c.h.bf16 %v559
        %v576 = vsub.f32 %v536, %v560
        %v577 = vsub.f32 %v537, %v561
        %v578 = vsub.f32 %v538, %v562
        %v579 = vsub.f32 %v539, %v563
        %v580 = vsub.f32 %v540, %v564
        %v581 = vsub.f32 %v541, %v565
        %v582 = vsub.f32 %v542, %v566
        %v583 = vsub.f32 %v543, %v567
        %v584 = vsub.f32 %v544, %v568
        %v585 = vsub.f32 %v545, %v569
        %v586 = vsub.f32 %v546, %v570
        %v587 = vsub.f32 %v547, %v571
        %v588 = vsub.f32 %v548, %v572
        %v589 = vsub.f32 %v549, %v573
        %v590 = vsub.f32 %v550, %v574
        %v591 = vsub.f32 %v551, %v575
        %v592 = vpack.c.bf16 %v577, %v576
        %v593 = vpack.c.bf16 %v579, %v578
        %v594 = vpack.c.bf16 %v581, %v580
        %v595 = vpack.c.bf16 %v583, %v582
        %v596 = vpack.c.bf16 %v585, %v584
        %v597 = vpack.c.bf16 %v587, %v586
        %v598 = vpack.c.bf16 %v589, %v588
        %v599 = vpack.c.bf16 %v591, %v590
        %v600 = vld [vmem:[#allocation4] sm:$0xf]
        %v601 = vld [vmem:[#allocation4 + $0x4] sm:$0xf]
        %v602 = vld [vmem:[#allocation4 + $0x8] sm:$0xf]
        %v603 = vld [vmem:[#allocation4 + $0xc] sm:$0xf]
        %v604 = vld [vmem:[#allocation4 + $0x10] sm:$0xf]
        %v605 = vld [vmem:[#allocation4 + $0x14] sm:$0xf]
        %v606 = vld [vmem:[#allocation4 + $0x18] sm:$0xf]
        %v607 = vld [vmem:[#allocation4 + $0x1c] sm:$0xf]
        %v608 = vld [vmem:[#allocation4 + $0x20] sm:$0xf]
        %v609 = vld [vmem:[#allocation4 + $0x24] sm:$0xf]
        %v610 = vld [vmem:[#allocation4 + $0x28] sm:$0xf]
        %v611 = vld [vmem:[#allocation4 + $0x2c] sm:$0xf]
        %v612 = vld [vmem:[#allocation4 + $0x30] sm:$0xf]
        %v613 = vld [vmem:[#allocation4 + $0x34] sm:$0xf]
        %v614 = vld [vmem:[#allocation4 + $0x38] sm:$0xf]
        %v615 = vld [vmem:[#allocation4 + $0x3c] sm:$0xf]
        %v632 = vunpack.c.l.b16 %v600
        %v633 = vunpack.c.l.b16 %v601
        %v634 = vunpack.c.l.b16 %v602
        %v635 = vunpack.c.l.b16 %v603
        %v636 = vunpack.c.l.b16 %v604
        %v637 = vunpack.c.l.b16 %v605
        %v638 = vunpack.c.l.b16 %v606
        %v639 = vunpack.c.l.b16 %v607
        %v640 = vunpack.c.l.b16 %v608
        %v641 = vunpack.c.l.b16 %v609
        %v642 = vunpack.c.l.b16 %v610
        %v643 = vunpack.c.l.b16 %v611
        %v644 = vunpack.c.l.b16 %v612
        %v645 = vunpack.c.l.b16 %v613
        %v646 = vunpack.c.l.b16 %v614
        %v647 = vunpack.c.l.b16 %v615
        %v648 = vpack.c.b16 %v633, %v632
        %v649 = vpack.c.b16 %v635, %v634
        %v650 = vpack.c.b16 %v637, %v636
        %v651 = vpack.c.b16 %v639, %v638
        %v652 = vpack.c.b16 %v641, %v640
        %v653 = vpack.c.b16 %v643, %v642
        %v654 = vpack.c.b16 %v645, %v644
        %v655 = vpack.c.b16 %v647, %v646
        %664 = vmatprep.subr.bf16.mxu0 0
        %665 = vmatpush1.bf16.msra.mxu0 %v592
        %666 = vmatprep.subr.bf16.mxu0 0
        %667 = vmatpush1.bf16.msra.mxu0 %v593
        %668 = vmatprep.subr.bf16.mxu0 0
        %669 = vmatpush1.bf16.msra.mxu0 %v594
        %670 = vmatprep.subr.bf16.mxu0 0
        %671 = vmatpush1.bf16.msra.mxu0 %v595
        %672 = vmatprep.subr.bf16.mxu0 0
        %673 = vmatpush1.bf16.msra.mxu0 %v596
        %674 = vmatprep.subr.bf16.mxu0 0
        %675 = vmatpush1.bf16.msra.mxu0 %v597
        %676 = vmatprep.subr.bf16.mxu0 0
        %677 = vmatpush1.bf16.msra.mxu0 %v598
        %678 = vmatprep.subr.bf16.mxu0 0
        %679 = vmatpush1.bf16.msra.mxu0 %v599
        %680 = vmatprep.subr.bf16.mxu0 0
        %681 = vmatpush1.bf16.msra.mxu0 0
        %682 = vmatprep.subr.bf16.mxu0 0
        %683 = vmatpush1.bf16.msra.mxu0 0
        %684 = vmatprep.subr.bf16.mxu0 0
        %685 = vmatpush1.bf16.msra.mxu0 0
        %686 = vmatprep.subr.bf16.mxu0 0
        %687 = vmatpush1.bf16.msra.mxu0 0
        %688 = vmatprep.subr.bf16.mxu0 0
        %689 = vmatpush1.bf16.msra.mxu0 0
        %690 = vmatprep.subr.bf16.mxu0 0
        %691 = vmatpush1.bf16.msra.mxu0 0
        %692 = vmatprep.subr.bf16.mxu0 0
        %693 = vmatpush1.bf16.msra.mxu0 0
        %694 = vmatprep.subr.bf16.mxu0 0
        %695 = vmatpush1.bf16.msra.mxu0 0
        %696 = vmatprep.mubr.bf16.mxu0 0
        %697 = vmatmul.mubr.bf16.gmra.mrb[0].mxu0 %v648
        %v698 = vpop.f32.mrb[0].mxu0
        %v699 = vadd.f32 0.0, %v698
        %v700 = vpop.f32.mrb[0].mxu0
        %v701 = vpop.f32.mrb[0].mxu0
        %v702 = vadd.f32 0.0, %v701
        %v703 = vpop.f32.mrb[0].mxu0
        %704 = vmatprep.mubr.bf16.mxu0 0
        %705 = vmatmul.mubr.bf16.gmra.mrb[0].mxu0 %v649
        %v706 = vpop.f32.mrb[0].mxu0
        %v707 = vadd.f32 0.0, %v706
        %v708 = vpop.f32.mrb[0].mxu0
        %v709 = vpop.f32.mrb[0].mxu0
        %v710 = vadd.f32 0.0, %v709
        %v711 = vpop.f32.mrb[0].mxu0
        %712 = vmatprep.mubr.bf16.mxu0 0
        %713 = vmatmul.mubr.bf16.gmra.mrb[0].mxu0 %v650
        %v714 = vpop.f32.mrb[0].mxu0
        %v715 = vadd.f32 0.0, %v714
        %v716 = vpop.f32.mrb[0].mxu0
        %v717 = vpop.f32.mrb[0].mxu0
        %v718 = vadd.f32 0.0, %v717
        %v719 = vpop.f32.mrb[0].mxu0
        %720 = vmatprep.mubr.bf16.mxu0 0
        %721 = vmatmul.mubr.bf16.gmra.mrb[0].mxu0 %v651
        %v722 = vpop.f32.mrb[0].mxu0
        %v723 = vadd.f32 0.0, %v722
        %v724 = vpop.f32.mrb[0].mxu0
        %v725 = vpop.f32.mrb[0].mxu0
        %v726 = vadd.f32 0.0, %v725
        %v727 = vpop.f32.mrb[0].mxu0
        %728 = vmatprep.mubr.bf16.mxu0 0
        %729 = vmatmul.mubr.bf16.gmra.mrb[0].mxu0 %v652
        %v730 = vpop.f32.mrb[0].mxu0
        %v731 = vadd.f32 0.0, %v730
        %v732 = vpop.f32.mrb[0].mxu0
        %v733 = vpop.f32.mrb[0].mxu0
        %v734 = vadd.f32 0.0, %v733
        %v735 = vpop.f32.mrb[0].mxu0
        %736 = vmatprep.mubr.bf16.mxu0 0
        %737 = vmatmul.mubr.bf16.gmra.mrb[0].mxu0 %v653
        %v738 = vpop.f32.mrb[0].mxu0
        %v739 = vadd.f32 0.0, %v738
        %v740 = vpop.f32.mrb[0].mxu0
        %v741 = vpop.f32.mrb[0].mxu0
        %v742 = vadd.f32 0.0, %v741
        %v743 = vpop.f32.mrb[0].mxu0
        %744 = vmatprep.mubr.bf16.mxu0 0
        %745 = vmatmul.mubr.bf16.gmra.mrb[0].mxu0 %v654
        %v746 = vpop.f32.mrb[0].mxu0
        %v747 = vadd.f32 0.0, %v746
        %v748 = vpop.f32.mrb[0].mxu0
        %v749 = vpop.f32.mrb[0].mxu0
        %v750 = vadd.f32 0.0, %v749
        %v751 = vpop.f32.mrb[0].mxu0
        %752 = vmatprep.mubr.bf16.mxu0 0
        %753 = vmatmul.mubr.bf16.gmra.mrb[0].mxu0 %v655
        %v754 = vpop.f32.mrb[0].mxu0
        %v755 = vadd.f32 0.0, %v754
        %v756 = vpop.f32.mrb[0].mxu0
        %v757 = vpop.f32.mrb[0].mxu0
        %v758 = vadd.f32 0.0, %v757
        %v759 = vpop.f32.mrb[0].mxu0
        %760 = vdwg.mxu0
        %761 = vmatprep.subr.bf16.mxu0 0
        %762 = vmatpush1.bf16.msra.mxu0 %v552
        %763 = vmatprep.subr.bf16.mxu0 0
        %764 = vmatpush1.bf16.msra.mxu0 %v553
        %765 = vmatprep.subr.bf16.mxu0 0
        %766 = vmatpush1.bf16.msra.mxu0 %v554
        %767 = vmatprep.subr.bf16.mxu0 0
        %768 = vmatpush1.bf16.msra.mxu0 %v555
        %769 = vmatprep.subr.bf16.mxu0 0
        %770 = vmatpush1.bf16.msra.mxu0 %v556
        %771 = vmatprep.subr.bf16.mxu0 0
        %772 = vmatpush1.bf16.msra.mxu0 %v557
        %773 = vmatprep.subr.bf16.mxu0 0
        %774 = vmatpush1.bf16.msra.mxu0 %v558
        %775 = vmatprep.subr.bf16.mxu0 0
        %776 = vmatpush1.bf16.msra.mxu0 %v559
        %777 = vmatprep.subr.bf16.mxu0 0
        %778 = vmatpush1.bf16.msra.mxu0 0
        %779 = vmatprep.subr.bf16.mxu0 0
        %780 = vmatpush1.bf16.msra.mxu0 0
        %781 = vmatprep.subr.bf16.mxu0 0
        %782 = vmatpush1.bf16.msra.mxu0 0
        %783 = vmatprep.subr.bf16.mxu0 0
        %784 = vmatpush1.bf16.msra.mxu0 0
        %785 = vmatprep.subr.bf16.mxu0 0
        %786 = vmatpush1.bf16.msra.mxu0 0
        %787 = vmatprep.subr.bf16.mxu0 0
        %788 = vmatpush1.bf16.msra.mxu0 0
        %789 = vmatprep.subr.bf16.mxu0 0
        %790 = vmatpush1.bf16.msra.mxu0 0
        %791 = vmatprep.subr.bf16.mxu0 0
        %792 = vmatpush1.bf16.msra.mxu0 0
        %793 = vmatprep.mubr.bf16.mxu0 0
        %794 = vmatmul.mubr.bf16.gmra.mrb[0].mxu0 %v648
        %v795 = vpop.f32.mrb[0].mxu0
        %v796 = vadd.f32 %v699, %v795
        %v797 = vpop.f32.mrb[0].mxu0
        %v798 = vpop.f32.mrb[0].mxu0
        %v799 = vadd.f32 %v702, %v798
        %v800 = vpop.f32.mrb[0].mxu0
        %801 = vmatprep.mubr.bf16.mxu0 0
        %802 = vmatmul.mubr.bf16.gmra.mrb[0].mxu0 %v649
        %v803 = vpop.f32.mrb[0].mxu0
        %v804 = vadd.f32 %v707, %v803
        %v805 = vpop.f32.mrb[0].mxu0
        %v806 = vpop.f32.mrb[0].mxu0
        %v807 = vadd.f32 %v710, %v806
        %v808 = vpop.f32.mrb[0].mxu0
        %809 = vmatprep.mubr.bf16.mxu0 0
        %810 = vmatmul.mubr.bf16.gmra.mrb[0].mxu0 %v650
        %v811 = vpop.f32.mrb[0].mxu0
        %v812 = vadd.f32 %v715, %v811
        %v813 = vpop.f32.mrb[0].mxu0
        %v814 = vpop.f32.mrb[0].mxu0
        %v815 = vadd.f32 %v718, %v814
        %v816 = vpop.f32.mrb[0].mxu0
        %817 = vmatprep.mubr.bf16.mxu0 0
        %818 = vmatmul.mubr.bf16.gmra.mrb[0].mxu0 %v651
        %v819 = vpop.f32.mrb[0].mxu0
        %v820 = vadd.f32 %v723, %v819
        %v821 = vpop.f32.mrb[0].mxu0
        %v822 = vpop.f32.mrb[0].mxu0
        %v823 = vadd.f32 %v726, %v822
        %v824 = vpop.f32.mrb[0].mxu0
        %825 = vmatprep.mubr.bf16.mxu0 0
        %826 = vmatmul.mubr.bf16.gmra.mrb[0].mxu0 %v652
        %v827 = vpop.f32.mrb[0].mxu0
        %v828 = vadd.f32 %v731, %v827
        %v829 = vpop.f32.mrb[0].mxu0
        %v830 = vpop.f32.mrb[0].mxu0
        %v831 = vadd.f32 %v734, %v830
        %v832 = vpop.f32.mrb[0].mxu0
        %833 = vmatprep.mubr.bf16.mxu0 0
        %834 = vmatmul.mubr.bf16.gmra.mrb[0].mxu0 %v653
        %v835 = vpop.f32.mrb[0].mxu0
        %v836 = vadd.f32 %v739, %v835
        %v837 = vpop.f32.mrb[0].mxu0
        %v838 = vpop.f32.mrb[0].mxu0
        %v839 = vadd.f32 %v742, %v838
        %v840 = vpop.f32.mrb[0].mxu0
        %841 = vmatprep.mubr.bf16.mxu0 0
        %842 = vmatmul.mubr.bf16.gmra.mrb[0].mxu0 %v654
        %v843 = vpop.f32.mrb[0].mxu0
        %v844 = vadd.f32 %v747, %v843
        %v845 = vpop.f32.mrb[0].mxu0
        %v846 = vpop.f32.mrb[0].mxu0
        %v847 = vadd.f32 %v750, %v846
        %v848 = vpop.f32.mrb[0].mxu0
        %849 = vmatprep.mubr.bf16.mxu0 0
        %850 = vmatmul.mubr.bf16.gmra.mrb[0].mxu0 %v655
        %v851 = vpop.f32.mrb[0].mxu0
        %v852 = vadd.f32 %v755, %v851
        %v853 = vpop.f32.mrb[0].mxu0
        %v854 = vpop.f32.mrb[0].mxu0
        %v855 = vadd.f32 %v758, %v854
        %v856 = vpop.f32.mrb[0].mxu0
        %857 = vdwg.mxu0
        %v858 = vld [vmem:[%s416] sm:$0xff]
        %v859 = vld [vmem:[%s416 + $0x8] sm:$0xff]
        %v860 = vld [vmem:[%s416 + $0x10] sm:$0xff]
        %v861 = vld [vmem:[%s416 + $0x18] sm:$0xff]
        %v862 = vld [vmem:[%s416 + $0x20] sm:$0xff]
        %v863 = vld [vmem:[%s416 + $0x28] sm:$0xff]
        %v864 = vld [vmem:[%s416 + $0x30] sm:$0xff]
        %v865 = vld [vmem:[%s416 + $0x38] sm:$0xff]
        %v866 = vld [vmem:[%s416 + $0x40] sm:$0xff]
        %v867 = vld [vmem:[%s416 + $0x48] sm:$0xff]
        %v868 = vld [vmem:[%s416 + $0x50] sm:$0xff]
        %v869 = vld [vmem:[%s416 + $0x58] sm:$0xff]
        %v870 = vld [vmem:[%s416 + $0x60] sm:$0xff]
        %v871 = vld [vmem:[%s416 + $0x68] sm:$0xff]
        %v872 = vld [vmem:[%s416 + $0x70] sm:$0xff]
        %v873 = vld [vmem:[%s416 + $0x78] sm:$0xff]
        %v874 = vadd.f32 %v796, %v858
        %v875 = vadd.f32 %v799, %v859
        %v876 = vadd.f32 %v804, %v860
        %v877 = vadd.f32 %v807, %v861
        %v878 = vadd.f32 %v812, %v862
        %v879 = vadd.f32 %v815, %v863
        %v880 = vadd.f32 %v820, %v864
        %v881 = vadd.f32 %v823, %v865
        %v882 = vadd.f32 %v828, %v866
        %v883 = vadd.f32 %v831, %v867
        %v884 = vadd.f32 %v836, %v868
        %v885 = vadd.f32 %v839, %v869
        %v886 = vadd.f32 %v844, %v870
        %v887 = vadd.f32 %v847, %v871
        %v888 = vadd.f32 %v852, %v872
        %v889 = vadd.f32 %v855, %v873
        %v890 = vld [vmem:[%s425] sm:$0xff]
        %v891 = vld [vmem:[%s425 + $0x8] sm:$0xff]
        %v892 = vld [vmem:[%s425 + $0x10] sm:$0xff]
        %v893 = vld [vmem:[%s425 + $0x18] sm:$0xff]
        %v894 = vld [vmem:[%s425 + $0x20] sm:$0xff]
        %v895 = vld [vmem:[%s425 + $0x28] sm:$0xff]
        %v896 = vld [vmem:[%s425 + $0x30] sm:$0xff]
        %v897 = vld [vmem:[%s425 + $0x38] sm:$0xff]
        %v898 = vld [vmem:[%s425 + $0x40] sm:$0xff]
        %v899 = vld [vmem:[%s425 + $0x48] sm:$0xff]
        %v900 = vld [vmem:[%s425 + $0x50] sm:$0xff]
        %v901 = vld [vmem:[%s425 + $0x58] sm:$0xff]
        %v902 = vld [vmem:[%s425 + $0x60] sm:$0xff]
        %v903 = vld [vmem:[%s425 + $0x68] sm:$0xff]
        %v904 = vld [vmem:[%s425 + $0x70] sm:$0xff]
        %v905 = vld [vmem:[%s425 + $0x78] sm:$0xff]
        %v906 = vld [vmem:[%s488] sm:$0x1]
        %v908 = vlaneseq
        %v909 = vshrl.u32 %v908, 7
        %v910 = vsub.s32 0, %v909
        %v911 = vrot.slane %v906, %v910
        %913 = vmatprep.subr.mxu0 0.0
        %914 = vmatpush1.msra.mxu0 %v890
        %915 = vmatprep.subr.mxu0 0.0
        %916 = vmatpush1.msra.mxu0 %v891
        %917 = vmatprep.subr.mxu0 0.0
        %918 = vmatpush1.msra.mxu0 %v892
        %919 = vmatprep.subr.mxu0 0.0
        %920 = vmatpush1.msra.mxu0 %v893
        %921 = vmatprep.subr.mxu0 0.0
        %922 = vmatpush1.msra.mxu0 %v894
        %923 = vmatprep.subr.mxu0 0.0
        %924 = vmatpush1.msra.mxu0 %v895
        %925 = vmatprep.subr.mxu0 0.0
        %926 = vmatpush1.msra.mxu0 %v896
        %927 = vmatprep.subr.mxu0 0.0
        %928 = vmatpush1.msra.mxu0 %v897
        %929 = vmatprep.subr.mxu0 0.0
        %930 = vmatpush1.msra.mxu0 %v898
        %931 = vmatprep.subr.mxu0 0.0
        %932 = vmatpush1.msra.mxu0 %v899
        %933 = vmatprep.subr.mxu0 0.0
        %934 = vmatpush1.msra.mxu0 %v900
        %935 = vmatprep.subr.mxu0 0.0
        %936 = vmatpush1.msra.mxu0 %v901
        %937 = vmatprep.subr.mxu0 0.0
        %938 = vmatpush1.msra.mxu0 %v902
        %939 = vmatprep.subr.mxu0 0.0
        %940 = vmatpush1.msra.mxu0 %v903
        %941 = vmatprep.subr.mxu0 0.0
        %942 = vmatpush1.msra.mxu0 %v904
        %943 = vmatprep.subr.mxu0 0.0
        %944 = vmatpush1.msra.mxu0 %v905
        %945 = vmatprep.subr.mxu0 0.0
        %946 = vmatpush1.msra.mxu0 0.0
        %947 = vmatprep.subr.mxu0 0.0
        %948 = vmatpush1.msra.mxu0 0.0
        %949 = vmatprep.subr.mxu0 0.0
        %950 = vmatpush1.msra.mxu0 0.0
        %951 = vmatprep.subr.mxu0 0.0
        %952 = vmatpush1.msra.mxu0 0.0
        %953 = vmatprep.subr.mxu0 0.0
        %954 = vmatpush1.msra.mxu0 0.0
        %955 = vmatprep.subr.mxu0 0.0
        %956 = vmatpush1.msra.mxu0 0.0
        %957 = vmatprep.subr.mxu0 0.0
        %958 = vmatpush1.msra.mxu0 0.0
        %959 = vmatprep.subr.mxu0 0.0
        %960 = vmatpush1.msra.mxu0 0.0
        %961 = vmatprep.subr.mxu0 0.0
        %962 = vmatpush1.msra.mxu0 0.0
        %963 = vmatprep.subr.mxu0 0.0
        %964 = vmatpush1.msra.mxu0 0.0
        %965 = vmatprep.subr.mxu0 0.0
        %966 = vmatpush1.msra.mxu0 0.0
        %967 = vmatprep.subr.mxu0 0.0
        %968 = vmatpush1.msra.mxu0 0.0
        %969 = vmatprep.subr.mxu0 0.0
        %970 = vmatpush1.msra.mxu0 0.0
        %971 = vmatprep.subr.mxu0 0.0
        %972 = vmatpush1.msra.mxu0 0.0
        %973 = vmatprep.subr.mxu0 0.0
        %974 = vmatpush1.msra.mxu0 0.0
        %975 = vmatprep.subr.mxu0 0.0
        %976 = vmatpush1.msra.mxu0 0.0
        %977 = vmatprep.mubr.f32.mxu0 0.0
        %978 = vmatmul.mubr.f32.gmra.mrb[0].mxu0 %v874
        %v979 = vpop.f32.mrb[0].mxu0
        %v980 = vadd.f32 %v911, %v979
        %v981 = vpop.f32.mrb[0].mxu0
        %982 = vmatprep.mubr.f32.mxu0 0.0
        %983 = vmatmul.mubr.f32.gmra.mrb[0].mxu0 %v875
        %v984 = vpop.f32.mrb[0].mxu0
        %v985 = vadd.f32 %v911, %v984
        %v986 = vpop.f32.mrb[0].mxu0
        %987 = vmatprep.mubr.f32.mxu0 0.0
        %988 = vmatmul.mubr.f32.gmra.mrb[0].mxu0 %v876
        %v989 = vpop.f32.mrb[0].mxu0
        %v990 = vadd.f32 %v911, %v989
        %v991 = vpop.f32.mrb[0].mxu0
        %992 = vmatprep.mubr.f32.mxu0 0.0
        %993 = vmatmul.mubr.f32.gmra.mrb[0].mxu0 %v877
        %v994 = vpop.f32.mrb[0].mxu0
        %v995 = vadd.f32 %v911, %v994
        %v996 = vpop.f32.mrb[0].mxu0
        %997 = vmatprep.mubr.f32.mxu0 0.0
        %998 = vmatmul.mubr.f32.gmra.mrb[0].mxu0 %v878
        %v999 = vpop.f32.mrb[0].mxu0
        %v1000 = vadd.f32 %v911, %v999
        %v1001 = vpop.f32.mrb[0].mxu0
        %1002 = vmatprep.mubr.f32.mxu0 0.0
        %1003 = vmatmul.mubr.f32.gmra.mrb[0].mxu0 %v879
        %v1004 = vpop.f32.mrb[0].mxu0
        %v1005 = vadd.f32 %v911, %v1004
        %v1006 = vpop.f32.mrb[0].mxu0
        %1007 = vmatprep.mubr.f32.mxu0 0.0
        %1008 = vmatmul.mubr.f32.gmra.mrb[0].mxu0 %v880
        %v1009 = vpop.f32.mrb[0].mxu0
        %v1010 = vadd.f32 %v911, %v1009
        %v1011 = vpop.f32.mrb[0].mxu0
        %1012 = vmatprep.mubr.f32.mxu0 0.0
        %1013 = vmatmul.mubr.f32.gmra.mrb[0].mxu0 %v881
        %v1014 = vpop.f32.mrb[0].mxu0
        %v1015 = vadd.f32 %v911, %v1014
        %v1016 = vpop.f32.mrb[0].mxu0
        %1017 = vmatprep.mubr.f32.mxu0 0.0
        %1018 = vmatmul.mubr.f32.gmra.mrb[0].mxu0 %v882
        %v1019 = vpop.f32.mrb[0].mxu0
        %v1020 = vadd.f32 %v911, %v1019
        %v1021 = vpop.f32.mrb[0].mxu0
        %1022 = vmatprep.mubr.f32.mxu0 0.0
        %1023 = vmatmul.mubr.f32.gmra.mrb[0].mxu0 %v883
        %v1024 = vpop.f32.mrb[0].mxu0
        %v1025 = vadd.f32 %v911, %v1024
        %v1026 = vpop.f32.mrb[0].mxu0
        %1027 = vmatprep.mubr.f32.mxu0 0.0
        %1028 = vmatmul.mubr.f32.gmra.mrb[0].mxu0 %v884
        %v1029 = vpop.f32.mrb[0].mxu0
        %v1030 = vadd.f32 %v911, %v1029
        %v1031 = vpop.f32.mrb[0].mxu0
        %1032 = vmatprep.mubr.f32.mxu0 0.0
        %1033 = vmatmul.mubr.f32.gmra.mrb[0].mxu0 %v885
        %v1034 = vpop.f32.mrb[0].mxu0
        %v1035 = vadd.f32 %v911, %v1034
        %v1036 = vpop.f32.mrb[0].mxu0
        %1037 = vmatprep.mubr.f32.mxu0 0.0
        %1038 = vmatmul.mubr.f32.gmra.mrb[0].mxu0 %v886
        %v1039 = vpop.f32.mrb[0].mxu0
        %v1040 = vadd.f32 %v911, %v1039
        %v1041 = vpop.f32.mrb[0].mxu0
        %1042 = vmatprep.mubr.f32.mxu0 0.0
        %1043 = vmatmul.mubr.f32.gmra.mrb[0].mxu0 %v887
        %v1044 = vpop.f32.mrb[0].mxu0
        %v1045 = vadd.f32 %v911, %v1044
        %v1046 = vpop.f32.mrb[0].mxu0
        %1047 = vmatprep.mubr.f32.mxu0 0.0
        %1048 = vmatmul.mubr.f32.gmra.mrb[0].mxu0 %v888
        %v1049 = vpop.f32.mrb[0].mxu0
        %v1050 = vadd.f32 %v911, %v1049
        %v1051 = vpop.f32.mrb[0].mxu0
        %1052 = vmatprep.mubr.f32.mxu0 0.0
        %1053 = vmatmul.mubr.f32.gmra.mrb[0].mxu0 %v889
        %v1054 = vpop.f32.mrb[0].mxu0
        %v1055 = vadd.f32 %v911, %v1054
        %v1056 = vpop.f32.mrb[0].mxu0
        %1057 = vdwg.mxu0
        %v1058 = vmax.f32 %v980, 0.0
        %v1059 = vmax.f32 %v985, 0.0
        %v1060 = vmax.f32 %v990, 0.0
        %v1061 = vmax.f32 %v995, 0.0
        %v1062 = vmax.f32 %v1000, 0.0
        %v1063 = vmax.f32 %v1005, 0.0
        %v1064 = vmax.f32 %v1010, 0.0
        %v1065 = vmax.f32 %v1015, 0.0
        %v1066 = vmax.f32 %v1020, 0.0
        %v1067 = vmax.f32 %v1025, 0.0
        %v1068 = vmax.f32 %v1030, 0.0
        %v1069 = vmax.f32 %v1035, 0.0
        %v1070 = vmax.f32 %v1040, 0.0
        %v1071 = vmax.f32 %v1045, 0.0
        %v1072 = vmax.f32 %v1050, 0.0
        %v1073 = vmax.f32 %v1055, 0.0
        %v1074 = vld [vmem:[%s434] sm:$0xff]
        %v1075 = vld [vmem:[%s434 + $0x8] sm:$0xff]
        %v1076 = vld [vmem:[%s434 + $0x10] sm:$0xff]
        %v1077 = vld [vmem:[%s434 + $0x18] sm:$0xff]
        %v1078 = vld [vmem:[%s434 + $0x20] sm:$0xff]
        %v1079 = vld [vmem:[%s434 + $0x28] sm:$0xff]
        %v1080 = vld [vmem:[%s434 + $0x30] sm:$0xff]
        %v1081 = vld [vmem:[%s434 + $0x38] sm:$0xff]
        %v1082 = vld [vmem:[%s434 + $0x40] sm:$0xff]
        %v1083 = vld [vmem:[%s434 + $0x48] sm:$0xff]
        %v1084 = vld [vmem:[%s434 + $0x50] sm:$0xff]
        %v1085 = vld [vmem:[%s434 + $0x58] sm:$0xff]
        %v1086 = vld [vmem:[%s434 + $0x60] sm:$0xff]
        %v1087 = vld [vmem:[%s434 + $0x68] sm:$0xff]
        %v1088 = vld [vmem:[%s434 + $0x70] sm:$0xff]
        %v1089 = vld [vmem:[%s434 + $0x78] sm:$0xff]
        %v1090 = vld [vmem:[%s491] sm:$0x1]
        %v1092 = vlaneseq
        %v1093 = vshrl.u32 %v1092, 7
        %v1094 = vsub.s32 0, %v1093
        %v1095 = vrot.slane %v1090, %v1094
        %1097 = vmatprep.subr.mxu0 0.0
        %1098 = vmatpush1.msra.mxu0 %v1074
        %1099 = vmatprep.subr.mxu0 0.0
        %1100 = vmatpush1.msra.mxu0 %v1075
        %1101 = vmatprep.subr.mxu0 0.0
        %1102 = vmatpush1.msra.mxu0 %v1076
        %1103 = vmatprep.subr.mxu0 0.0
        %1104 = vmatpush1.msra.mxu0 %v1077
        %1105 = vmatprep.subr.mxu0 0.0
        %1106 = vmatpush1.msra.mxu0 %v1078
        %1107 = vmatprep.subr.mxu0 0.0
        %1108 = vmatpush1.msra.mxu0 %v1079
        %1109 = vmatprep.subr.mxu0 0.0
        %1110 = vmatpush1.msra.mxu0 %v1080
        %1111 = vmatprep.subr.mxu0 0.0
        %1112 = vmatpush1.msra.mxu0 %v1081
        %1113 = vmatprep.subr.mxu0 0.0
        %1114 = vmatpush1.msra.mxu0 %v1082
        %1115 = vmatprep.subr.mxu0 0.0
        %1116 = vmatpush1.msra.mxu0 %v1083
        %1117 = vmatprep.subr.mxu0 0.0
        %1118 = vmatpush1.msra.mxu0 %v1084
        %1119 = vmatprep.subr.mxu0 0.0
        %1120 = vmatpush1.msra.mxu0 %v1085
        %1121 = vmatprep.subr.mxu0 0.0
        %1122 = vmatpush1.msra.mxu0 %v1086
        %1123 = vmatprep.subr.mxu0 0.0
        %1124 = vmatpush1.msra.mxu0 %v1087
        %1125 = vmatprep.subr.mxu0 0.0
        %1126 = vmatpush1.msra.mxu0 %v1088
        %1127 = vmatprep.subr.mxu0 0.0
        %1128 = vmatpush1.msra.mxu0 %v1089
        %1129 = vmatprep.subr.mxu0 0.0
        %1130 = vmatpush1.msra.mxu0 0.0
        %1131 = vmatprep.subr.mxu0 0.0
        %1132 = vmatpush1.msra.mxu0 0.0
        %1133 = vmatprep.subr.mxu0 0.0
        %1134 = vmatpush1.msra.mxu0 0.0
        %1135 = vmatprep.subr.mxu0 0.0
        %1136 = vmatpush1.msra.mxu0 0.0
        %1137 = vmatprep.subr.mxu0 0.0
        %1138 = vmatpush1.msra.mxu0 0.0
        %1139 = vmatprep.subr.mxu0 0.0
        %1140 = vmatpush1.msra.mxu0 0.0
        %1141 = vmatprep.subr.mxu0 0.0
        %1142 = vmatpush1.msra.mxu0 0.0
        %1143 = vmatprep.subr.mxu0 0.0
        %1144 = vmatpush1.msra.mxu0 0.0
        %1145 = vmatprep.subr.mxu0 0.0
        %1146 = vmatpush1.msra.mxu0 0.0
        %1147 = vmatprep.subr.mxu0 0.0
        %1148 = vmatpush1.msra.mxu0 0.0
        %1149 = vmatprep.subr.mxu0 0.0
        %1150 = vmatpush1.msra.mxu0 0.0
        %1151 = vmatprep.subr.mxu0 0.0
        %1152 = vmatpush1.msra.mxu0 0.0
        %1153 = vmatprep.subr.mxu0 0.0
        %1154 = vmatpush1.msra.mxu0 0.0
        %1155 = vmatprep.subr.mxu0 0.0
        %1156 = vmatpush1.msra.mxu0 0.0
        %1157 = vmatprep.subr.mxu0 0.0
        %1158 = vmatpush1.msra.mxu0 0.0
        %1159 = vmatprep.subr.mxu0 0.0
        %1160 = vmatpush1.msra.mxu0 0.0
        %1161 = vmatprep.mubr.f32.mxu0 0.0
        %1162 = vmatmul.mubr.f32.gmra.mrb[0].mxu0 %v1058
        %v1163 = vpop.f32.mrb[0].mxu0
        %v1164 = vadd.f32 %v1095, %v1163
        %v1165 = vpop.f32.mrb[0].mxu0
        %1166 = vmatprep.mubr.f32.mxu0 0.0
        %1167 = vmatmul.mubr.f32.gmra.mrb[0].mxu0 %v1059
        %v1168 = vpop.f32.mrb[0].mxu0
        %v1169 = vadd.f32 %v1095, %v1168
        %v1170 = vpop.f32.mrb[0].mxu0
        %1171 = vmatprep.mubr.f32.mxu0 0.0
        %1172 = vmatmul.mubr.f32.gmra.mrb[0].mxu0 %v1060
        %v1173 = vpop.f32.mrb[0].mxu0
        %v1174 = vadd.f32 %v1095, %v1173
        %v1175 = vpop.f32.mrb[0].mxu0
        %1176 = vmatprep.mubr.f32.mxu0 0.0
        %1177 = vmatmul.mubr.f32.gmra.mrb[0].mxu0 %v1061
        %v1178 = vpop.f32.mrb[0].mxu0
        %v1179 = vadd.f32 %v1095, %v1178
        %v1180 = vpop.f32.mrb[0].mxu0
        %1181 = vmatprep.mubr.f32.mxu0 0.0
        %1182 = vmatmul.mubr.f32.gmra.mrb[0].mxu0 %v1062
        %v1183 = vpop.f32.mrb[0].mxu0
        %v1184 = vadd.f32 %v1095, %v1183
        %v1185 = vpop.f32.mrb[0].mxu0
        %1186 = vmatprep.mubr.f32.mxu0 0.0
        %1187 = vmatmul.mubr.f32.gmra.mrb[0].mxu0 %v1063
        %v1188 = vpop.f32.mrb[0].mxu0
        %v1189 = vadd.f32 %v1095, %v1188
        %v1190 = vpop.f32.mrb[0].mxu0
        %1191 = vmatprep.mubr.f32.mxu0 0.0
        %1192 = vmatmul.mubr.f32.gmra.mrb[0].mxu0 %v1064
        %v1193 = vpop.f32.mrb[0].mxu0
        %v1194 = vadd.f32 %v1095, %v1193
        %v1195 = vpop.f32.mrb[0].mxu0
        %1196 = vmatprep.mubr.f32.mxu0 0.0
        %1197 = vmatmul.mubr.f32.gmra.mrb[0].mxu0 %v1065
        %v1198 = vpop.f32.mrb[0].mxu0
        %v1199 = vadd.f32 %v1095, %v1198
        %v1200 = vpop.f32.mrb[0].mxu0
        %1201 = vmatprep.mubr.f32.mxu0 0.0
        %1202 = vmatmul.mubr.f32.gmra.mrb[0].mxu0 %v1066
        %v1203 = vpop.f32.mrb[0].mxu0
        %v1204 = vadd.f32 %v1095, %v1203
        %v1205 = vpop.f32.mrb[0].mxu0
        %1206 = vmatprep.mubr.f32.mxu0 0.0
        %1207 = vmatmul.mubr.f32.gmra.mrb[0].mxu0 %v1067
        %v1208 = vpop.f32.mrb[0].mxu0
        %v1209 = vadd.f32 %v1095, %v1208
        %v1210 = vpop.f32.mrb[0].mxu0
        %1211 = vmatprep.mubr.f32.mxu0 0.0
        %1212 = vmatmul.mubr.f32.gmra.mrb[0].mxu0 %v1068
        %v1213 = vpop.f32.mrb[0].mxu0
        %v1214 = vadd.f32 %v1095, %v1213
        %v1215 = vpop.f32.mrb[0].mxu0
        %1216 = vmatprep.mubr.f32.mxu0 0.0
        %1217 = vmatmul.mubr.f32.gmra.mrb[0].mxu0 %v1069
        %v1218 = vpop.f32.mrb[0].mxu0
        %v1219 = vadd.f32 %v1095, %v1218
        %v1220 = vpop.f32.mrb[0].mxu0
        %1221 = vmatprep.mubr.f32.mxu0 0.0
        %1222 = vmatmul.mubr.f32.gmra.mrb[0].mxu0 %v1070
        %v1223 = vpop.f32.mrb[0].mxu0
        %v1224 = vadd.f32 %v1095, %v1223
        %v1225 = vpop.f32.mrb[0].mxu0
        %1226 = vmatprep.mubr.f32.mxu0 0.0
        %1227 = vmatmul.mubr.f32.gmra.mrb[0].mxu0 %v1071
        %v1228 = vpop.f32.mrb[0].mxu0
        %v1229 = vadd.f32 %v1095, %v1228
        %v1230 = vpop.f32.mrb[0].mxu0
        %1231 = vmatprep.mubr.f32.mxu0 0.0
        %1232 = vmatmul.mubr.f32.gmra.mrb[0].mxu0 %v1072
        %v1233 = vpop.f32.mrb[0].mxu0
        %v1234 = vadd.f32 %v1095, %v1233
        %v1235 = vpop.f32.mrb[0].mxu0
        %1236 = vmatprep.mubr.f32.mxu0 0.0
        %1237 = vmatmul.mubr.f32.gmra.mrb[0].mxu0 %v1073
        %v1238 = vpop.f32.mrb[0].mxu0
        %v1239 = vadd.f32 %v1095, %v1238
        %v1240 = vpop.f32.mrb[0].mxu0
        %1241 = vdwg.mxu0
        %s1242 = sld [smem:[#allocation3]]
        %v1243 = vlaneseq
        %v1244 = vshrl.u32 %v1243, 7
        %v1245 = vadd.s32 %v1244, 8
        %v1246 = vadd.s32 %v1244, 16
        %v1247 = vadd.s32 %v1244, 24
        %v1248 = vadd.s32 %v1244, 32
        %v1249 = vadd.s32 %v1244, 40
        %v1250 = vadd.s32 %v1244, 48
        %v1251 = vadd.s32 %v1244, 56
        %v1252 = vadd.s32 %v1244, 64
        %v1253 = vadd.s32 %v1244, 72
        %v1254 = vadd.s32 %v1244, 80
        %v1255 = vadd.s32 %v1244, 88
        %v1256 = vadd.s32 %v1244, 96
        %v1257 = vadd.s32 %v1244, 104
        %v1258 = vadd.s32 %v1244, 112
        %v1259 = vadd.s32 %v1244, 120
        %v1260 = vstv %s1242
        %vm1261 = vcmp.lt.s32.totalorder %v1244, %v1260
        %vm1262 = vcmp.lt.s32.totalorder %v1245, %v1260
        %vm1263 = vcmp.lt.s32.totalorder %v1246, %v1260
        %vm1264 = vcmp.lt.s32.totalorder %v1247, %v1260
        %vm1265 = vcmp.lt.s32.totalorder %v1248, %v1260
        %vm1266 = vcmp.lt.s32.totalorder %v1249, %v1260
        %vm1267 = vcmp.lt.s32.totalorder %v1250, %v1260
        %vm1268 = vcmp.lt.s32.totalorder %v1251, %v1260
        %vm1269 = vcmp.lt.s32.totalorder %v1252, %v1260
        %vm1270 = vcmp.lt.s32.totalorder %v1253, %v1260
        %vm1271 = vcmp.lt.s32.totalorder %v1254, %v1260
        %vm1272 = vcmp.lt.s32.totalorder %v1255, %v1260
        %vm1273 = vcmp.lt.s32.totalorder %v1256, %v1260
        %vm1274 = vcmp.lt.s32.totalorder %v1257, %v1260
        %vm1275 = vcmp.lt.s32.totalorder %v1258, %v1260
        %vm1276 = vcmp.lt.s32.totalorder %v1259, %v1260
        %v1277 = vsel %vm1261, 1, 0
        %v1278 = vsel %vm1262, 1, 0
        %v1279 = vsel %vm1263, 1, 0
        %v1280 = vsel %vm1264, 1, 0
        %v1281 = vsel %vm1265, 1, 0
        %v1282 = vsel %vm1266, 1, 0
        %v1283 = vsel %vm1267, 1, 0
        %v1284 = vsel %vm1268, 1, 0
        %v1285 = vsel %vm1269, 1, 0
        %v1286 = vsel %vm1270, 1, 0
        %v1287 = vsel %vm1271, 1, 0
        %v1288 = vsel %vm1272, 1, 0
        %v1289 = vsel %vm1273, 1, 0
        %v1290 = vsel %vm1274, 1, 0
        %v1291 = vsel %vm1275, 1, 0
        %v1292 = vsel %vm1276, 1, 0
        %v1293 = vcvt.s32.f32 %v1277
        %v1294 = vcvt.s32.f32 %v1278
        %v1295 = vcvt.s32.f32 %v1279
        %v1296 = vcvt.s32.f32 %v1280
        %v1297 = vcvt.s32.f32 %v1281
        %v1298 = vcvt.s32.f32 %v1282
        %v1299 = vcvt.s32.f32 %v1283
        %v1300 = vcvt.s32.f32 %v1284
        %v1301 = vcvt.s32.f32 %v1285
        %v1302 = vcvt.s32.f32 %v1286
        %v1303 = vcvt.s32.f32 %v1287
        %v1304 = vcvt.s32.f32 %v1288
        %v1305 = vcvt.s32.f32 %v1289
        %v1306 = vcvt.s32.f32 %v1290
        %v1307 = vcvt.s32.f32 %v1291
        %v1308 = vcvt.s32.f32 %v1292
        %s1309 = scvt.s32.f32 %s1242
        %v1310 = vstv %s1309
        %v1311 = vrcp.pop %v1310
        %s1312 = vtos %v1311
        %v1313 = vmul.f32 %v1164, %v1293
        %v1314 = vmul.f32 %v1169, %v1294
        %v1315 = vmul.f32 %v1174, %v1295
        %v1316 = vmul.f32 %v1179, %v1296
        %v1317 = vmul.f32 %v1184, %v1297
        %v1318 = vmul.f32 %v1189, %v1298
        %v1319 = vmul.f32 %v1194, %v1299
        %v1320 = vmul.f32 %v1199, %v1300
        %v1321 = vmul.f32 %v1204, %v1301
        %v1322 = vmul.f32 %v1209, %v1302
        %v1323 = vmul.f32 %v1214, %v1303
        %v1324 = vmul.f32 %v1219, %v1304
        %v1325 = vmul.f32 %v1224, %v1305
        %v1326 = vmul.f32 %v1229, %v1306
        %v1327 = vmul.f32 %v1234, %v1307
        %v1328 = vmul.f32 %v1239, %v1308
        %v1329 = vadd.f32 %v1313, %v1314
        %v1330 = vadd.f32 %v1329, %v1315
        %v1331 = vadd.f32 %v1330, %v1316
        %v1332 = vadd.f32 %v1331, %v1317
        %v1333 = vadd.f32 %v1332, %v1318
        %v1334 = vadd.f32 %v1333, %v1319
        %v1335 = vadd.f32 %v1334, %v1320
        %v1336 = vadd.f32 %v1335, %v1321
        %v1337 = vadd.f32 %v1336, %v1322
        %v1338 = vadd.f32 %v1337, %v1323
        %v1339 = vadd.f32 %v1338, %v1324
        %v1340 = vadd.f32 %v1339, %v1325
        %v1341 = vadd.f32 %v1340, %v1326
        %v1342 = vadd.f32 %v1341, %v1327
        %v1343 = vadd.f32 %v1342, %v1328
        %v1344 = vrot.slane %v1343, 4
        %v1345 = vadd.f32 %v1343, %v1344
        %v1346 = vrot.slane %v1345, 2
        %v1347 = vadd.f32 %v1345, %v1346
        %v1348 = vrot.slane %v1347, 1
        %v1349 = vadd.f32 %v1347, %v1348
        %v1350 = vstv %s1312
        %v1351 = vmul.f32 %v1349, %v1350
        %v1352 = vsub.f32 %v1164, %v1351
        %v1353 = vsub.f32 %v1169, %v1351
        %v1354 = vsub.f32 %v1174, %v1351
        %v1355 = vsub.f32 %v1179, %v1351
        %v1356 = vsub.f32 %v1184, %v1351
        %v1357 = vsub.f32 %v1189, %v1351
        %v1358 = vsub.f32 %v1194, %v1351
        %v1359 = vsub.f32 %v1199, %v1351
        %v1360 = vsub.f32 %v1204, %v1351
        %v1361 = vsub.f32 %v1209, %v1351
        %v1362 = vsub.f32 %v1214, %v1351
        %v1363 = vsub.f32 %v1219, %v1351
        %v1364 = vsub.f32 %v1224, %v1351
        %v1365 = vsub.f32 %v1229, %v1351
        %v1366 = vsub.f32 %v1234, %v1351
        %v1367 = vsub.f32 %v1239, %v1351
        %v1368 = vmul.f32 %v1352, %v1293
        %v1369 = vmul.f32 %v1353, %v1294
        %v1370 = vmul.f32 %v1354, %v1295
        %v1371 = vmul.f32 %v1355, %v1296
        %v1372 = vmul.f32 %v1356, %v1297
        %v1373 = vmul.f32 %v1357, %v1298
        %v1374 = vmul.f32 %v1358, %v1299
        %v1375 = vmul.f32 %v1359, %v1300
        %v1376 = vmul.f32 %v1360, %v1301
        %v1377 = vmul.f32 %v1361, %v1302
        %v1378 = vmul.f32 %v1362, %v1303
        %v1379 = vmul.f32 %v1363, %v1304
        %v1380 = vmul.f32 %v1364, %v1305
        %v1381 = vmul.f32 %v1365, %v1306
        %v1382 = vmul.f32 %v1366, %v1307
        %v1383 = vmul.f32 %v1367, %v1308
        %v1384 = vmul.f32 %v1368, %v1368
        %v1385 = vmul.f32 %v1369, %v1369
        %v1386 = vmul.f32 %v1370, %v1370
        %v1387 = vmul.f32 %v1371, %v1371
        %v1388 = vmul.f32 %v1372, %v1372
        %v1389 = vmul.f32 %v1373, %v1373
        %v1390 = vmul.f32 %v1374, %v1374
        %v1391 = vmul.f32 %v1375, %v1375
        %v1392 = vmul.f32 %v1376, %v1376
        %v1393 = vmul.f32 %v1377, %v1377
        %v1394 = vmul.f32 %v1378, %v1378
        %v1395 = vmul.f32 %v1379, %v1379
        %v1396 = vmul.f32 %v1380, %v1380
        %v1397 = vmul.f32 %v1381, %v1381
        %v1398 = vmul.f32 %v1382, %v1382
        %v1399 = vmul.f32 %v1383, %v1383
        %v1400 = vadd.f32 %v1384, %v1385
        %v1401 = vadd.f32 %v1400, %v1386
        %v1402 = vadd.f32 %v1401, %v1387
        %v1403 = vadd.f32 %v1402, %v1388
        %v1404 = vadd.f32 %v1403, %v1389
        %v1405 = vadd.f32 %v1404, %v1390
        %v1406 = vadd.f32 %v1405, %v1391
        %v1407 = vadd.f32 %v1406, %v1392
        %v1408 = vadd.f32 %v1407, %v1393
        %v1409 = vadd.f32 %v1408, %v1394
        %v1410 = vadd.f32 %v1409, %v1395
        %v1411 = vadd.f32 %v1410, %v1396
        %v1412 = vadd.f32 %v1411, %v1397
        %v1413 = vadd.f32 %v1412, %v1398
        %v1414 = vadd.f32 %v1413, %v1399
        %v1415 = vrot.slane %v1414, 4
        %v1416 = vadd.f32 %v1414, %v1415
        %v1417 = vrot.slane %v1416, 2
        %v1418 = vadd.f32 %v1416, %v1417
        %v1419 = vrot.slane %v1418, 1
        %v1420 = vadd.f32 %v1418, %v1419
        %v1421 = vmul.f32 %v1420, %v1350
        %v1422 = vadd.f32 %v1421, 1e-05
        %v1423 = vrsqrt.pop %v1422
        %v1424 = vmul.f32 %v1368, %v1423
        %v1425 = vmul.f32 %v1369, %v1423
        %v1426 = vmul.f32 %v1370, %v1423
        %v1427 = vmul.f32 %v1371, %v1423
        %v1428 = vmul.f32 %v1372, %v1423
        %v1429 = vmul.f32 %v1373, %v1423
        %v1430 = vmul.f32 %v1374, %v1423
        %v1431 = vmul.f32 %v1375, %v1423
        %v1432 = vmul.f32 %v1376, %v1423
        %v1433 = vmul.f32 %v1377, %v1423
        %v1434 = vmul.f32 %v1378, %v1423
        %v1435 = vmul.f32 %v1379, %v1423
        %v1436 = vmul.f32 %v1380, %v1423
        %v1437 = vmul.f32 %v1381, %v1423
        %v1438 = vmul.f32 %v1382, %v1423
        %v1439 = vmul.f32 %v1383, %v1423
        %v1440 = vld [vmem:[%s494] sm:$0x1]
        %v1442 = vlaneseq
        %v1443 = vshrl.u32 %v1442, 7
        %v1444 = vsub.s32 0, %v1443
        %v1445 = vrot.slane %v1440, %v1444
        %v1447 = vmul.f32 %v1424, %v1445
        %v1448 = vmul.f32 %v1425, %v1445
        %v1449 = vmul.f32 %v1426, %v1445
        %v1450 = vmul.f32 %v1427, %v1445
        %v1451 = vmul.f32 %v1428, %v1445
        %v1452 = vmul.f32 %v1429, %v1445
        %v1453 = vmul.f32 %v1430, %v1445
        %v1454 = vmul.f32 %v1431, %v1445
        %v1455 = vmul.f32 %v1432, %v1445
        %v1456 = vmul.f32 %v1433, %v1445
        %v1457 = vmul.f32 %v1434, %v1445
        %v1458 = vmul.f32 %v1435, %v1445
        %v1459 = vmul.f32 %v1436, %v1445
        %v1460 = vmul.f32 %v1437, %v1445
        %v1461 = vmul.f32 %v1438, %v1445
        %v1462 = vmul.f32 %v1439, %v1445
        %v1463 = vld [vmem:[%s497] sm:$0x1]
        %v1465 = vlaneseq
        %v1466 = vshrl.u32 %v1465, 7
        %v1467 = vsub.s32 0, %v1466
        %v1468 = vrot.slane %v1463, %v1467
        %v1470 = vadd.f32 %v1447, %v1468
        %v1471 = vadd.f32 %v1448, %v1468
        %v1472 = vadd.f32 %v1449, %v1468
        %v1473 = vadd.f32 %v1450, %v1468
        %v1474 = vadd.f32 %v1451, %v1468
        %v1475 = vadd.f32 %v1452, %v1468
        %v1476 = vadd.f32 %v1453, %v1468
        %v1477 = vadd.f32 %v1454, %v1468
        %v1478 = vadd.f32 %v1455, %v1468
        %v1479 = vadd.f32 %v1456, %v1468
        %v1480 = vadd.f32 %v1457, %v1468
        %v1481 = vadd.f32 %v1458, %v1468
        %v1482 = vadd.f32 %v1459, %v1468
        %v1483 = vadd.f32 %v1460, %v1468
        %v1484 = vadd.f32 %v1461, %v1468
        %v1485 = vadd.f32 %v1462, %v1468
        %v1486 = vmax.f32 %v1470, 0.0
        %v1487 = vmax.f32 %v1471, 0.0
        %v1488 = vmax.f32 %v1472, 0.0
        %v1489 = vmax.f32 %v1473, 0.0
        %v1490 = vmax.f32 %v1474, 0.0
        %v1491 = vmax.f32 %v1475, 0.0
        %v1492 = vmax.f32 %v1476, 0.0
        %v1493 = vmax.f32 %v1477, 0.0
        %v1494 = vmax.f32 %v1478, 0.0
        %v1495 = vmax.f32 %v1479, 0.0
        %v1496 = vmax.f32 %v1480, 0.0
        %v1497 = vmax.f32 %v1481, 0.0
        %v1498 = vmax.f32 %v1482, 0.0
        %v1499 = vmax.f32 %v1483, 0.0
        %v1500 = vmax.f32 %v1484, 0.0
        %v1501 = vmax.f32 %v1485, 0.0
        %s1502 = scalar_select %p499, 1, 0
        %v1503 = vstv %s1502
        %vm1504 = vcmp.eq.s32.totalorder %v1503, 1
        %v1505 = vsel %vm1504, %v1470, %v1486
        %v1506 = vsel %vm1504, %v1471, %v1487
        %v1507 = vsel %vm1504, %v1472, %v1488
        %v1508 = vsel %vm1504, %v1473, %v1489
        %v1509 = vsel %vm1504, %v1474, %v1490
        %v1510 = vsel %vm1504, %v1475, %v1491
        %v1511 = vsel %vm1504, %v1476, %v1492
        %v1512 = vsel %vm1504, %v1477, %v1493
        %v1513 = vsel %vm1504, %v1478, %v1494
        %v1514 = vsel %vm1504, %v1479, %v1495
        %v1515 = vsel %vm1504, %v1480, %v1496
        %v1516 = vsel %vm1504, %v1481, %v1497
        %v1517 = vsel %vm1504, %v1482, %v1498
        %v1518 = vsel %vm1504, %v1483, %v1499
        %v1519 = vsel %vm1504, %v1484, %v1500
        %v1520 = vsel %vm1504, %v1485, %v1501
        %1521 = vst [vmem:[#allocation12] sm:$0xff] %v1505
        %1522 = vst [vmem:[#allocation12 + $0x8] sm:$0xff] %v1506
        %1523 = vst [vmem:[#allocation12 + $0x10] sm:$0xff] %v1507
        %1524 = vst [vmem:[#allocation12 + $0x18] sm:$0xff] %v1508
        %1525 = vst [vmem:[#allocation12 + $0x20] sm:$0xff] %v1509
        %1526 = vst [vmem:[#allocation12 + $0x28] sm:$0xff] %v1510
        %1527 = vst [vmem:[#allocation12 + $0x30] sm:$0xff] %v1511
        %1528 = vst [vmem:[#allocation12 + $0x38] sm:$0xff] %v1512
        %1529 = vst [vmem:[#allocation12 + $0x40] sm:$0xff] %v1513
        %1530 = vst [vmem:[#allocation12 + $0x48] sm:$0xff] %v1514
        %1531 = vst [vmem:[#allocation12 + $0x50] sm:$0xff] %v1515
        %1532 = vst [vmem:[#allocation12 + $0x58] sm:$0xff] %v1516
        %1533 = vst [vmem:[#allocation12 + $0x60] sm:$0xff] %v1517
        %1534 = vst [vmem:[#allocation12 + $0x68] sm:$0xff] %v1518
        %1535 = vst [vmem:[#allocation12 + $0x70] sm:$0xff] %v1519
        %1536 = vst [vmem:[#allocation12 + $0x78] sm:$0xff] %v1520
        // Predicated region
        $region81: #{tpu_custom_call.1} parent=55 // pred_check
          %p1537 = pneg %p262
        $region82: #{tpu_custom_call.1} parent=55 // pred_check_branch
          %1539 = sbr.rel (%p1537) target = $region84
        $region83: #{tpu_custom_call.1} parent=55 // pred_region
          %s1541 = ssub.s32 2048, 2048
          %1542 = vsyncadd [#allocation6], %s1541
          %s1543 = sshll.u32 [#allocation12], 4
          %s1544 = int_to_ptr.vmem [resolvable:$true] %s1543
          %1549 = dma.vmem_to_hbm [thread:$0]  %s1544, 2048, %s10, [#allocation6], 128, 128, 8
        $region84: #{tpu_custom_call.1} parent=55 // pred_fallthru
          _
        // Predicated region
        $region85: #{tpu_custom_call.1} parent=55 // pred_check
          %p1550 = pneg %p262
        $region86: #{tpu_custom_call.1} parent=55 // pred_check_branch
          %1552 = sbr.rel (%p1550) target = $region88
        $region87: #{tpu_custom_call.1} parent=55 // pred_region
          %1553 = dma.done [#allocation6], 2048
        $region88: #{tpu_custom_call.1} parent=55 // pred_fallthru
          _
      $region56: #{tpu_custom_call.1} parent=5 // pred_fallthru
        _
      %p1554 = scmp.le.s32.totalorder 2, %s20
      // Predicated region
      $region89: #{tpu_custom_call.1} parent=5 // pred_check
        %p1555 = pneg %p1554
      $region90: #{tpu_custom_call.1} parent=5 // pred_check_branch
        %1557 = sbr.rel (%p1555) target = $region92
      $region91: #{tpu_custom_call.1} parent=5 // pred_region
        %s1558 = ssub.s32 %s20, 2
      $region92: #{tpu_custom_call.1} parent=5 // pred_fallthru
        _
    $region6: #{tpu_custom_call.1} parent=1 // loop_footer
      %s24 = sadd.s32 1, %s20
    $region7: #{tpu_custom_call.1} parent=1 // loop_footer_branch
      %19 = sbr.rel target = $region3
    $region8: #{tpu_custom_call.1} parent=1 // loop_exit
      _
    %1559 = vsyncpa [#allocation5], 1
    %s1560 = scalar_lea.sflag [#allocation5], 1
    %1561 = vsyncpa %s1560, 1
    %1562 = vsyncpa [#allocation8], 1
    %1563 = vsyncpa [#allocation6], 1
    %s1564 = scalar_lea.sflag [#allocation6], 1
    %1565 = vsyncpa %s1564, 1

// kernel: tpu_custom_call.1
$region0: #{tpu_custom_call.1}
  #allocation0 [shape = 'u32[]', space=smem, size = 0x4, offset = 0x4, fixed_abs, tag = 'smem constant byte address 0x4 - core index']
  #allocation1 [shape = 'u32[144,128]{1,0:T(1,128)}', space=vmem, size = 0x12000, scoped, tag = 'internal scratch']
  #allocation2 [shape = 's32[1]{0}', space=sflag, size = 0x4, scoped, tag = 'scoped memory for tpu_custom_call.1']
  #allocation3 [shape = 's32[1]{0:T(128)S(6)}', space=smem, size = 0x200, scoped, tag = 'prefetched SMEM operand 0']
  %s0 = inlined_call_operand.<no memory space> [shape: s32[1], index: 0, kind: input, shape index: {}]
  %s1 = inlined_call_operand.hbm [shape: bf16[128,128], index: 1, kind: input, shape index: {}]
  %s2 = inlined_call_operand.hbm [shape: f32[128,128], index: 2, kind: input, shape index: {}]
  %s3 = inlined_call_operand.hbm [shape: f32[2,128,128], index: 3, kind: input, shape index: {}]
  %s4 = inlined_call_operand.hbm [shape: f32[2,128,128], index: 4, kind: input, shape index: {}]
  %s5 = inlined_call_operand.vmem [shape: f32[2,1,128], index: 5, kind: input, shape index: {}]
  %s6 = inlined_call_operand.hbm [shape: f32[2,128,128], index: 6, kind: input, shape index: {}]
  %s7 = inlined_call_operand.vmem [shape: f32[2,1,128], index: 7, kind: input, shape index: {}]
  %s8 = inlined_call_operand.vmem [shape: f32[2,1,128], index: 8, kind: input, shape index: {}]
  %s9 = inlined_call_operand.vmem [shape: f32[2,1,128], index: 9, kind: input, shape index: {}]
  %s10 = inlined_call_operand.hbm [shape: f32[128,128], index: 10, kind: output, shape index: {}]
  %s11 = sld [smem:[#allocation0]]
  $region93: #{tpu_custom_call.1} parent=0
    _
  %s13 = ssub.s32 1, %s11
  %s14 = scalar_select 0, %s13, %s11
  %15 = sst [smem:[#allocation3]] %s0
  $region1: #{tpu_custom_call.1} parent=0
    #allocation4 [shape = 'u8[32768]{0}', space=vmem, size = 0x8000, scoped, tag = 'input window, operand 1, single buffered']
    #allocation5 [shape = 's32[2]{0}', space=sflag, size = 0x8, scoped, tag = 'scoped memory for tpu_custom_call.1']
    #allocation6 [shape = 's32[2]{0}', space=sflag, size = 0x8, scoped, tag = 'scoped memory for tpu_custom_call.1']
    #allocation7 [shape = 'u8[65536]{0}', space=vmem, size = 0x10000, scoped, tag = 'input window, operand 2, single buffered']
    #allocation8 [shape = 's32[1]{0}', space=sflag, size = 0x4, scoped, tag = 'scoped memory for tpu_custom_call.1']
    #allocation9 [shape = 'u8[131072]{0}', space=vmem, size = 0x20000, scoped, tag = 'input window, operand 3']
    #allocation10 [shape = 'u8[131072]{0}', space=vmem, size = 0x20000, scoped, tag = 'input window, operand 4']
    #allocation11 [shape = 'u8[131072]{0}', space=vmem, size = 0x20000, scoped, tag = 'input window, operand 6']
    #allocation12 [shape = 'u8[65536]{0}', space=vmem, size = 0x10000, scoped, tag = 'output window, operand 0, single buffered']
    %16 = vsyncpa [#allocation5], 0
    %17 = vsyncpa [#allocation8], 0
    %18 = vsyncpa [#allocation6], 0
    loop: start=0, step=1, limit=4
    $region2: #{tpu_custom_call.1} parent=1 // loop_pre_header
      _
    $region3: #{tpu_custom_call.1} parent=1 // loop_header
      %s20 = sphi 0, %s24
      %p21 = scmp.ge.s32.totalorder %s20, 4
      %s28 = sphi 0, %s28
      %s30 = sphi 0, %s28
      %s31 = sphi 0, %s30
      %s45 = sphi 0, %s31
      %s49 = sphi 0, %s49
      %s51 = sphi 0, %s49
      %s52 = sphi 0, %s51
      %s66 = sphi 0, %s52
      %s72 = sphi 0, %s74
      %s75 = sphi 0, %s72
      %s76 = sphi 0, %s75
      %s92 = sphi 0, %s76
      %s98 = sphi 0, %s100
      %s101 = sphi 0, %s98
      %s102 = sphi 0, %s101
      %s118 = sphi 0, %s102
      %s124 = sphi 0, %s126
      %s127 = sphi 0, %s124
      %s128 = sphi 0, %s127
      %s144 = sphi 0, %s128
      %s150 = sphi 0, %s152
      %s153 = sphi 0, %s150
      %s154 = sphi 0, %s153
      %s170 = sphi 0, %s154
      %s176 = sphi 0, %s178
      %s179 = sphi 0, %s176
      %s180 = sphi 0, %s179
      %s196 = sphi 0, %s180
      %s202 = sphi 0, %s204
      %s205 = sphi 0, %s202
      %s206 = sphi 0, %s205
      %s222 = sphi 0, %s206
      %s228 = sphi 0, %s230
      %s231 = sphi 0, %s228
      %s232 = sphi 0, %s231
      %s248 = sphi 0, %s232
      %s252 = sphi 0, %s252
      %s254 = sphi 0, %s252
      %s255 = sphi 0, %s254
      %s269 = sphi 0, %s255
    $region4: #{tpu_custom_call.1} parent=1 // loop_header_branch
      %23 = sbr.rel (%p21) target = $region8
    $region5: #{tpu_custom_call.1} parent=1 // loop_body
      %s25 = ssub.s32 %s20, 1
      %s26 = ssub.s32 %s20, 2
      %s27 = sadd.s32 %s20, 1
      %s29 = sadd.s32 %s28, 1
      %p32 = scmp.eq.s32.totalorder %s20, 1
      %p33 = scmp.ne.s32.totalorder %s28, %s30
      %p34 = scmp.eq.s32.totalorder %s20, 0
      %p35 = por %p33, %p34
      %p36 = scmp.ne.s32.totalorder %s28, %s30
      %p37 = scmp.eq.s32.totalorder %s25, 1
      %p38 = por %p36, %p37
      %p39 = scmp.ne.s32.totalorder %s30, %s31
      %p40 = scmp.eq.s32.totalorder %s25, 0
      %p41 = por %p39, %p40
      %p42 = scmp.ne.s32.totalorder %s30, %s31
      %p43 = scmp.eq.s32.totalorder %s26, 1
      %p44 = por %p42, %p43
      %p46 = scmp.ne.s32.totalorder %s31, %s45
      %p47 = scmp.eq.s32.totalorder %s26, 0
      %p48 = por %p46, %p47
      %s50 = sadd.s32 %s49, 1
      %p53 = scmp.eq.s32.totalorder %s20, 1
      %p54 = scmp.ne.s32.totalorder %s49, %s51
      %p55 = scmp.eq.s32.totalorder %s20, 0
      %p56 = por %p54, %p55
      %p57 = scmp.ne.s32.totalorder %s49, %s51
      %p58 = scmp.eq.s32.totalorder %s25, 1
      %p59 = por %p57, %p58
      %p60 = scmp.ne.s32.totalorder %s51, %s52
      %p61 = scmp.eq.s32.totalorder %s25, 0
      %p62 = por %p60, %p61
      %p63 = scmp.ne.s32.totalorder %s51, %s52
      %p64 = scmp.eq.s32.totalorder %s26, 1
      %p65 = por %p63, %p64
      %p67 = scmp.ne.s32.totalorder %s52, %s66
      %p68 = scmp.eq.s32.totalorder %s26, 0
      %p69 = por %p67, %p68
      %s70 = ssub.s32 %s20, %s27
      %p71 = scmp.eq.s32.totalorder %s70, 0
      %s73 = sadd.s32 %s72, 1
      %s74 = scalar_select %p71, %s72, %s73
      %p77 = pneg %p71
      %p78 = scmp.eq.s32.totalorder %s20, 1
      %p79 = por %p77, %p78
      %p80 = scmp.ne.s32.totalorder %s72, %s75
      %p81 = scmp.eq.s32.totalorder %s20, 0
      %p82 = por %p80, %p81
      %p83 = scmp.ne.s32.totalorder %s72, %s75
      %p84 = scmp.eq.s32.totalorder %s25, 1
      %p85 = por %p83, %p84
      %p86 = scmp.ne.s32.totalorder %s75, %s76
      %p87 = scmp.eq.s32.totalorder %s25, 0
      %p88 = por %p86, %p87
      %p89 = scmp.ne.s32.totalorder %s75, %s76
      %p90 = scmp.eq.s32.totalorder %s26, 1
      %p91 = por %p89, %p90
      %p93 = scmp.ne.s32.totalorder %s76, %s92
      %p94 = scmp.eq.s32.totalorder %s26, 0
      %p95 = por %p93, %p94
      %s96 = ssub.s32 %s20, %s27
      %p97 = scmp.eq.s32.totalorder %s96, 0
      %s99 = sadd.s32 %s98, 1
      %s100 = scalar_select %p97, %s98, %s99
      %p103 = pneg %p97
      %p104 = scmp.eq.s32.totalorder %s20, 1
      %p105 = por %p103, %p104
      %p106 = scmp.ne.s32.totalorder %s98, %s101
      %p107 = scmp.eq.s32.totalorder %s20, 0
      %p108 = por %p106, %p107
      %p109 = scmp.ne.s32.totalorder %s98, %s101
      %p110 = scmp.eq.s32.totalorder %s25, 1
      %p111 = por %p109, %p110
      %p112 = scmp.ne.s32.totalorder %s101, %s102
      %p113 = scmp.eq.s32.totalorder %s25, 0
      %p114 = por %p112, %p113
      %p115 = scmp.ne.s32.totalorder %s101, %s102
      %p116 = scmp.eq.s32.totalorder %s26, 1
      %p117 = por %p115, %p116
      %p119 = scmp.ne.s32.totalorder %s102, %s118
      %p120 = scmp.eq.s32.totalorder %s26, 0
      %p121 = por %p119, %p120
      %s122 = ssub.s32 %s20, %s27
      %p123 = scmp.eq.s32.totalorder %s122, 0
      %s125 = sadd.s32 %s124, 1
      %s126 = scalar_select %p123, %s124, %s125
      %p129 = pneg %p123
      %p130 = scmp.eq.s32.totalorder %s20, 1
      %p131 = por %p129, %p130
      %p132 = scmp.ne.s32.totalorder %s124, %s127
      %p133 = scmp.eq.s32.totalorder %s20, 0
      %p134 = por %p132, %p133
      %p135 = scmp.ne.s32.totalorder %s124, %s127
      %p136 = scmp.eq.s32.totalorder %s25, 1
      %p137 = por %p135, %p136
      %p138 = scmp.ne.s32.totalorder %s127, %s128
      %p139 = scmp.eq.s32.totalorder %s25, 0
      %p140 = por %p138, %p139
      %p141 = scmp.ne.s32.totalorder %s127, %s128
      %p142 = scmp.eq.s32.totalorder %s26, 1
      %p143 = por %p141, %p142
      %p145 = scmp.ne.s32.totalorder %s128, %s144
      %p146 = scmp.eq.s32.totalorder %s26, 0
      %p147 = por %p145, %p146
      %s148 = ssub.s32 %s20, %s27
      %p149 = scmp.eq.s32.totalorder %s148, 0
      %s151 = sadd.s32 %s150, 1
      %s152 = scalar_select %p149, %s150, %s151
      %p155 = pneg %p149
      %p156 = scmp.eq.s32.totalorder %s20, 1
      %p157 = por %p155, %p156
      %p158 = scmp.ne.s32.totalorder %s150, %s153
      %p159 = scmp.eq.s32.totalorder %s20, 0
      %p160 = por %p158, %p159
      %p161 = scmp.ne.s32.totalorder %s150, %s153
      %p162 = scmp.eq.s32.totalorder %s25, 1
      %p163 = por %p161, %p162
      %p164 = scmp.ne.s32.totalorder %s153, %s154
      %p165 = scmp.eq.s32.totalorder %s25, 0
      %p166 = por %p164, %p165
      %p167 = scmp.ne.s32.totalorder %s153, %s154
      %p168 = scmp.eq.s32.totalorder %s26, 1
      %p169 = por %p167, %p168
      %p171 = scmp.ne.s32.totalorder %s154, %s170
      %p172 = scmp.eq.s32.totalorder %s26, 0
      %p173 = por %p171, %p172
      %s174 = ssub.s32 %s20, %s27
      %p175 = scmp.eq.s32.totalorder %s174, 0
      %s177 = sadd.s32 %s176, 1
      %s178 = scalar_select %p175, %s176, %s177
      %p181 = pneg %p175
      %p182 = scmp.eq.s32.totalorder %s20, 1
      %p183 = por %p181, %p182
      %p184 = scmp.ne.s32.totalorder %s176, %s179
      %p185 = scmp.eq.s32.totalorder %s20, 0
      %p186 = por %p184, %p185
      %p187 = scmp.ne.s32.totalorder %s176, %s179
      %p188 = scmp.eq.s32.totalorder %s25, 1
      %p189 = por %p187, %p188
      %p190 = scmp.ne.s32.totalorder %s179, %s180
      %p191 = scmp.eq.s32.totalorder %s25, 0
      %p192 = por %p190, %p191
      %p193 = scmp.ne.s32.totalorder %s179, %s180
      %p194 = scmp.eq.s32.totalorder %s26, 1
      %p195 = por %p193, %p194
      %p197 = scmp.ne.s32.totalorder %s180, %s196
      %p198 = scmp.eq.s32.totalorder %s26, 0
      %p199 = por %p197, %p198
      %s200 = ssub.s32 %s20, %s27
      %p201 = scmp.eq.s32.totalorder %s200, 0
      %s203 = sadd.s32 %s202, 1
      %s204 = scalar_select %p201, %s202, %s203
      %p207 = pneg %p201
      %p208 = scmp.eq.s32.totalorder %s20, 1
      %p209 = por %p207, %p208
      %p210 = scmp.ne.s32.totalorder %s202, %s205
      %p211 = scmp.eq.s32.totalorder %s20, 0
      %p212 = por %p210, %p211
      %p213 = scmp.ne.s32.totalorder %s202, %s205
      %p214 = scmp.eq.s32.totalorder %s25, 1
      %p215 = por %p213, %p214
      %p216 = scmp.ne.s32.totalorder %s205, %s206
      %p217 = scmp.eq.s32.totalorder %s25, 0
      %p218 = por %p216, %p217
      %p219 = scmp.ne.s32.totalorder %s205, %s206
      %p220 = scmp.eq.s32.totalorder %s26, 1
      %p221 = por %p219, %p220
      %p223 = scmp.ne.s32.totalorder %s206, %s222
      %p224 = scmp.eq.s32.totalorder %s26, 0
      %p225 = por %p223, %p224
      %s226 = ssub.s32 %s20, %s27
      %p227 = scmp.eq.s32.totalorder %s226, 0
      %s229 = sadd.s32 %s228, 1
      %s230 = scalar_select %p227, %s228, %s229
      %p233 = pneg %p227
      %p234 = scmp.eq.s32.totalorder %s20, 1
      %p235 = por %p233, %p234
      %p236 = scmp.ne.s32.totalorder %s228, %s231
      %p237 = scmp.eq.s32.totalorder %s20, 0
      %p238 = por %p236, %p237
      %p239 = scmp.ne.s32.totalorder %s228, %s231
      %p240 = scmp.eq.s32.totalorder %s25, 1
      %p241 = por %p239, %p240
      %p242 = scmp.ne.s32.totalorder %s231, %s232
      %p243 = scmp.eq.s32.totalorder %s25, 0
      %p244 = por %p242, %p243
      %p245 = scmp.ne.s32.totalorder %s231, %s232
      %p246 = scmp.eq.s32.totalorder %s26, 1
      %p247 = por %p245, %p246
      %p249 = scmp.ne.s32.totalorder %s232, %s248
      %p250 = scmp.eq.s32.totalorder %s26, 0
      %p251 = por %p249, %p250
      %s253 = sadd.s32 %s252, 1
      %p256 = scmp.eq.s32.totalorder %s20, 1
      %p257 = scmp.ne.s32.totalorder %s252, %s254
      %p258 = scmp.eq.s32.totalorder %s20, 0
      %p259 = por %p257, %p258
      %p260 = scmp.ne.s32.totalorder %s252, %s254
      %p261 = scmp.eq.s32.totalorder %s25, 1
      %p262 = por %p260, %p261
      %p263 = scmp.ne.s32.totalorder %s254, %s255
      %p264 = scmp.eq.s32.totalorder %s25, 0
      %p265 = por %p263, %p264
      %p266 = scmp.ne.s32.totalorder %s254, %s255
      %p267 = scmp.eq.s32.totalorder %s26, 1
      %p268 = por %p266, %p267
      %p270 = scmp.ne.s32.totalorder %s255, %s269
      %p271 = scmp.eq.s32.totalorder %s26, 0
      %p272 = por %p270, %p271
      %p273 = scmp.le.s32.totalorder 1, %s20
      %p274 = scmp.lt.s32.totalorder %s20, 3
      %p275 = pnand %p273, %p274
      %p276 = pneg %p275
      // Predicated region
      $region9: #{tpu_custom_call.1} parent=5 // pred_check
        _
      $region10: #{tpu_custom_call.1} parent=5 // pred_check_branch
        %278 = sbr.rel (%p275) target = $region12
      $region11: #{tpu_custom_call.1} parent=5 // pred_region
        %s279 = ssub.s32 %s20, 1
        // Predicated region
        $region13: #{tpu_custom_call.1} parent=11 // pred_check
          %p280 = pneg %p41
        $region14: #{tpu_custom_call.1} parent=11 // pred_check_branch
          %282 = sbr.rel (%p280) target = $region16
        $region15: #{tpu_custom_call.1} parent=11 // pred_region
          %s284 = ssub.s32 1024, 1024
          %285 = vsyncadd [#allocation5], %s284
          %s286 = sshll.u32 [#allocation4], 4
          %s287 = int_to_ptr.vmem [resolvable:$true] %s286
          %292 = dma.hbm_to_vmem [thread:$0]  %s1, 1024, %s287, [#allocation5], 64, 64, 4
        $region16: #{tpu_custom_call.1} parent=11 // pred_fallthru
          _
        // Predicated region
        $region17: #{tpu_custom_call.1} parent=11 // pred_check
          %p293 = pneg %p62
        $region18: #{tpu_custom_call.1} parent=11 // pred_check_branch
          %295 = sbr.rel (%p293) target = $region20
        $region19: #{tpu_custom_call.1} parent=11 // pred_region
          %s297 = ssub.s32 2048, 2048
          %298 = vsyncadd [#allocation8], %s297
          %s299 = sshll.u32 [#allocation7], 4
          %s300 = int_to_ptr.vmem [resolvable:$true] %s299
          %305 = dma.hbm_to_vmem [thread:$0]  %s2, 2048, %s300, [#allocation8], 128, 128, 8
        $region20: #{tpu_custom_call.1} parent=11 // pred_fallthru
          _
      $region12: #{tpu_custom_call.1} parent=5 // pred_fallthru
        _
      %p306 = scmp.lt.s32.totalorder %s20, 2
      // Predicated region
      $region21: #{tpu_custom_call.1} parent=5 // pred_check
        %p307 = pneg %p306
      $region22: #{tpu_custom_call.1} parent=5 // pred_check_branch
        %309 = sbr.rel (%p307) target = $region24
      $region23: #{tpu_custom_call.1} parent=5 // pred_region
        // Predicated region
        $region25: #{tpu_custom_call.1} parent=23 // pred_check
          %p310 = pneg %p82
        $region26: #{tpu_custom_call.1} parent=23 // pred_check_branch
          %312 = sbr.rel (%p310) target = $region28
        $region27: #{tpu_custom_call.1} parent=23 // pred_region
          %s313 = sand.u32 %s20, 1
          %s314 = scalar_lea.sflag [#allocation5], %s313
          %s315 = sand.u32 %s72, 1
          %s316 = smul.addr %s315, 128
          %s317 = scalar_lea.vmem [#allocation9], %s316
          %s319 = ssub.s32 2048, 2048
          %320 = vsyncadd %s314, %s319
          %s321 = smul.addr %s20, 16
          %s322 = smul.addr %s321, 128
          %s323 = scalar_lea.hbm %s3, %s322
          %s324 = sshll.u32 %s317, 4
          %s325 = int_to_ptr.vmem [resolvable:$true] %s324
          %330 = dma.hbm_to_vmem [thread:$0]  %s323, 2048, %s325, %s314, 128, 128, 8
        $region28: #{tpu_custom_call.1} parent=23 // pred_fallthru
          _
        // Predicated region
        $region29: #{tpu_custom_call.1} parent=23 // pred_check
          %p331 = pneg %p108
        $region30: #{tpu_custom_call.1} parent=23 // pred_check_branch
          %333 = sbr.rel (%p331) target = $region32
        $region31: #{tpu_custom_call.1} parent=23 // pred_region
          %s334 = sand.u32 %s20, 1
          %s335 = scalar_lea.sflag [#allocation5], %s334
          %s336 = sand.u32 %s98, 1
          %s337 = smul.addr %s336, 128
          %s338 = scalar_lea.vmem [#allocation10], %s337
          %s340 = ssub.s32 2048, 2048
          %341 = vsyncadd %s335, %s340
          %s342 = smul.addr %s20, 16
          %s343 = smul.addr %s342, 128
          %s344 = scalar_lea.hbm %s4, %s343
          %s345 = sshll.u32 %s338, 4
          %s346 = int_to_ptr.vmem [resolvable:$true] %s345
          %351 = dma.hbm_to_vmem [thread:$0]  %s344, 2048, %s346, %s335, 128, 128, 8
        $region32: #{tpu_custom_call.1} parent=23 // pred_fallthru
          _
        // Predicated region
        $region33: #{tpu_custom_call.1} parent=23 // pred_check
          %p352 = pneg %p134
        $region34: #{tpu_custom_call.1} parent=23 // pred_check_branch
          %354 = sbr.rel (%p352) target = $region36
        $region35: #{tpu_custom_call.1} parent=23 // pred_region
          %p355 = scmp.lt.s32.totalorder %s20, 1
          %s356 = scalar_select %p355, %s20, 1
          %s357 = scalar_lea.vmem %s5, %s356
        $region36: #{tpu_custom_call.1} parent=23 // pred_fallthru
          _
        // Predicated region
        $region37: #{tpu_custom_call.1} parent=23 // pred_check
          %p358 = pneg %p160
        $region38: #{tpu_custom_call.1} parent=23 // pred_check_branch
          %360 = sbr.rel (%p358) target = $region40
        $region39: #{tpu_custom_call.1} parent=23 // pred_region
          %s361 = sand.u32 %s20, 1
          %s362 = scalar_lea.sflag [#allocation5], %s361
          %s363 = sand.u32 %s150, 1
          %s364 = smul.addr %s363, 128
          %s365 = scalar_lea.vmem [#allocation11], %s364
          %s367 = ssub.s32 2048, 2048
          %368 = vsyncadd %s362, %s367
          %s369 = smul.addr %s20, 16
          %s370 = smul.addr %s369, 128
          %s371 = scalar_lea.hbm %s6, %s370
          %s372 = sshll.u32 %s365, 4
          %s373 = int_to_ptr.vmem [resolvable:$true] %s372
          %378 = dma.hbm_to_vmem [thread:$0]  %s371, 2048, %s373, %s362, 128, 128, 8
        $region40: #{tpu_custom_call.1} parent=23 // pred_fallthru
          _
        // Predicated region
        $region41: #{tpu_custom_call.1} parent=23 // pred_check
          %p379 = pneg %p186
        $region42: #{tpu_custom_call.1} parent=23 // pred_check_branch
          %381 = sbr.rel (%p379) target = $region44
        $region43: #{tpu_custom_call.1} parent=23 // pred_region
          %p382 = scmp.lt.s32.totalorder %s20, 1
          %s383 = scalar_select %p382, %s20, 1
          %s384 = scalar_lea.vmem %s7, %s383
        $region44: #{tpu_custom_call.1} parent=23 // pred_fallthru
          _
        // Predicated region
        $region45: #{tpu_custom_call.1} parent=23 // pred_check
          %p385 = pneg %p212
        $region46: #{tpu_custom_call.1} parent=23 // pred_check_branch
          %387 = sbr.rel (%p385) target = $region48
        $region47: #{tpu_custom_call.1} parent=23 // pred_region
          %p388 = scmp.lt.s32.totalorder %s20, 1
          %s389 = scalar_select %p388, %s20, 1
          %s390 = scalar_lea.vmem %s8, %s389
        $region48: #{tpu_custom_call.1} parent=23 // pred_fallthru
          _
        // Predicated region
        $region49: #{tpu_custom_call.1} parent=23 // pred_check
          %p391 = pneg %p238
        $region50: #{tpu_custom_call.1} parent=23 // pred_check_branch
          %393 = sbr.rel (%p391) target = $region52
        $region51: #{tpu_custom_call.1} parent=23 // pred_region
          %p394 = scmp.lt.s32.totalorder %s20, 1
          %s395 = scalar_select %p394, %s20, 1
          %s396 = scalar_lea.vmem %s9, %s395
        $region52: #{tpu_custom_call.1} parent=23 // pred_fallthru
          _
      $region24: #{tpu_custom_call.1} parent=5 // pred_fallthru
        _
      %p397 = scmp.le.s32.totalorder 1, %s20
      %p398 = scmp.lt.s32.totalorder %s20, 3
      %p399 = pnand %p397, %p398
      %p400 = pneg %p399
      // Predicated region
      $region53: #{tpu_custom_call.1} parent=5 // pred_check
        _
      $region54: #{tpu_custom_call.1} parent=5 // pred_check_branch
        %402 = sbr.rel (%p399) target = $region56
      $region55: #{tpu_custom_call.1} parent=5 // pred_region
        %s403 = ssub.s32 %s20, 1
        // Predicated region
        $region57: #{tpu_custom_call.1} parent=55 // pred_check
          %p404 = pneg %p41
        $region58: #{tpu_custom_call.1} parent=55 // pred_check_branch
          %406 = sbr.rel (%p404) target = $region60
        $region59: #{tpu_custom_call.1} parent=55 // pred_region
          %407 = dma.done [#allocation5], 1024
        $region60: #{tpu_custom_call.1} parent=55 // pred_fallthru
          _
        // Predicated region
        $region61: #{tpu_custom_call.1} parent=55 // pred_check
          %p408 = pneg %p62
        $region62: #{tpu_custom_call.1} parent=55 // pred_check_branch
          %410 = sbr.rel (%p408) target = $region64
        $region63: #{tpu_custom_call.1} parent=55 // pred_region
          %411 = dma.done [#allocation8], 2048
        $region64: #{tpu_custom_call.1} parent=55 // pred_fallthru
          _
        %s412 = sand.u32 %s25, 1
        %s413 = scalar_lea.sflag [#allocation5], %s412
        %s414 = sand.u32 %s75, 1
        %s415 = smul.addr %s414, 128
        %s416 = scalar_lea.vmem [#allocation9], %s415
        // Predicated region
        $region65: #{tpu_custom_call.1} parent=55 // pred_check
          %p417 = pneg %p88
        $region66: #{tpu_custom_call.1} parent=55 // pred_check_branch
          %419 = sbr.rel (%p417) target = $region68
        $region67: #{tpu_custom_call.1} parent=55 // pred_region
          %420 = dma.done %s413, 2048
        $region68: #{tpu_custom_call.1} parent=55 // pred_fallthru
          _
        %s421 = sand.u32 %s25, 1
        %s422 = scalar_lea.sflag [#allocation5], %s421
        %s423 = sand.u32 %s101, 1
        %s424 = smul.addr %s423, 128
        %s425 = scalar_lea.vmem [#allocation10], %s424
        // Predicated region
        $region69: #{tpu_custom_call.1} parent=55 // pred_check
          %p426 = pneg %p114
        $region70: #{tpu_custom_call.1} parent=55 // pred_check_branch
          %428 = sbr.rel (%p426) target = $region72
        $region71: #{tpu_custom_call.1} parent=55 // pred_region
          %429 = dma.done %s422, 2048
        $region72: #{tpu_custom_call.1} parent=55 // pred_fallthru
          _
        %s430 = sand.u32 %s25, 1
        %s431 = scalar_lea.sflag [#allocation5], %s430
        %s432 = sand.u32 %s153, 1
        %s433 = smul.addr %s432, 128
        %s434 = scalar_lea.vmem [#allocation11], %s433
        // Predicated region
        $region73: #{tpu_custom_call.1} parent=55 // pred_check
          %p435 = pneg %p166
        $region74: #{tpu_custom_call.1} parent=55 // pred_check_branch
          %437 = sbr.rel (%p435) target = $region76
        $region75: #{tpu_custom_call.1} parent=55 // pred_region
          %438 = dma.done %s431, 2048
        $region76: #{tpu_custom_call.1} parent=55 // pred_fallthru
          _
        %p439 = pneg %p41
        %p440 = pneg %p38
        %p441 = pneg %p62
        %p442 = pneg %p59
        %s443 = sand.u32 %s25, 1
        %s444 = scalar_lea.sflag [#allocation5], %s443
        %s445 = sand.u32 %s75, 1
        %s446 = smul.addr %s445, 128
        %s447 = scalar_lea.vmem [#allocation9], %s446
        %p448 = pneg %p88
        %p449 = pneg %p85
        %s450 = sand.u32 %s25, 1
        %s451 = scalar_lea.sflag [#allocation5], %s450
        %s452 = sand.u32 %s101, 1
        %s453 = smul.addr %s452, 128
        %s454 = scalar_lea.vmem [#allocation10], %s453
        %p455 = pneg %p114
        %p456 = pneg %p111
        %p457 = scmp.lt.s32.totalorder %s25, 1
        %s458 = scalar_select %p457, %s25, 1
        %s459 = scalar_lea.vmem %s5, %s458
        %p460 = pneg %p140
        %p461 = pneg %p137
        %s462 = sand.u32 %s25, 1
        %s463 = scalar_lea.sflag [#allocation5], %s462
        %s464 = sand.u32 %s153, 1
        %s465 = smul.addr %s464, 128
        %s466 = scalar_lea.vmem [#allocation11], %s465
        %p467 = pneg %p166
        %p468 = pneg %p163
        %p469 = scmp.lt.s32.totalorder %s25, 1
        %s470 = scalar_select %p469, %s25, 1
        %s471 = scalar_lea.vmem %s7, %s470
        %p472 = pneg %p192
        %p473 = pneg %p189
        %p474 = scmp.lt.s32.totalorder %s25, 1
        %s475 = scalar_select %p474, %s25, 1
        %s476 = scalar_lea.vmem %s8, %s475
        %p477 = pneg %p218
        %p478 = pneg %p215
        %p479 = scmp.lt.s32.totalorder %s25, 1
        %s480 = scalar_select %p479, %s25, 1
        %s481 = scalar_lea.vmem %s9, %s480
        %p482 = pneg %p244
        %p483 = pneg %p241
        %p484 = pneg %p265
        %p485 = pneg %p262
        %p486 = scmp.lt.s32.totalorder %s25, 1
        %s487 = scalar_select %p486, %s25, 1
        %s488 = scalar_lea.vmem %s5, %s487
        %p489 = scmp.lt.s32.totalorder %s25, 1
        %s490 = scalar_select %p489, %s25, 1
        %s491 = scalar_lea.vmem %s7, %s490
        %p492 = scmp.lt.s32.totalorder %s25, 1
        %s493 = scalar_select %p492, %s25, 1
        %s494 = scalar_lea.vmem %s8, %s493
        %p495 = scmp.lt.s32.totalorder %s25, 1
        %s496 = scalar_select %p495, %s25, 1
        %s497 = scalar_lea.vmem %s9, %s496
        %p499 = scmp.eq.s32.totalorder %s25, 1
        %p500 = scmp.eq.s32.totalorder %s25, 0
        // Predicated region
        $region77: #{tpu_custom_call.1} parent=55 // pred_check
          %p501 = pneg %p500
        $region78: #{tpu_custom_call.1} parent=55 // pred_check_branch
          %503 = sbr.rel (%p501) target = $region80
        $region79: #{tpu_custom_call.1} parent=55 // pred_region
          %v504 = vld [vmem:[#allocation7] sm:$0xff]
          %v505 = vld [vmem:[#allocation7 + $0x8] sm:$0xff]
          %v506 = vld [vmem:[#allocation7 + $0x10] sm:$0xff]
          %v507 = vld [vmem:[#allocation7 + $0x18] sm:$0xff]
          %v508 = vld [vmem:[#allocation7 + $0x20] sm:$0xff]
          %v509 = vld [vmem:[#allocation7 + $0x28] sm:$0xff]
          %v510 = vld [vmem:[#allocation7 + $0x30] sm:$0xff]
          %v511 = vld [vmem:[#allocation7 + $0x38] sm:$0xff]
          %v512 = vld [vmem:[#allocation7 + $0x40] sm:$0xff]
          %v513 = vld [vmem:[#allocation7 + $0x48] sm:$0xff]
          %v514 = vld [vmem:[#allocation7 + $0x50] sm:$0xff]
          %v515 = vld [vmem:[#allocation7 + $0x58] sm:$0xff]
          %v516 = vld [vmem:[#allocation7 + $0x60] sm:$0xff]
          %v517 = vld [vmem:[#allocation7 + $0x68] sm:$0xff]
          %v518 = vld [vmem:[#allocation7 + $0x70] sm:$0xff]
          %v519 = vld [vmem:[#allocation7 + $0x78] sm:$0xff]
          %520 = vst [vmem:[#allocation12] sm:$0xff] %v504
          %521 = vst [vmem:[#allocation12 + $0x8] sm:$0xff] %v505
          %522 = vst [vmem:[#allocation12 + $0x10] sm:$0xff] %v506
          %523 = vst [vmem:[#allocation12 + $0x18] sm:$0xff] %v507
          %524 = vst [vmem:[#allocation12 + $0x20] sm:$0xff] %v508
          %525 = vst [vmem:[#allocation12 + $0x28] sm:$0xff] %v509
          %526 = vst [vmem:[#allocation12 + $0x30] sm:$0xff] %v510
          %527 = vst [vmem:[#allocation12 + $0x38] sm:$0xff] %v511
          %528 = vst [vmem:[#allocation12 + $0x40] sm:$0xff] %v512
          %529 = vst [vmem:[#allocation12 + $0x48] sm:$0xff] %v513
          %530 = vst [vmem:[#allocation12 + $0x50] sm:$0xff] %v514
          %531 = vst [vmem:[#allocation12 + $0x58] sm:$0xff] %v515
          %532 = vst [vmem:[#allocation12 + $0x60] sm:$0xff] %v516
          %533 = vst [vmem:[#allocation12 + $0x68] sm:$0xff] %v517
          %534 = vst [vmem:[#allocation12 + $0x70] sm:$0xff] %v518
          %535 = vst [vmem:[#allocation12 + $0x78] sm:$0xff] %v519
        $region80: #{tpu_custom_call.1} parent=55 // pred_fallthru
          _
        %v536 = vld [vmem:[#allocation12] sm:$0xff]
        %v537 = vld [vmem:[#allocation12 + $0x8] sm:$0xff]
        %v538 = vld [vmem:[#allocation12 + $0x10] sm:$0xff]
        %v539 = vld [vmem:[#allocation12 + $0x18] sm:$0xff]
        %v540 = vld [vmem:[#allocation12 + $0x20] sm:$0xff]
        %v541 = vld [vmem:[#allocation12 + $0x28] sm:$0xff]
        %v542 = vld [vmem:[#allocation12 + $0x30] sm:$0xff]
        %v543 = vld [vmem:[#allocation12 + $0x38] sm:$0xff]
        %v544 = vld [vmem:[#allocation12 + $0x40] sm:$0xff]
        %v545 = vld [vmem:[#allocation12 + $0x48] sm:$0xff]
        %v546 = vld [vmem:[#allocation12 + $0x50] sm:$0xff]
        %v547 = vld [vmem:[#allocation12 + $0x58] sm:$0xff]
        %v548 = vld [vmem:[#allocation12 + $0x60] sm:$0xff]
        %v549 = vld [vmem:[#allocation12 + $0x68] sm:$0xff]
        %v550 = vld [vmem:[#allocation12 + $0x70] sm:$0xff]
        %v551 = vld [vmem:[#allocation12 + $0x78] sm:$0xff]
        %v552 = vpack.c.bf16 %v537, %v536
        %v553 = vpack.c.bf16 %v539, %v538
        %v554 = vpack.c.bf16 %v541, %v540
        %v555 = vpack.c.bf16 %v543, %v542
        %v556 = vpack.c.bf16 %v545, %v544
        %v557 = vpack.c.bf16 %v547, %v546
        %v558 = vpack.c.bf16 %v549, %v548
        %v559 = vpack.c.bf16 %v551, %v550
        %v560 = vunpack.c.l.bf16 %v552
        %v561 = vunpack.c.h.bf16 %v552
        %v562 = vunpack.c.l.bf16 %v553
        %v563 = vunpack.c.h.bf16 %v553
        %v564 = vunpack.c.l.bf16 %v554
        %v565 = vunpack.c.h.bf16 %v554
        %v566 = vunpack.c.l.bf16 %v555
        %v567 = vunpack.c.h.bf16 %v555
        %v568 = vunpack.c.l.bf16 %v556
        %v569 = vunpack.c.h.bf16 %v556
        %v570 = vunpack.c.l.bf16 %v557
        %v571 = vunpack.c.h.bf16 %v557
        %v572 = vunpack.c.l.bf16 %v558
        %v573 = vunpack.c.h.bf16 %v558
        %v574 = vunpack.c.l.bf16 %v559
        %v575 = vunpack.c.h.bf16 %v559
        %v576 = vsub.f32 %v536, %v560
        %v577 = vsub.f32 %v537, %v561
        %v578 = vsub.f32 %v538, %v562
        %v579 = vsub.f32 %v539, %v563
        %v580 = vsub.f32 %v540, %v564
        %v581 = vsub.f32 %v541, %v565
        %v582 = vsub.f32 %v542, %v566
        %v583 = vsub.f32 %v543, %v567
        %v584 = vsub.f32 %v544, %v568
        %v585 = vsub.f32 %v545, %v569
        %v586 = vsub.f32 %v546, %v570
        %v587 = vsub.f32 %v547, %v571
        %v588 = vsub.f32 %v548, %v572
        %v589 = vsub.f32 %v549, %v573
        %v590 = vsub.f32 %v550, %v574
        %v591 = vsub.f32 %v551, %v575
        %v592 = vpack.c.bf16 %v577, %v576
        %v593 = vpack.c.bf16 %v579, %v578
        %v594 = vpack.c.bf16 %v581, %v580
        %v595 = vpack.c.bf16 %v583, %v582
        %v596 = vpack.c.bf16 %v585, %v584
        %v597 = vpack.c.bf16 %v587, %v586
        %v598 = vpack.c.bf16 %v589, %v588
        %v599 = vpack.c.bf16 %v591, %v590
        %v600 = vld [vmem:[#allocation4] sm:$0xf]
        %v601 = vld [vmem:[#allocation4 + $0x4] sm:$0xf]
        %v602 = vld [vmem:[#allocation4 + $0x8] sm:$0xf]
        %v603 = vld [vmem:[#allocation4 + $0xc] sm:$0xf]
        %v604 = vld [vmem:[#allocation4 + $0x10] sm:$0xf]
        %v605 = vld [vmem:[#allocation4 + $0x14] sm:$0xf]
        %v606 = vld [vmem:[#allocation4 + $0x18] sm:$0xf]
        %v607 = vld [vmem:[#allocation4 + $0x1c] sm:$0xf]
        %v608 = vld [vmem:[#allocation4 + $0x20] sm:$0xf]
        %v609 = vld [vmem:[#allocation4 + $0x24] sm:$0xf]
        %v610 = vld [vmem:[#allocation4 + $0x28] sm:$0xf]
        %v611 = vld [vmem:[#allocation4 + $0x2c] sm:$0xf]
        %v612 = vld [vmem:[#allocation4 + $0x30] sm:$0xf]
        %v613 = vld [vmem:[#allocation4 + $0x34] sm:$0xf]
        %v614 = vld [vmem:[#allocation4 + $0x38] sm:$0xf]
        %v615 = vld [vmem:[#allocation4 + $0x3c] sm:$0xf]
        %v632 = vunpack.c.l.b16 %v600
        %v633 = vunpack.c.l.b16 %v601
        %v634 = vunpack.c.l.b16 %v602
        %v635 = vunpack.c.l.b16 %v603
        %v636 = vunpack.c.l.b16 %v604
        %v637 = vunpack.c.l.b16 %v605
        %v638 = vunpack.c.l.b16 %v606
        %v639 = vunpack.c.l.b16 %v607
        %v640 = vunpack.c.l.b16 %v608
        %v641 = vunpack.c.l.b16 %v609
        %v642 = vunpack.c.l.b16 %v610
        %v643 = vunpack.c.l.b16 %v611
        %v644 = vunpack.c.l.b16 %v612
        %v645 = vunpack.c.l.b16 %v613
        %v646 = vunpack.c.l.b16 %v614
        %v647 = vunpack.c.l.b16 %v615
        %v648 = vpack.c.b16 %v633, %v632
        %v649 = vpack.c.b16 %v635, %v634
        %v650 = vpack.c.b16 %v637, %v636
        %v651 = vpack.c.b16 %v639, %v638
        %v652 = vpack.c.b16 %v641, %v640
        %v653 = vpack.c.b16 %v643, %v642
        %v654 = vpack.c.b16 %v645, %v644
        %v655 = vpack.c.b16 %v647, %v646
        %664 = vmatprep.subr.bf16.mxu0 0
        %665 = vmatpush1.bf16.msra.mxu0 %v592
        %666 = vmatprep.subr.bf16.mxu0 0
        %667 = vmatpush1.bf16.msra.mxu0 %v593
        %668 = vmatprep.subr.bf16.mxu0 0
        %669 = vmatpush1.bf16.msra.mxu0 %v594
        %670 = vmatprep.subr.bf16.mxu0 0
        %671 = vmatpush1.bf16.msra.mxu0 %v595
        %672 = vmatprep.subr.bf16.mxu0 0
        %673 = vmatpush1.bf16.msra.mxu0 %v596
        %674 = vmatprep.subr.bf16.mxu0 0
        %675 = vmatpush1.bf16.msra.mxu0 %v597
        %676 = vmatprep.subr.bf16.mxu0 0
        %677 = vmatpush1.bf16.msra.mxu0 %v598
        %678 = vmatprep.subr.bf16.mxu0 0
        %679 = vmatpush1.bf16.msra.mxu0 %v599
        %680 = vmatprep.subr.bf16.mxu0 0
        %681 = vmatpush1.bf16.msra.mxu0 0
        %682 = vmatprep.subr.bf16.mxu0 0
        %683 = vmatpush1.bf16.msra.mxu0 0
        %684 = vmatprep.subr.bf16.mxu0 0
        %685 = vmatpush1.bf16.msra.mxu0 0
        %686 = vmatprep.subr.bf16.mxu0 0
        %687 = vmatpush1.bf16.msra.mxu0 0
        %688 = vmatprep.subr.bf16.mxu0 0
        %689 = vmatpush1.bf16.msra.mxu0 0
        %690 = vmatprep.subr.bf16.mxu0 0
        %691 = vmatpush1.bf16.msra.mxu0 0
        %692 = vmatprep.subr.bf16.mxu0 0
        %693 = vmatpush1.bf16.msra.mxu0 0
        %694 = vmatprep.subr.bf16.mxu0 0
        %695 = vmatpush1.bf16.msra.mxu0 0
        %696 = vmatprep.mubr.bf16.mxu0 0
        %697 = vmatmul.mubr.bf16.gmra.mrb[0].mxu0 %v648
        %v698 = vpop.f32.mrb[0].mxu0
        %v699 = vadd.f32 0.0, %v698
        %v700 = vpop.f32.mrb[0].mxu0
        %v701 = vpop.f32.mrb[0].mxu0
        %v702 = vadd.f32 0.0, %v701
        %v703 = vpop.f32.mrb[0].mxu0
        %704 = vmatprep.mubr.bf16.mxu0 0
        %705 = vmatmul.mubr.bf16.gmra.mrb[0].mxu0 %v649
        %v706 = vpop.f32.mrb[0].mxu0
        %v707 = vadd.f32 0.0, %v706
        %v708 = vpop.f32.mrb[0].mxu0
        %v709 = vpop.f32.mrb[0].mxu0
        %v710 = vadd.f32 0.0, %v709
        %v711 = vpop.f32.mrb[0].mxu0
        %712 = vmatprep.mubr.bf16.mxu0 0
        %713 = vmatmul.mubr.bf16.gmra.mrb[0].mxu0 %v650
        %v714 = vpop.f32.mrb[0].mxu0
        %v715 = vadd.f32 0.0, %v714
        %v716 = vpop.f32.mrb[0].mxu0
        %v717 = vpop.f32.mrb[0].mxu0
        %v718 = vadd.f32 0.0, %v717
        %v719 = vpop.f32.mrb[0].mxu0
        %720 = vmatprep.mubr.bf16.mxu0 0
        %721 = vmatmul.mubr.bf16.gmra.mrb[0].mxu0 %v651
        %v722 = vpop.f32.mrb[0].mxu0
        %v723 = vadd.f32 0.0, %v722
        %v724 = vpop.f32.mrb[0].mxu0
        %v725 = vpop.f32.mrb[0].mxu0
        %v726 = vadd.f32 0.0, %v725
        %v727 = vpop.f32.mrb[0].mxu0
        %728 = vmatprep.mubr.bf16.mxu0 0
        %729 = vmatmul.mubr.bf16.gmra.mrb[0].mxu0 %v652
        %v730 = vpop.f32.mrb[0].mxu0
        %v731 = vadd.f32 0.0, %v730
        %v732 = vpop.f32.mrb[0].mxu0
        %v733 = vpop.f32.mrb[0].mxu0
        %v734 = vadd.f32 0.0, %v733
        %v735 = vpop.f32.mrb[0].mxu0
        %736 = vmatprep.mubr.bf16.mxu0 0
        %737 = vmatmul.mubr.bf16.gmra.mrb[0].mxu0 %v653
        %v738 = vpop.f32.mrb[0].mxu0
        %v739 = vadd.f32 0.0, %v738
        %v740 = vpop.f32.mrb[0].mxu0
        %v741 = vpop.f32.mrb[0].mxu0
        %v742 = vadd.f32 0.0, %v741
        %v743 = vpop.f32.mrb[0].mxu0
        %744 = vmatprep.mubr.bf16.mxu0 0
        %745 = vmatmul.mubr.bf16.gmra.mrb[0].mxu0 %v654
        %v746 = vpop.f32.mrb[0].mxu0
        %v747 = vadd.f32 0.0, %v746
        %v748 = vpop.f32.mrb[0].mxu0
        %v749 = vpop.f32.mrb[0].mxu0
        %v750 = vadd.f32 0.0, %v749
        %v751 = vpop.f32.mrb[0].mxu0
        %752 = vmatprep.mubr.bf16.mxu0 0
        %753 = vmatmul.mubr.bf16.gmra.mrb[0].mxu0 %v655
        %v754 = vpop.f32.mrb[0].mxu0
        %v755 = vadd.f32 0.0, %v754
        %v756 = vpop.f32.mrb[0].mxu0
        %v757 = vpop.f32.mrb[0].mxu0
        %v758 = vadd.f32 0.0, %v757
        %v759 = vpop.f32.mrb[0].mxu0
        %760 = vdwg.mxu0
        %761 = vmatprep.subr.bf16.mxu0 0
        %762 = vmatpush1.bf16.msra.mxu0 %v552
        %763 = vmatprep.subr.bf16.mxu0 0
        %764 = vmatpush1.bf16.msra.mxu0 %v553
        %765 = vmatprep.subr.bf16.mxu0 0
        %766 = vmatpush1.bf16.msra.mxu0 %v554
        %767 = vmatprep.subr.bf16.mxu0 0
        %768 = vmatpush1.bf16.msra.mxu0 %v555
        %769 = vmatprep.subr.bf16.mxu0 0
        %770 = vmatpush1.bf16.msra.mxu0 %v556
        %771 = vmatprep.subr.bf16.mxu0 0
        %772 = vmatpush1.bf16.msra.mxu0 %v557
        %773 = vmatprep.subr.bf16.mxu0 0
        %774 = vmatpush1.bf16.msra.mxu0 %v558
        %775 = vmatprep.subr.bf16.mxu0 0
        %776 = vmatpush1.bf16.msra.mxu0 %v559
        %777 = vmatprep.subr.bf16.mxu0 0
        %778 = vmatpush1.bf16.msra.mxu0 0
        %779 = vmatprep.subr.bf16.mxu0 0
        %780 = vmatpush1.bf16.msra.mxu0 0
        %781 = vmatprep.subr.bf16.mxu0 0
        %782 = vmatpush1.bf16.msra.mxu0 0
        %783 = vmatprep.subr.bf16.mxu0 0
        %784 = vmatpush1.bf16.msra.mxu0 0
        %785 = vmatprep.subr.bf16.mxu0 0
        %786 = vmatpush1.bf16.msra.mxu0 0
        %787 = vmatprep.subr.bf16.mxu0 0
        %788 = vmatpush1.bf16.msra.mxu0 0
        %789 = vmatprep.subr.bf16.mxu0 0
        %790 = vmatpush1.bf16.msra.mxu0 0
        %791 = vmatprep.subr.bf16.mxu0 0
        %792 = vmatpush1.bf16.msra.mxu0 0
        %793 = vmatprep.mubr.bf16.mxu0 0
        %794 = vmatmul.mubr.bf16.gmra.mrb[0].mxu0 %v648
        %v795 = vpop.f32.mrb[0].mxu0
        %v796 = vadd.f32 %v699, %v795
        %v797 = vpop.f32.mrb[0].mxu0
        %v798 = vpop.f32.mrb[0].mxu0
        %v799 = vadd.f32 %v702, %v798
        %v800 = vpop.f32.mrb[0].mxu0
        %801 = vmatprep.mubr.bf16.mxu0 0
        %802 = vmatmul.mubr.bf16.gmra.mrb[0].mxu0 %v649
        %v803 = vpop.f32.mrb[0].mxu0
        %v804 = vadd.f32 %v707, %v803
        %v805 = vpop.f32.mrb[0].mxu0
        %v806 = vpop.f32.mrb[0].mxu0
        %v807 = vadd.f32 %v710, %v806
        %v808 = vpop.f32.mrb[0].mxu0
        %809 = vmatprep.mubr.bf16.mxu0 0
        %810 = vmatmul.mubr.bf16.gmra.mrb[0].mxu0 %v650
        %v811 = vpop.f32.mrb[0].mxu0
        %v812 = vadd.f32 %v715, %v811
        %v813 = vpop.f32.mrb[0].mxu0
        %v814 = vpop.f32.mrb[0].mxu0
        %v815 = vadd.f32 %v718, %v814
        %v816 = vpop.f32.mrb[0].mxu0
        %817 = vmatprep.mubr.bf16.mxu0 0
        %818 = vmatmul.mubr.bf16.gmra.mrb[0].mxu0 %v651
        %v819 = vpop.f32.mrb[0].mxu0
        %v820 = vadd.f32 %v723, %v819
        %v821 = vpop.f32.mrb[0].mxu0
        %v822 = vpop.f32.mrb[0].mxu0
        %v823 = vadd.f32 %v726, %v822
        %v824 = vpop.f32.mrb[0].mxu0
        %825 = vmatprep.mubr.bf16.mxu0 0
        %826 = vmatmul.mubr.bf16.gmra.mrb[0].mxu0 %v652
        %v827 = vpop.f32.mrb[0].mxu0
        %v828 = vadd.f32 %v731, %v827
        %v829 = vpop.f32.mrb[0].mxu0
        %v830 = vpop.f32.mrb[0].mxu0
        %v831 = vadd.f32 %v734, %v830
        %v832 = vpop.f32.mrb[0].mxu0
        %833 = vmatprep.mubr.bf16.mxu0 0
        %834 = vmatmul.mubr.bf16.gmra.mrb[0].mxu0 %v653
        %v835 = vpop.f32.mrb[0].mxu0
        %v836 = vadd.f32 %v739, %v835
        %v837 = vpop.f32.mrb[0].mxu0
        %v838 = vpop.f32.mrb[0].mxu0
        %v839 = vadd.f32 %v742, %v838
        %v840 = vpop.f32.mrb[0].mxu0
        %841 = vmatprep.mubr.bf16.mxu0 0
        %842 = vmatmul.mubr.bf16.gmra.mrb[0].mxu0 %v654
        %v843 = vpop.f32.mrb[0].mxu0
        %v844 = vadd.f32 %v747, %v843
        %v845 = vpop.f32.mrb[0].mxu0
        %v846 = vpop.f32.mrb[0].mxu0
        %v847 = vadd.f32 %v750, %v846
        %v848 = vpop.f32.mrb[0].mxu0
        %849 = vmatprep.mubr.bf16.mxu0 0
        %850 = vmatmul.mubr.bf16.gmra.mrb[0].mxu0 %v655
        %v851 = vpop.f32.mrb[0].mxu0
        %v852 = vadd.f32 %v755, %v851
        %v853 = vpop.f32.mrb[0].mxu0
        %v854 = vpop.f32.mrb[0].mxu0
        %v855 = vadd.f32 %v758, %v854
        %v856 = vpop.f32.mrb[0].mxu0
        %857 = vdwg.mxu0
        %v858 = vld [vmem:[%s416] sm:$0xff]
        %v859 = vld [vmem:[%s416 + $0x8] sm:$0xff]
        %v860 = vld [vmem:[%s416 + $0x10] sm:$0xff]
        %v861 = vld [vmem:[%s416 + $0x18] sm:$0xff]
        %v862 = vld [vmem:[%s416 + $0x20] sm:$0xff]
        %v863 = vld [vmem:[%s416 + $0x28] sm:$0xff]
        %v864 = vld [vmem:[%s416 + $0x30] sm:$0xff]
        %v865 = vld [vmem:[%s416 + $0x38] sm:$0xff]
        %v866 = vld [vmem:[%s416 + $0x40] sm:$0xff]
        %v867 = vld [vmem:[%s416 + $0x48] sm:$0xff]
        %v868 = vld [vmem:[%s416 + $0x50] sm:$0xff]
        %v869 = vld [vmem:[%s416 + $0x58] sm:$0xff]
        %v870 = vld [vmem:[%s416 + $0x60] sm:$0xff]
        %v871 = vld [vmem:[%s416 + $0x68] sm:$0xff]
        %v872 = vld [vmem:[%s416 + $0x70] sm:$0xff]
        %v873 = vld [vmem:[%s416 + $0x78] sm:$0xff]
        %v874 = vadd.f32 %v796, %v858
        %v875 = vadd.f32 %v799, %v859
        %v876 = vadd.f32 %v804, %v860
        %v877 = vadd.f32 %v807, %v861
        %v878 = vadd.f32 %v812, %v862
        %v879 = vadd.f32 %v815, %v863
        %v880 = vadd.f32 %v820, %v864
        %v881 = vadd.f32 %v823, %v865
        %v882 = vadd.f32 %v828, %v866
        %v883 = vadd.f32 %v831, %v867
        %v884 = vadd.f32 %v836, %v868
        %v885 = vadd.f32 %v839, %v869
        %v886 = vadd.f32 %v844, %v870
        %v887 = vadd.f32 %v847, %v871
        %v888 = vadd.f32 %v852, %v872
        %v889 = vadd.f32 %v855, %v873
        %v890 = vld [vmem:[%s425] sm:$0xff]
        %v891 = vld [vmem:[%s425 + $0x8] sm:$0xff]
        %v892 = vld [vmem:[%s425 + $0x10] sm:$0xff]
        %v893 = vld [vmem:[%s425 + $0x18] sm:$0xff]
        %v894 = vld [vmem:[%s425 + $0x20] sm:$0xff]
        %v895 = vld [vmem:[%s425 + $0x28] sm:$0xff]
        %v896 = vld [vmem:[%s425 + $0x30] sm:$0xff]
        %v897 = vld [vmem:[%s425 + $0x38] sm:$0xff]
        %v898 = vld [vmem:[%s425 + $0x40] sm:$0xff]
        %v899 = vld [vmem:[%s425 + $0x48] sm:$0xff]
        %v900 = vld [vmem:[%s425 + $0x50] sm:$0xff]
        %v901 = vld [vmem:[%s425 + $0x58] sm:$0xff]
        %v902 = vld [vmem:[%s425 + $0x60] sm:$0xff]
        %v903 = vld [vmem:[%s425 + $0x68] sm:$0xff]
        %v904 = vld [vmem:[%s425 + $0x70] sm:$0xff]
        %v905 = vld [vmem:[%s425 + $0x78] sm:$0xff]
        %v906 = vld [vmem:[%s488] sm:$0x1]
        %v908 = vlaneseq
        %v909 = vshrl.u32 %v908, 7
        %v910 = vsub.s32 0, %v909
        %v911 = vrot.slane %v906, %v910
        %913 = vmatprep.subr.mxu0 0.0
        %914 = vmatpush1.msra.mxu0 %v890
        %915 = vmatprep.subr.mxu0 0.0
        %916 = vmatpush1.msra.mxu0 %v891
        %917 = vmatprep.subr.mxu0 0.0
        %918 = vmatpush1.msra.mxu0 %v892
        %919 = vmatprep.subr.mxu0 0.0
        %920 = vmatpush1.msra.mxu0 %v893
        %921 = vmatprep.subr.mxu0 0.0
        %922 = vmatpush1.msra.mxu0 %v894
        %923 = vmatprep.subr.mxu0 0.0
        %924 = vmatpush1.msra.mxu0 %v895
        %925 = vmatprep.subr.mxu0 0.0
        %926 = vmatpush1.msra.mxu0 %v896
        %927 = vmatprep.subr.mxu0 0.0
        %928 = vmatpush1.msra.mxu0 %v897
        %929 = vmatprep.subr.mxu0 0.0
        %930 = vmatpush1.msra.mxu0 %v898
        %931 = vmatprep.subr.mxu0 0.0
        %932 = vmatpush1.msra.mxu0 %v899
        %933 = vmatprep.subr.mxu0 0.0
        %934 = vmatpush1.msra.mxu0 %v900
        %935 = vmatprep.subr.mxu0 0.0
        %936 = vmatpush1.msra.mxu0 %v901
        %937 = vmatprep.subr.mxu0 0.0
        %938 = vmatpush1.msra.mxu0 %v902
        %939 = vmatprep.subr.mxu0 0.0
        %940 = vmatpush1.msra.mxu0 %v903
        %941 = vmatprep.subr.mxu0 0.0
        %942 = vmatpush1.msra.mxu0 %v904
        %943 = vmatprep.subr.mxu0 0.0
        %944 = vmatpush1.msra.mxu0 %v905
        %945 = vmatprep.subr.mxu0 0.0
        %946 = vmatpush1.msra.mxu0 0.0
        %947 = vmatprep.subr.mxu0 0.0
        %948 = vmatpush1.msra.mxu0 0.0
        %949 = vmatprep.subr.mxu0 0.0
        %950 = vmatpush1.msra.mxu0 0.0
        %951 = vmatprep.subr.mxu0 0.0
        %952 = vmatpush1.msra.mxu0 0.0
        %953 = vmatprep.subr.mxu0 0.0
        %954 = vmatpush1.msra.mxu0 0.0
        %955 = vmatprep.subr.mxu0 0.0
        %956 = vmatpush1.msra.mxu0 0.0
        %957 = vmatprep.subr.mxu0 0.0
        %958 = vmatpush1.msra.mxu0 0.0
        %959 = vmatprep.subr.mxu0 0.0
        %960 = vmatpush1.msra.mxu0 0.0
        %961 = vmatprep.subr.mxu0 0.0
        %962 = vmatpush1.msra.mxu0 0.0
        %963 = vmatprep.subr.mxu0 0.0
        %964 = vmatpush1.msra.mxu0 0.0
        %965 = vmatprep.subr.mxu0 0.0
        %966 = vmatpush1.msra.mxu0 0.0
        %967 = vmatprep.subr.mxu0 0.0
        %968 = vmatpush1.msra.mxu0 0.0
        %969 = vmatprep.subr.mxu0 0.0
        %970 = vmatpush1.msra.mxu0 0.0
        %971 = vmatprep.subr.mxu0 0.0
        %972 = vmatpush1.msra.mxu0 0.0
        %973 = vmatprep.subr.mxu0 0.0
        %974 = vmatpush1.msra.mxu0 0.0
        %975 = vmatprep.subr.mxu0 0.0
        %976 = vmatpush1.msra.mxu0 0.0
        %977 = vmatprep.mubr.f32.mxu0 0.0
        %978 = vmatmul.mubr.f32.gmra.mrb[0].mxu0 %v874
        %v979 = vpop.f32.mrb[0].mxu0
        %v980 = vadd.f32 %v911, %v979
        %v981 = vpop.f32.mrb[0].mxu0
        %982 = vmatprep.mubr.f32.mxu0 0.0
        %983 = vmatmul.mubr.f32.gmra.mrb[0].mxu0 %v875
        %v984 = vpop.f32.mrb[0].mxu0
        %v985 = vadd.f32 %v911, %v984
        %v986 = vpop.f32.mrb[0].mxu0
        %987 = vmatprep.mubr.f32.mxu0 0.0
        %988 = vmatmul.mubr.f32.gmra.mrb[0].mxu0 %v876
        %v989 = vpop.f32.mrb[0].mxu0
        %v990 = vadd.f32 %v911, %v989
        %v991 = vpop.f32.mrb[0].mxu0
        %992 = vmatprep.mubr.f32.mxu0 0.0
        %993 = vmatmul.mubr.f32.gmra.mrb[0].mxu0 %v877
        %v994 = vpop.f32.mrb[0].mxu0
        %v995 = vadd.f32 %v911, %v994
        %v996 = vpop.f32.mrb[0].mxu0
        %997 = vmatprep.mubr.f32.mxu0 0.0
        %998 = vmatmul.mubr.f32.gmra.mrb[0].mxu0 %v878
        %v999 = vpop.f32.mrb[0].mxu0
        %v1000 = vadd.f32 %v911, %v999
        %v1001 = vpop.f32.mrb[0].mxu0
        %1002 = vmatprep.mubr.f32.mxu0 0.0
        %1003 = vmatmul.mubr.f32.gmra.mrb[0].mxu0 %v879
        %v1004 = vpop.f32.mrb[0].mxu0
        %v1005 = vadd.f32 %v911, %v1004
        %v1006 = vpop.f32.mrb[0].mxu0
        %1007 = vmatprep.mubr.f32.mxu0 0.0
        %1008 = vmatmul.mubr.f32.gmra.mrb[0].mxu0 %v880
        %v1009 = vpop.f32.mrb[0].mxu0
        %v1010 = vadd.f32 %v911, %v1009
        %v1011 = vpop.f32.mrb[0].mxu0
        %1012 = vmatprep.mubr.f32.mxu0 0.0
        %1013 = vmatmul.mubr.f32.gmra.mrb[0].mxu0 %v881
        %v1014 = vpop.f32.mrb[0].mxu0
        %v1015 = vadd.f32 %v911, %v1014
        %v1016 = vpop.f32.mrb[0].mxu0
        %1017 = vmatprep.mubr.f32.mxu0 0.0
        %1018 = vmatmul.mubr.f32.gmra.mrb[0].mxu0 %v882
        %v1019 = vpop.f32.mrb[0].mxu0
        %v1020 = vadd.f32 %v911, %v1019
        %v1021 = vpop.f32.mrb[0].mxu0
        %1022 = vmatprep.mubr.f32.mxu0 0.0
        %1023 = vmatmul.mubr.f32.gmra.mrb[0].mxu0 %v883
        %v1024 = vpop.f32.mrb[0].mxu0
        %v1025 = vadd.f32 %v911, %v1024
        %v1026 = vpop.f32.mrb[0].mxu0
        %1027 = vmatprep.mubr.f32.mxu0 0.0
        %1028 = vmatmul.mubr.f32.gmra.mrb[0].mxu0 %v884
        %v1029 = vpop.f32.mrb[0].mxu0
        %v1030 = vadd.f32 %v911, %v1029
        %v1031 = vpop.f32.mrb[0].mxu0
        %1032 = vmatprep.mubr.f32.mxu0 0.0
        %1033 = vmatmul.mubr.f32.gmra.mrb[0].mxu0 %v885
        %v1034 = vpop.f32.mrb[0].mxu0
        %v1035 = vadd.f32 %v911, %v1034
        %v1036 = vpop.f32.mrb[0].mxu0
        %1037 = vmatprep.mubr.f32.mxu0 0.0
        %1038 = vmatmul.mubr.f32.gmra.mrb[0].mxu0 %v886
        %v1039 = vpop.f32.mrb[0].mxu0
        %v1040 = vadd.f32 %v911, %v1039
        %v1041 = vpop.f32.mrb[0].mxu0
        %1042 = vmatprep.mubr.f32.mxu0 0.0
        %1043 = vmatmul.mubr.f32.gmra.mrb[0].mxu0 %v887
        %v1044 = vpop.f32.mrb[0].mxu0
        %v1045 = vadd.f32 %v911, %v1044
        %v1046 = vpop.f32.mrb[0].mxu0
        %1047 = vmatprep.mubr.f32.mxu0 0.0
        %1048 = vmatmul.mubr.f32.gmra.mrb[0].mxu0 %v888
        %v1049 = vpop.f32.mrb[0].mxu0
        %v1050 = vadd.f32 %v911, %v1049
        %v1051 = vpop.f32.mrb[0].mxu0
        %1052 = vmatprep.mubr.f32.mxu0 0.0
        %1053 = vmatmul.mubr.f32.gmra.mrb[0].mxu0 %v889
        %v1054 = vpop.f32.mrb[0].mxu0
        %v1055 = vadd.f32 %v911, %v1054
        %v1056 = vpop.f32.mrb[0].mxu0
        %1057 = vdwg.mxu0
        %v1058 = vmax.f32 %v980, 0.0
        %v1059 = vmax.f32 %v985, 0.0
        %v1060 = vmax.f32 %v990, 0.0
        %v1061 = vmax.f32 %v995, 0.0
        %v1062 = vmax.f32 %v1000, 0.0
        %v1063 = vmax.f32 %v1005, 0.0
        %v1064 = vmax.f32 %v1010, 0.0
        %v1065 = vmax.f32 %v1015, 0.0
        %v1066 = vmax.f32 %v1020, 0.0
        %v1067 = vmax.f32 %v1025, 0.0
        %v1068 = vmax.f32 %v1030, 0.0
        %v1069 = vmax.f32 %v1035, 0.0
        %v1070 = vmax.f32 %v1040, 0.0
        %v1071 = vmax.f32 %v1045, 0.0
        %v1072 = vmax.f32 %v1050, 0.0
        %v1073 = vmax.f32 %v1055, 0.0
        %v1074 = vld [vmem:[%s434] sm:$0xff]
        %v1075 = vld [vmem:[%s434 + $0x8] sm:$0xff]
        %v1076 = vld [vmem:[%s434 + $0x10] sm:$0xff]
        %v1077 = vld [vmem:[%s434 + $0x18] sm:$0xff]
        %v1078 = vld [vmem:[%s434 + $0x20] sm:$0xff]
        %v1079 = vld [vmem:[%s434 + $0x28] sm:$0xff]
        %v1080 = vld [vmem:[%s434 + $0x30] sm:$0xff]
        %v1081 = vld [vmem:[%s434 + $0x38] sm:$0xff]
        %v1082 = vld [vmem:[%s434 + $0x40] sm:$0xff]
        %v1083 = vld [vmem:[%s434 + $0x48] sm:$0xff]
        %v1084 = vld [vmem:[%s434 + $0x50] sm:$0xff]
        %v1085 = vld [vmem:[%s434 + $0x58] sm:$0xff]
        %v1086 = vld [vmem:[%s434 + $0x60] sm:$0xff]
        %v1087 = vld [vmem:[%s434 + $0x68] sm:$0xff]
        %v1088 = vld [vmem:[%s434 + $0x70] sm:$0xff]
        %v1089 = vld [vmem:[%s434 + $0x78] sm:$0xff]
        %v1090 = vld [vmem:[%s491] sm:$0x1]
        %v1092 = vlaneseq
        %v1093 = vshrl.u32 %v1092, 7
        %v1094 = vsub.s32 0, %v1093
        %v1095 = vrot.slane %v1090, %v1094
        %1097 = vmatprep.subr.mxu0 0.0
        %1098 = vmatpush1.msra.mxu0 %v1074
        %1099 = vmatprep.subr.mxu0 0.0
        %1100 = vmatpush1.msra.mxu0 %v1075
        %1101 = vmatprep.subr.mxu0 0.0
        %1102 = vmatpush1.msra.mxu0 %v1076
        %1103 = vmatprep.subr.mxu0 0.0
        %1104 = vmatpush1.msra.mxu0 %v1077
        %1105 = vmatprep.subr.mxu0 0.0
        %1106 = vmatpush1.msra.mxu0 %v1078
        %1107 = vmatprep.subr.mxu0 0.0
        %1108 = vmatpush1.msra.mxu0 %v1079
        %1109 = vmatprep.subr.mxu0 0.0
        %1110 = vmatpush1.msra.mxu0 %v1080
        %1111 = vmatprep.subr.mxu0 0.0
        %1112 = vmatpush1.msra.mxu0 %v1081
        %1113 = vmatprep.subr.mxu0 0.0
        %1114 = vmatpush1.msra.mxu0 %v1082
        %1115 = vmatprep.subr.mxu0 0.0
        %1116 = vmatpush1.msra.mxu0 %v1083
        %1117 = vmatprep.subr.mxu0 0.0
        %1118 = vmatpush1.msra.mxu0 %v1084
        %1119 = vmatprep.subr.mxu0 0.0
        %1120 = vmatpush1.msra.mxu0 %v1085
        %1121 = vmatprep.subr.mxu0 0.0
        %1122 = vmatpush1.msra.mxu0 %v1086
        %1123 = vmatprep.subr.mxu0 0.0
        %1124 = vmatpush1.msra.mxu0 %v1087
        %1125 = vmatprep.subr.mxu0 0.0
        %1126 = vmatpush1.msra.mxu0 %v1088
        %1127 = vmatprep.subr.mxu0 0.0
        %1128 = vmatpush1.msra.mxu0 %v1089
        %1129 = vmatprep.subr.mxu0 0.0
        %1130 = vmatpush1.msra.mxu0 0.0
        %1131 = vmatprep.subr.mxu0 0.0
        %1132 = vmatpush1.msra.mxu0 0.0
        %1133 = vmatprep.subr.mxu0 0.0
        %1134 = vmatpush1.msra.mxu0 0.0
        %1135 = vmatprep.subr.mxu0 0.0
        %1136 = vmatpush1.msra.mxu0 0.0
        %1137 = vmatprep.subr.mxu0 0.0
        %1138 = vmatpush1.msra.mxu0 0.0
        %1139 = vmatprep.subr.mxu0 0.0
        %1140 = vmatpush1.msra.mxu0 0.0
        %1141 = vmatprep.subr.mxu0 0.0
        %1142 = vmatpush1.msra.mxu0 0.0
        %1143 = vmatprep.subr.mxu0 0.0
        %1144 = vmatpush1.msra.mxu0 0.0
        %1145 = vmatprep.subr.mxu0 0.0
        %1146 = vmatpush1.msra.mxu0 0.0
        %1147 = vmatprep.subr.mxu0 0.0
        %1148 = vmatpush1.msra.mxu0 0.0
        %1149 = vmatprep.subr.mxu0 0.0
        %1150 = vmatpush1.msra.mxu0 0.0
        %1151 = vmatprep.subr.mxu0 0.0
        %1152 = vmatpush1.msra.mxu0 0.0
        %1153 = vmatprep.subr.mxu0 0.0
        %1154 = vmatpush1.msra.mxu0 0.0
        %1155 = vmatprep.subr.mxu0 0.0
        %1156 = vmatpush1.msra.mxu0 0.0
        %1157 = vmatprep.subr.mxu0 0.0
        %1158 = vmatpush1.msra.mxu0 0.0
        %1159 = vmatprep.subr.mxu0 0.0
        %1160 = vmatpush1.msra.mxu0 0.0
        %1161 = vmatprep.mubr.f32.mxu0 0.0
        %1162 = vmatmul.mubr.f32.gmra.mrb[0].mxu0 %v1058
        %v1163 = vpop.f32.mrb[0].mxu0
        %v1164 = vadd.f32 %v1095, %v1163
        %v1165 = vpop.f32.mrb[0].mxu0
        %1166 = vmatprep.mubr.f32.mxu0 0.0
        %1167 = vmatmul.mubr.f32.gmra.mrb[0].mxu0 %v1059
        %v1168 = vpop.f32.mrb[0].mxu0
        %v1169 = vadd.f32 %v1095, %v1168
        %v1170 = vpop.f32.mrb[0].mxu0
        %1171 = vmatprep.mubr.f32.mxu0 0.0
        %1172 = vmatmul.mubr.f32.gmra.mrb[0].mxu0 %v1060
        %v1173 = vpop.f32.mrb[0].mxu0
        %v1174 = vadd.f32 %v1095, %v1173
        %v1175 = vpop.f32.mrb[0].mxu0
        %1176 = vmatprep.mubr.f32.mxu0 0.0
        %1177 = vmatmul.mubr.f32.gmra.mrb[0].mxu0 %v1061
        %v1178 = vpop.f32.mrb[0].mxu0
        %v1179 = vadd.f32 %v1095, %v1178
        %v1180 = vpop.f32.mrb[0].mxu0
        %1181 = vmatprep.mubr.f32.mxu0 0.0
        %1182 = vmatmul.mubr.f32.gmra.mrb[0].mxu0 %v1062
        %v1183 = vpop.f32.mrb[0].mxu0
        %v1184 = vadd.f32 %v1095, %v1183
        %v1185 = vpop.f32.mrb[0].mxu0
        %1186 = vmatprep.mubr.f32.mxu0 0.0
        %1187 = vmatmul.mubr.f32.gmra.mrb[0].mxu0 %v1063
        %v1188 = vpop.f32.mrb[0].mxu0
        %v1189 = vadd.f32 %v1095, %v1188
        %v1190 = vpop.f32.mrb[0].mxu0
        %1191 = vmatprep.mubr.f32.mxu0 0.0
        %1192 = vmatmul.mubr.f32.gmra.mrb[0].mxu0 %v1064
        %v1193 = vpop.f32.mrb[0].mxu0
        %v1194 = vadd.f32 %v1095, %v1193
        %v1195 = vpop.f32.mrb[0].mxu0
        %1196 = vmatprep.mubr.f32.mxu0 0.0
        %1197 = vmatmul.mubr.f32.gmra.mrb[0].mxu0 %v1065
        %v1198 = vpop.f32.mrb[0].mxu0
        %v1199 = vadd.f32 %v1095, %v1198
        %v1200 = vpop.f32.mrb[0].mxu0
        %1201 = vmatprep.mubr.f32.mxu0 0.0
        %1202 = vmatmul.mubr.f32.gmra.mrb[0].mxu0 %v1066
        %v1203 = vpop.f32.mrb[0].mxu0
        %v1204 = vadd.f32 %v1095, %v1203
        %v1205 = vpop.f32.mrb[0].mxu0
        %1206 = vmatprep.mubr.f32.mxu0 0.0
        %1207 = vmatmul.mubr.f32.gmra.mrb[0].mxu0 %v1067
        %v1208 = vpop.f32.mrb[0].mxu0
        %v1209 = vadd.f32 %v1095, %v1208
        %v1210 = vpop.f32.mrb[0].mxu0
        %1211 = vmatprep.mubr.f32.mxu0 0.0
        %1212 = vmatmul.mubr.f32.gmra.mrb[0].mxu0 %v1068
        %v1213 = vpop.f32.mrb[0].mxu0
        %v1214 = vadd.f32 %v1095, %v1213
        %v1215 = vpop.f32.mrb[0].mxu0
        %1216 = vmatprep.mubr.f32.mxu0 0.0
        %1217 = vmatmul.mubr.f32.gmra.mrb[0].mxu0 %v1069
        %v1218 = vpop.f32.mrb[0].mxu0
        %v1219 = vadd.f32 %v1095, %v1218
        %v1220 = vpop.f32.mrb[0].mxu0
        %1221 = vmatprep.mubr.f32.mxu0 0.0
        %1222 = vmatmul.mubr.f32.gmra.mrb[0].mxu0 %v1070
        %v1223 = vpop.f32.mrb[0].mxu0
        %v1224 = vadd.f32 %v1095, %v1223
        %v1225 = vpop.f32.mrb[0].mxu0
        %1226 = vmatprep.mubr.f32.mxu0 0.0
        %1227 = vmatmul.mubr.f32.gmra.mrb[0].mxu0 %v1071
        %v1228 = vpop.f32.mrb[0].mxu0
        %v1229 = vadd.f32 %v1095, %v1228
        %v1230 = vpop.f32.mrb[0].mxu0
        %1231 = vmatprep.mubr.f32.mxu0 0.0
        %1232 = vmatmul.mubr.f32.gmra.mrb[0].mxu0 %v1072
        %v1233 = vpop.f32.mrb[0].mxu0
        %v1234 = vadd.f32 %v1095, %v1233
        %v1235 = vpop.f32.mrb[0].mxu0
        %1236 = vmatprep.mubr.f32.mxu0 0.0
        %1237 = vmatmul.mubr.f32.gmra.mrb[0].mxu0 %v1073
        %v1238 = vpop.f32.mrb[0].mxu0
        %v1239 = vadd.f32 %v1095, %v1238
        %v1240 = vpop.f32.mrb[0].mxu0
        %1241 = vdwg.mxu0
        %s1242 = sld [smem:[#allocation3]]
        %v1243 = vlaneseq
        %v1244 = vshrl.u32 %v1243, 7
        %v1245 = vadd.s32 %v1244, 8
        %v1246 = vadd.s32 %v1244, 16
        %v1247 = vadd.s32 %v1244, 24
        %v1248 = vadd.s32 %v1244, 32
        %v1249 = vadd.s32 %v1244, 40
        %v1250 = vadd.s32 %v1244, 48
        %v1251 = vadd.s32 %v1244, 56
        %v1252 = vadd.s32 %v1244, 64
        %v1253 = vadd.s32 %v1244, 72
        %v1254 = vadd.s32 %v1244, 80
        %v1255 = vadd.s32 %v1244, 88
        %v1256 = vadd.s32 %v1244, 96
        %v1257 = vadd.s32 %v1244, 104
        %v1258 = vadd.s32 %v1244, 112
        %v1259 = vadd.s32 %v1244, 120
        %v1260 = vstv %s1242
        %vm1261 = vcmp.lt.s32.totalorder %v1244, %v1260
        %vm1262 = vcmp.lt.s32.totalorder %v1245, %v1260
        %vm1263 = vcmp.lt.s32.totalorder %v1246, %v1260
        %vm1264 = vcmp.lt.s32.totalorder %v1247, %v1260
        %vm1265 = vcmp.lt.s32.totalorder %v1248, %v1260
        %vm1266 = vcmp.lt.s32.totalorder %v1249, %v1260
        %vm1267 = vcmp.lt.s32.totalorder %v1250, %v1260
        %vm1268 = vcmp.lt.s32.totalorder %v1251, %v1260
        %vm1269 = vcmp.lt.s32.totalorder %v1252, %v1260
        %vm1270 = vcmp.lt.s32.totalorder %v1253, %v1260
        %vm1271 = vcmp.lt.s32.totalorder %v1254, %v1260
        %vm1272 = vcmp.lt.s32.totalorder %v1255, %v1260
        %vm1273 = vcmp.lt.s32.totalorder %v1256, %v1260
        %vm1274 = vcmp.lt.s32.totalorder %v1257, %v1260
        %vm1275 = vcmp.lt.s32.totalorder %v1258, %v1260
        %vm1276 = vcmp.lt.s32.totalorder %v1259, %v1260
        %v1277 = vsel %vm1261, 1, 0
        %v1278 = vsel %vm1262, 1, 0
        %v1279 = vsel %vm1263, 1, 0
        %v1280 = vsel %vm1264, 1, 0
        %v1281 = vsel %vm1265, 1, 0
        %v1282 = vsel %vm1266, 1, 0
        %v1283 = vsel %vm1267, 1, 0
        %v1284 = vsel %vm1268, 1, 0
        %v1285 = vsel %vm1269, 1, 0
        %v1286 = vsel %vm1270, 1, 0
        %v1287 = vsel %vm1271, 1, 0
        %v1288 = vsel %vm1272, 1, 0
        %v1289 = vsel %vm1273, 1, 0
        %v1290 = vsel %vm1274, 1, 0
        %v1291 = vsel %vm1275, 1, 0
        %v1292 = vsel %vm1276, 1, 0
        %v1293 = vcvt.s32.f32 %v1277
        %v1294 = vcvt.s32.f32 %v1278
        %v1295 = vcvt.s32.f32 %v1279
        %v1296 = vcvt.s32.f32 %v1280
        %v1297 = vcvt.s32.f32 %v1281
        %v1298 = vcvt.s32.f32 %v1282
        %v1299 = vcvt.s32.f32 %v1283
        %v1300 = vcvt.s32.f32 %v1284
        %v1301 = vcvt.s32.f32 %v1285
        %v1302 = vcvt.s32.f32 %v1286
        %v1303 = vcvt.s32.f32 %v1287
        %v1304 = vcvt.s32.f32 %v1288
        %v1305 = vcvt.s32.f32 %v1289
        %v1306 = vcvt.s32.f32 %v1290
        %v1307 = vcvt.s32.f32 %v1291
        %v1308 = vcvt.s32.f32 %v1292
        %s1309 = scvt.s32.f32 %s1242
        %v1310 = vstv %s1309
        %v1311 = vrcp.pop %v1310
        %s1312 = vtos %v1311
        %v1313 = vmul.f32 %v1164, %v1293
        %v1314 = vmul.f32 %v1169, %v1294
        %v1315 = vmul.f32 %v1174, %v1295
        %v1316 = vmul.f32 %v1179, %v1296
        %v1317 = vmul.f32 %v1184, %v1297
        %v1318 = vmul.f32 %v1189, %v1298
        %v1319 = vmul.f32 %v1194, %v1299
        %v1320 = vmul.f32 %v1199, %v1300
        %v1321 = vmul.f32 %v1204, %v1301
        %v1322 = vmul.f32 %v1209, %v1302
        %v1323 = vmul.f32 %v1214, %v1303
        %v1324 = vmul.f32 %v1219, %v1304
        %v1325 = vmul.f32 %v1224, %v1305
        %v1326 = vmul.f32 %v1229, %v1306
        %v1327 = vmul.f32 %v1234, %v1307
        %v1328 = vmul.f32 %v1239, %v1308
        %v1329 = vadd.f32 %v1313, %v1314
        %v1330 = vadd.f32 %v1329, %v1315
        %v1331 = vadd.f32 %v1330, %v1316
        %v1332 = vadd.f32 %v1331, %v1317
        %v1333 = vadd.f32 %v1332, %v1318
        %v1334 = vadd.f32 %v1333, %v1319
        %v1335 = vadd.f32 %v1334, %v1320
        %v1336 = vadd.f32 %v1335, %v1321
        %v1337 = vadd.f32 %v1336, %v1322
        %v1338 = vadd.f32 %v1337, %v1323
        %v1339 = vadd.f32 %v1338, %v1324
        %v1340 = vadd.f32 %v1339, %v1325
        %v1341 = vadd.f32 %v1340, %v1326
        %v1342 = vadd.f32 %v1341, %v1327
        %v1343 = vadd.f32 %v1342, %v1328
        %v1344 = vrot.slane %v1343, 4
        %v1345 = vadd.f32 %v1343, %v1344
        %v1346 = vrot.slane %v1345, 2
        %v1347 = vadd.f32 %v1345, %v1346
        %v1348 = vrot.slane %v1347, 1
        %v1349 = vadd.f32 %v1347, %v1348
        %v1350 = vstv %s1312
        %v1351 = vmul.f32 %v1349, %v1350
        %v1352 = vsub.f32 %v1164, %v1351
        %v1353 = vsub.f32 %v1169, %v1351
        %v1354 = vsub.f32 %v1174, %v1351
        %v1355 = vsub.f32 %v1179, %v1351
        %v1356 = vsub.f32 %v1184, %v1351
        %v1357 = vsub.f32 %v1189, %v1351
        %v1358 = vsub.f32 %v1194, %v1351
        %v1359 = vsub.f32 %v1199, %v1351
        %v1360 = vsub.f32 %v1204, %v1351
        %v1361 = vsub.f32 %v1209, %v1351
        %v1362 = vsub.f32 %v1214, %v1351
        %v1363 = vsub.f32 %v1219, %v1351
        %v1364 = vsub.f32 %v1224, %v1351
        %v1365 = vsub.f32 %v1229, %v1351
        %v1366 = vsub.f32 %v1234, %v1351
        %v1367 = vsub.f32 %v1239, %v1351
        %v1368 = vmul.f32 %v1352, %v1293
        %v1369 = vmul.f32 %v1353, %v1294
        %v1370 = vmul.f32 %v1354, %v1295
        %v1371 = vmul.f32 %v1355, %v1296
        %v1372 = vmul.f32 %v1356, %v1297
        %v1373 = vmul.f32 %v1357, %v1298
        %v1374 = vmul.f32 %v1358, %v1299
        %v1375 = vmul.f32 %v1359, %v1300
        %v1376 = vmul.f32 %v1360, %v1301
        %v1377 = vmul.f32 %v1361, %v1302
        %v1378 = vmul.f32 %v1362, %v1303
        %v1379 = vmul.f32 %v1363, %v1304
        %v1380 = vmul.f32 %v1364, %v1305
        %v1381 = vmul.f32 %v1365, %v1306
        %v1382 = vmul.f32 %v1366, %v1307
        %v1383 = vmul.f32 %v1367, %v1308
        %v1384 = vmul.f32 %v1368, %v1368
        %v1385 = vmul.f32 %v1369, %v1369
        %v1386 = vmul.f32 %v1370, %v1370
        %v1387 = vmul.f32 %v1371, %v1371
        %v1388 = vmul.f32 %v1372, %v1372
        %v1389 = vmul.f32 %v1373, %v1373
        %v1390 = vmul.f32 %v1374, %v1374
        %v1391 = vmul.f32 %v1375, %v1375
        %v1392 = vmul.f32 %v1376, %v1376
        %v1393 = vmul.f32 %v1377, %v1377
        %v1394 = vmul.f32 %v1378, %v1378
        %v1395 = vmul.f32 %v1379, %v1379
        %v1396 = vmul.f32 %v1380, %v1380
        %v1397 = vmul.f32 %v1381, %v1381
        %v1398 = vmul.f32 %v1382, %v1382
        %v1399 = vmul.f32 %v1383, %v1383
        %v1400 = vadd.f32 %v1384, %v1385
        %v1401 = vadd.f32 %v1400, %v1386
        %v1402 = vadd.f32 %v1401, %v1387
        %v1403 = vadd.f32 %v1402, %v1388
        %v1404 = vadd.f32 %v1403, %v1389
        %v1405 = vadd.f32 %v1404, %v1390
        %v1406 = vadd.f32 %v1405, %v1391
        %v1407 = vadd.f32 %v1406, %v1392
        %v1408 = vadd.f32 %v1407, %v1393
        %v1409 = vadd.f32 %v1408, %v1394
        %v1410 = vadd.f32 %v1409, %v1395
        %v1411 = vadd.f32 %v1410, %v1396
        %v1412 = vadd.f32 %v1411, %v1397
        %v1413 = vadd.f32 %v1412, %v1398
        %v1414 = vadd.f32 %v1413, %v1399
        %v1415 = vrot.slane %v1414, 4
        %v1416 = vadd.f32 %v1414, %v1415
        %v1417 = vrot.slane %v1416, 2
        %v1418 = vadd.f32 %v1416, %v1417
        %v1419 = vrot.slane %v1418, 1
        %v1420 = vadd.f32 %v1418, %v1419
        %v1421 = vmul.f32 %v1420, %v1350
        %v1422 = vadd.f32 %v1421, 1e-05
        %v1423 = vrsqrt.pop %v1422
        %v1424 = vmul.f32 %v1368, %v1423
        %v1425 = vmul.f32 %v1369, %v1423
        %v1426 = vmul.f32 %v1370, %v1423
        %v1427 = vmul.f32 %v1371, %v1423
        %v1428 = vmul.f32 %v1372, %v1423
        %v1429 = vmul.f32 %v1373, %v1423
        %v1430 = vmul.f32 %v1374, %v1423
        %v1431 = vmul.f32 %v1375, %v1423
        %v1432 = vmul.f32 %v1376, %v1423
        %v1433 = vmul.f32 %v1377, %v1423
        %v1434 = vmul.f32 %v1378, %v1423
        %v1435 = vmul.f32 %v1379, %v1423
        %v1436 = vmul.f32 %v1380, %v1423
        %v1437 = vmul.f32 %v1381, %v1423
        %v1438 = vmul.f32 %v1382, %v1423
        %v1439 = vmul.f32 %v1383, %v1423
        %v1440 = vld [vmem:[%s494] sm:$0x1]
        %v1442 = vlaneseq
        %v1443 = vshrl.u32 %v1442, 7
        %v1444 = vsub.s32 0, %v1443
        %v1445 = vrot.slane %v1440, %v1444
        %v1447 = vmul.f32 %v1424, %v1445
        %v1448 = vmul.f32 %v1425, %v1445
        %v1449 = vmul.f32 %v1426, %v1445
        %v1450 = vmul.f32 %v1427, %v1445
        %v1451 = vmul.f32 %v1428, %v1445
        %v1452 = vmul.f32 %v1429, %v1445
        %v1453 = vmul.f32 %v1430, %v1445
        %v1454 = vmul.f32 %v1431, %v1445
        %v1455 = vmul.f32 %v1432, %v1445
        %v1456 = vmul.f32 %v1433, %v1445
        %v1457 = vmul.f32 %v1434, %v1445
        %v1458 = vmul.f32 %v1435, %v1445
        %v1459 = vmul.f32 %v1436, %v1445
        %v1460 = vmul.f32 %v1437, %v1445
        %v1461 = vmul.f32 %v1438, %v1445
        %v1462 = vmul.f32 %v1439, %v1445
        %v1463 = vld [vmem:[%s497] sm:$0x1]
        %v1465 = vlaneseq
        %v1466 = vshrl.u32 %v1465, 7
        %v1467 = vsub.s32 0, %v1466
        %v1468 = vrot.slane %v1463, %v1467
        %v1470 = vadd.f32 %v1447, %v1468
        %v1471 = vadd.f32 %v1448, %v1468
        %v1472 = vadd.f32 %v1449, %v1468
        %v1473 = vadd.f32 %v1450, %v1468
        %v1474 = vadd.f32 %v1451, %v1468
        %v1475 = vadd.f32 %v1452, %v1468
        %v1476 = vadd.f32 %v1453, %v1468
        %v1477 = vadd.f32 %v1454, %v1468
        %v1478 = vadd.f32 %v1455, %v1468
        %v1479 = vadd.f32 %v1456, %v1468
        %v1480 = vadd.f32 %v1457, %v1468
        %v1481 = vadd.f32 %v1458, %v1468
        %v1482 = vadd.f32 %v1459, %v1468
        %v1483 = vadd.f32 %v1460, %v1468
        %v1484 = vadd.f32 %v1461, %v1468
        %v1485 = vadd.f32 %v1462, %v1468
        %v1486 = vmax.f32 %v1470, 0.0
        %v1487 = vmax.f32 %v1471, 0.0
        %v1488 = vmax.f32 %v1472, 0.0
        %v1489 = vmax.f32 %v1473, 0.0
        %v1490 = vmax.f32 %v1474, 0.0
        %v1491 = vmax.f32 %v1475, 0.0
        %v1492 = vmax.f32 %v1476, 0.0
        %v1493 = vmax.f32 %v1477, 0.0
        %v1494 = vmax.f32 %v1478, 0.0
        %v1495 = vmax.f32 %v1479, 0.0
        %v1496 = vmax.f32 %v1480, 0.0
        %v1497 = vmax.f32 %v1481, 0.0
        %v1498 = vmax.f32 %v1482, 0.0
        %v1499 = vmax.f32 %v1483, 0.0
        %v1500 = vmax.f32 %v1484, 0.0
        %v1501 = vmax.f32 %v1485, 0.0
        %s1502 = scalar_select %p499, 1, 0
        %v1503 = vstv %s1502
        %vm1504 = vcmp.eq.s32.totalorder %v1503, 1
        %v1505 = vsel %vm1504, %v1470, %v1486
        %v1506 = vsel %vm1504, %v1471, %v1487
        %v1507 = vsel %vm1504, %v1472, %v1488
        %v1508 = vsel %vm1504, %v1473, %v1489
        %v1509 = vsel %vm1504, %v1474, %v1490
        %v1510 = vsel %vm1504, %v1475, %v1491
        %v1511 = vsel %vm1504, %v1476, %v1492
        %v1512 = vsel %vm1504, %v1477, %v1493
        %v1513 = vsel %vm1504, %v1478, %v1494
        %v1514 = vsel %vm1504, %v1479, %v1495
        %v1515 = vsel %vm1504, %v1480, %v1496
        %v1516 = vsel %vm1504, %v1481, %v1497
        %v1517 = vsel %vm1504, %v1482, %v1498
        %v1518 = vsel %vm1504, %v1483, %v1499
        %v1519 = vsel %vm1504, %v1484, %v1500
        %v1520 = vsel %vm1504, %v1485, %v1501
        %1521 = vst [vmem:[#allocation12] sm:$0xff] %v1505
        %1522 = vst [vmem:[#allocation12 + $0x8] sm:$0xff] %v1506
        %1523 = vst [vmem:[#allocation12 + $0x10] sm:$0xff] %v1507
        %1524 = vst [vmem:[#allocation12 + $0x18] sm:$0xff] %v1508
        %1525 = vst [vmem:[#allocation12 + $0x20] sm:$0xff] %v1509
        %1526 = vst [vmem:[#allocation12 + $0x28] sm:$0xff] %v1510
        %1527 = vst [vmem:[#allocation12 + $0x30] sm:$0xff] %v1511
        %1528 = vst [vmem:[#allocation12 + $0x38] sm:$0xff] %v1512
        %1529 = vst [vmem:[#allocation12 + $0x40] sm:$0xff] %v1513
        %1530 = vst [vmem:[#allocation12 + $0x48] sm:$0xff] %v1514
        %1531 = vst [vmem:[#allocation12 + $0x50] sm:$0xff] %v1515
        %1532 = vst [vmem:[#allocation12 + $0x58] sm:$0xff] %v1516
        %1533 = vst [vmem:[#allocation12 + $0x60] sm:$0xff] %v1517
        %1534 = vst [vmem:[#allocation12 + $0x68] sm:$0xff] %v1518
        %1535 = vst [vmem:[#allocation12 + $0x70] sm:$0xff] %v1519
        %1536 = vst [vmem:[#allocation12 + $0x78] sm:$0xff] %v1520
        // Predicated region
        $region81: #{tpu_custom_call.1} parent=55 // pred_check
          %p1537 = pneg %p262
        $region82: #{tpu_custom_call.1} parent=55 // pred_check_branch
          %1539 = sbr.rel (%p1537) target = $region84
        $region83: #{tpu_custom_call.1} parent=55 // pred_region
          %s1541 = ssub.s32 2048, 2048
          %1542 = vsyncadd [#allocation6], %s1541
          %s1543 = sshll.u32 [#allocation12], 4
          %s1544 = int_to_ptr.vmem [resolvable:$true] %s1543
          %1549 = dma.vmem_to_hbm [thread:$0]  %s1544, 2048, %s10, [#allocation6], 128, 128, 8
        $region84: #{tpu_custom_call.1} parent=55 // pred_fallthru
          _
        // Predicated region
        $region85: #{tpu_custom_call.1} parent=55 // pred_check
          %p1550 = pneg %p262
        $region86: #{tpu_custom_call.1} parent=55 // pred_check_branch
          %1552 = sbr.rel (%p1550) target = $region88
        $region87: #{tpu_custom_call.1} parent=55 // pred_region
          %1553 = dma.done [#allocation6], 2048
        $region88: #{tpu_custom_call.1} parent=55 // pred_fallthru
          _
      $region56: #{tpu_custom_call.1} parent=5 // pred_fallthru
        _
      %p1554 = scmp.le.s32.totalorder 2, %s20
      // Predicated region
      $region89: #{tpu_custom_call.1} parent=5 // pred_check
        %p1555 = pneg %p1554
      $region90: #{tpu_custom_call.1} parent=5 // pred_check_branch
        %1557 = sbr.rel (%p1555) target = $region92
      $region91: #{tpu_custom_call.1} parent=5 // pred_region
        %s1558 = ssub.s32 %s20, 2
      $region92: #{tpu_custom_call.1} parent=5 // pred_fallthru
        _
    $region6: #{tpu_custom_call.1} parent=1 // loop_footer
      %s24 = sadd.s32 1, %s20
    $region7: #{tpu_custom_call.1} parent=1 // loop_footer_branch
      %19 = sbr.rel target = $region3
    $region8: #{tpu_custom_call.1} parent=1 // loop_exit
      _
    %1559 = vsyncpa [#allocation5], 1
    %s1560 = scalar_lea.sflag [#allocation5], 1
    %1561 = vsyncpa %s1560, 1
    %1562 = vsyncpa [#allocation8], 1
    %1563 = vsyncpa [#allocation6], 1
    %s1564 = scalar_lea.sflag [#allocation6], 1
    %1565 = vsyncpa %s1564, 1

</llo_original>
